<compile_context>
chip_gen: v6e
topology: v6e:2x2x1
jax: 0.10.0
libtpu: 0.0.40
codegen_flags: <defaults>
</compile_context>

<pallas_src>
import functools

import jax
import jax.numpy as jnp
from jax.experimental import pallas as pl
from jax.experimental.pallas import tpu as pltpu


def _round_up(x, m):
    return ((x + m - 1) // m) * m


# ---------------------------------------------------------------------------
# Fused Pallas kernel: one grid step == one image of the batch.
# ---------------------------------------------------------------------------
def _fused_block_kernel(p1_ref, w1_ref, b1_ref, wsc_ref, bsc_ref, w2_ref, b2_ref,
                        wcol_ref, o_ref, y1buf,
                        *, M, Wout, Cin, planes, halo):
    cp = w1_ref.shape[1]                   # padded channel width (multiple of 128)

    # ---- conv1 (BN1 scale folded into w1) + bias + ReLU --------------------
    p1 = p1_ref[0]                                               # (M, 9*Cin) bf16
    y1 = jnp.dot(p1, w1_ref[...], preferred_element_type=jnp.float32)
    y1 = jnp.maximum(y1 + b1_ref[...], 0.0)                      # (M, cp) f32

    # ---- shortcut: centre-tap columns of p1 == x at the output pixels ------
    xc = p1[:, 4 * Cin:5 * Cin]                                  # (M, Cin) bf16
    sc = jnp.dot(xc, wsc_ref[...], preferred_element_type=jnp.float32) + bsc_ref[...]

    # ---- stage y1 (bf16) into the row-halo buffer used for conv2 im2col ----
    y1buf[0:halo, :] = jnp.zeros((halo, cp), y1buf.dtype)
    y1buf[halo + M:halo + M + halo, :] = jnp.zeros((halo, cp), y1buf.dtype)
    y1buf[halo:halo + M, :] = y1.astype(y1buf.dtype)

    # ---- conv2 (3x3 / stride 1 / pad 1, BN2 folded) + residual + ReLU ------
    wcol = wcol_ref[...]                                         # (M, 1) int32: w of each row
    valid_l = wcol >= 1                    # row has a left  neighbour (dw = -1)
    valid_r = wcol < Wout - 1              # row has a right neighbour (dw = +1)

    acc = sc + b2_ref[...]
    for kh in range(3):
        for kw in range(3):
            dh, dw = kh - 1, kw - 1
            start = halo + dh * Wout + dw                        # static shift
            slab = y1buf[start:start + M, :]                     # (M, cp) bf16
            t = jnp.dot(slab, w2_ref[kh * 3 + kw],
                        preferred_element_type=jnp.float32)
            if dw == -1:
                t = jnp.where(valid_l, t, 0.0)
            elif dw == 1:
                t = jnp.where(valid_r, t, 0.0)
            acc = acc + t
    out = jnp.maximum(acc, 0.0)                                  # (M, cp) f32

    # ---- lane-dense transposed store: rows = channels, lanes = pixels ------
    # NOTE: assumes M = Hout*Wout is a multiple of 8 (true for the tested shapes).
    o_ref[0] = jnp.transpose(out)[0:planes, :]                   # (planes, M)


# ---------------------------------------------------------------------------
# JAX glue: im2col for conv1 (handles stride), BN folding, weight packing
# ---------------------------------------------------------------------------
def _im2col_3x3(x_nhwc, stride):
    """(N,H,W,C) -> (N, Hout*Wout, 9*C); column order (kh, kw, c)."""
    N, H, W, C = x_nhwc.shape
    xp = jnp.pad(x_nhwc, ((0, 0), (1, 1), (1, 1), (0, 0)))
    Hout = (H + 2 - 3) // stride + 1
    Wout = (W + 2 - 3) // stride + 1
    cols = []
    for kh in range(3):
        for kw in range(3):
            cols.append(xp[:, kh:kh + (Hout - 1) * stride + 1:stride,
                           kw:kw + (Wout - 1) * stride + 1:stride, :])
    patches = jnp.concatenate(cols, axis=-1)                     # (N, Hout, Wout, 9*C)
    return patches.reshape(N, Hout * Wout, 9 * C), Hout, Wout


def _fold_bn(params, prefix, eps=1e-5):
    scale = params[prefix + "_gamma"] / jnp.sqrt(params[prefix + "_var"] + eps)
    bias = params[prefix + "_beta"] - params[prefix + "_mean"] * scale
    return scale.astype(jnp.float32), bias.astype(jnp.float32)


def _pad_cols(a, cp):
    return jnp.pad(a, ((0, 0), (0, cp - a.shape[1])))


def basic_block_learn_forward(x_nchw, params, *, stride):
    """Forward pass of BasicBlockLearn. Input/output are NCHW like PyTorch."""
    N, Cin, H, W = x_nchw.shape
    planes = params["w_conv1"].shape[0]
    has_sc = (stride != 1) or (Cin != planes)
    cp = _round_up(planes, 128)

    # conv1 patches (wrapper-side im2col handles any stride); bf16 MXU operands.
    x = jnp.transpose(x_nchw, (0, 2, 3, 1)).astype(jnp.float32)  # NHWC
    p1, Hout, Wout = _im2col_3x3(x, stride)
    M = Hout * Wout
    p1 = p1.astype(jnp.bfloat16)                                 # (N, M, 9*Cin)

    # Fold BN scales into the conv weights; pad channels to cp.
    s1, b1 = _fold_bn(params, "bn1")
    w1 = jnp.transpose(params["w_conv1"], (2, 3, 1, 0)).reshape(9 * Cin, planes)
    w1 = _pad_cols(w1 * s1[None, :], cp).astype(jnp.bfloat16)    # (9*Cin, cp)
    b1 = _pad_cols(b1[None, :], cp)                              # (1, cp) f32

    s2, b2 = _fold_bn(params, "bn2")
    taps = []
    for kh in range(3):
        for kw in range(3):
            t = params["w_conv2"][:, :, kh, kw].T * s2[None, :]  # (in, out)
            taps.append(jnp.pad(t, ((0, cp - planes), (0, cp - planes))))
    w2 = jnp.stack(taps, axis=0).astype(jnp.bfloat16)            # (9, cp, cp)
    b2 = _pad_cols(b2[None, :], cp)

    if has_sc:
        ss, bs = _fold_bn(params, "bnS")
        wsc = params["w_shortcut"].reshape(planes, Cin).T * ss[None, :]
        wsc = _pad_cols(wsc, cp).astype(jnp.bfloat16)            # (Cin, cp)
        bsc = _pad_cols(bs[None, :], cp)
    else:   # identity shortcut (stride == 1 and Cin == planes)
        wsc = _pad_cols(jnp.eye(Cin, dtype=jnp.float32), cp).astype(jnp.bfloat16)
        bsc = jnp.zeros((1, cp), jnp.float32)

    wcol = jnp.tile(jnp.arange(Wout, dtype=jnp.int32), Hout)[:, None]  # (M, 1)
    halo = _round_up(Wout + 1, 32)        # aligned halo >= Wout + 1

    kernel = functools.partial(_fused_block_kernel, M=M, Wout=Wout, Cin=Cin,
                               planes=planes, halo=halo)
    out = pl.pallas_call(
        kernel,
        out_shape=jax.ShapeDtypeStruct((N, planes, M), jnp.float32),
        grid_spec=pltpu.PrefetchScalarGridSpec(
            num_scalar_prefetch=0,
            grid=(N,),
            in_specs=[
                pl.BlockSpec((1, M, 9 * Cin), lambda b: (b, 0, 0)),   # conv1 patches
                pl.BlockSpec((9 * Cin, cp), lambda b: (0, 0)),        # w1 (BN1 folded)
                pl.BlockSpec((1, cp), lambda b: (0, 0)),              # b1
                pl.BlockSpec((Cin, cp), lambda b: (0, 0)),            # shortcut weight
                pl.BlockSpec((1, cp), lambda b: (0, 0)),              # shortcut bias
                pl.BlockSpec((9, cp, cp), lambda b: (0, 0, 0)),       # w2 taps (BN2 folded)
                pl.BlockSpec((1, cp), lambda b: (0, 0)),              # b2
                pl.BlockSpec((M, 1), lambda b: (0, 0)),               # per-row w index
            ],
            out_specs=pl.BlockSpec((1, planes, M), lambda b: (b, 0, 0)),
            scratch_shapes=[pltpu.VMEM((M + 2 * halo, cp), jnp.bfloat16)],
        ),
        compiler_params=pltpu.CompilerParams(dimension_semantics=("parallel",)),
    )(p1, w1, b1, wsc, bsc, w2, b2, wcol)

    return out.reshape(N, planes, Hout, Wout)                    # already NCHW


# ---------------------------------------------------------------------------
# References for validation
# ---------------------------------------------------------------------------
def _ref_forward_f32(x, params, *, stride):
    """Exact f32 reference (the PyTorch module's semantics)."""
    def conv(x, w, s, pad):
        return jax.lax.conv_general_dilated(
            x, w, (s, s), ((pad, pad), (pad, pad)),
            dimension_numbers=("NCHW", "OIHW", "NCHW"))

    def bn(x, g, b, m, v, eps=1e-5):
        return (g[None, :, None, None] * (x - m[None, :, None, None])
                / jnp.sqrt(v[None, :, None, None] + eps) + b[None, :, None, None])

    out = jax.nn.relu(bn(conv(x, params["w_conv1"], stride, 1),
                         params["bn1_gamma"], params["bn1_beta"],
                         params["bn1_mean"], params["bn1_var"]))
    out = bn(conv(out, params["w_conv2"], 1, 1),
             params["bn2_gamma"], params["bn2_beta"],
             params["bn2_mean"], params["bn2_var"])
    in_planes, planes = x.shape[1], params["w_conv1"].shape[0]
    if stride != 1 or in_planes != planes:
        sc = bn(conv(x, params["w_shortcut"], stride, 0),
                params["bnS_gamma"], params["bnS_beta"],
                params["bnS_mean"], params["bnS_var"])
    else:
        sc = x
    return jax.nn.relu(out + sc)


def _ref_forward_bf16(x, params, *, stride):
    """Reference mirroring the kernel's bf16 quantization points (tight check)."""
    def conv(x, w, s, pad):
        return jax.lax.conv_general_dilated(
            x.astype(jnp.bfloat16), w.astype(jnp.bfloat16), (s, s),
            ((pad, pad), (pad, pad)),
            dimension_numbers=("NCHW", "OIHW", "NCHW"),
            preferred_element_type=jnp.float32)

    s1, b1 = _fold_bn(params, "bn1")
    y1 = jax.nn.relu(conv(x, params["w_conv1"] * s1[:, None, None, None], stride, 1)
                     + b1[None, :, None, None])
    s2, b2 = _fold_bn(params, "bn2")
    out = conv(y1, params["w_conv2"] * s2[:, None, None, None], 1, 1) + b2[None, :, None, None]
    in_planes, planes = x.shape[1], params["w_conv1"].shape[0]
    if stride != 1 or in_planes != planes:
        ss, bs = _fold_bn(params, "bnS")
        sc = conv(x, params["w_shortcut"] * ss[:, None, None, None], stride, 0) \
            + bs[None, :, None, None]
    else:
        sc = x.astype(jnp.bfloat16).astype(jnp.float32)
    return jax.nn.relu(out + sc)


# ---------------------------------------------------------------------------
# Deterministic parameter init + run
# ---------------------------------------------------------------------------
def _init_params(key, in_planes, planes):
    ks = jax.random.split(key, 12)
    return {
        "w_conv1": 0.1 * jax.random.normal(ks[0], (planes, in_planes, 3, 3), jnp.float32),
        "w_conv2": 0.1 * jax.random.normal(ks[1], (planes, planes, 3, 3), jnp.float32),
        "w_shortcut": 0.1 * jax.random.normal(ks[2], (planes, in_planes, 1, 1), jnp.float32),
        "bn1_gamma": 1.0 + 0.1 * jax.random.normal(ks[3], (planes,), jnp.float32),
        "bn1_beta": 0.1 * jax.random.normal(ks[4], (planes,), jnp.float32),
        "bn1_mean": 0.05 * jax.random.normal(ks[5], (planes,), jnp.float32),
        "bn1_var": 0.5 + jnp.abs(jax.random.normal(ks[6], (planes,), jnp.float32)),
        "bn2_gamma": 1.0 + 0.1 * jax.random.normal(ks[7], (planes,), jnp.float32),
        "bn2_beta": 0.1 * jax.random.normal(ks[8], (planes,), jnp.float32),
        "bn2_mean": 0.05 * jax.random.normal(ks[9], (planes,), jnp.float32),
        "bn2_var": 0.5 + jnp.abs(jax.random.normal(ks[10], (planes,), jnp.float32)),
        "bnS_gamma": jnp.ones((planes,), jnp.float32),
        "bnS_beta": jnp.zeros((planes,), jnp.float32),
        "bnS_mean": jnp.zeros((planes,), jnp.float32),
        "bnS_var": 0.5 + jnp.abs(jax.random.normal(ks[11], (planes,), jnp.float32)),
    }


if __name__ == "__main__":
    fwd = jax.jit(basic_block_learn_forward, static_argnames=("stride",))
    key = jax.random.PRNGKey(0)

    configs = [
        # (N, in_planes, planes, H, W, stride)
        (2, 4, 8, 16, 16, 1),   # projection shortcut (channel change)   [primary]
        (2, 8, 8, 16, 16, 1),   # identity shortcut
        (2, 4, 8, 32, 32, 2),   # strided conv1 + projection shortcut
    ]
    for (N, in_planes, planes, H, W, stride) in configs:
        key, k_x, k_p = jax.random.split(key, 3)
        x = jax.random.normal(k_x, (N, in_planes, H, W), jnp.float32)
        params = _init_params(k_p, in_planes, planes)

        out = jax.block_until_ready(fwd(x, params, stride=stride))
        ref_q = _ref_forward_bf16(x, params, stride=stride)   # bf16-matched (tight)
        ref_f = _ref_forward_f32(x, params, stride=stride)    # exact module semantics

        assert out.shape == ref_f.shape, (out.shape, ref_f.shape)
        err_q = float(jnp.max(jnp.abs(out - ref_q)))
        err_f = float(jnp.max(jnp.abs(out - ref_f)))
        err_f_mean = float(jnp.mean(jnp.abs(out - ref_f)))
        assert err_q < 2e-2, ("bf16-matched reference mismatch", err_q)
        assert err_f < 8e-2, ("f32 reference mismatch (beyond bf16 noise)", err_f)
        assert err_f_mean < 1e-2, ("f32 reference mean mismatch", err_f_mean)

    print("KERNEL_OK")
</pallas_src>

<mosaic_0001>
module attributes {stable_mosaic.version = 11 : i64} {
  func.func @_fused_block_kernel(%arg0: i32, %arg1: memref<1x256x36xbf16, #tpu.memory_space<vmem>>, %arg2: memref<36x128xbf16, #tpu.memory_space<vmem>>, %arg3: memref<1x128xf32, #tpu.memory_space<vmem>>, %arg4: memref<4x128xbf16, #tpu.memory_space<vmem>>, %arg5: memref<1x128xf32, #tpu.memory_space<vmem>>, %arg6: memref<9x128x128xbf16, #tpu.memory_space<vmem>>, %arg7: memref<1x128xf32, #tpu.memory_space<vmem>>, %arg8: memref<256x1xi32, #tpu.memory_space<vmem>>, %arg9: memref<1x8x256xf32, #tpu.memory_space<vmem>>, %arg10: memref<320x128xbf16, #tpu.memory_space<vmem>>) attributes {dimension_semantics = [#tpu.dimension_semantics<parallel>], iteration_bounds = array<i64: 2>, scalar_prefetch = 0 : i64, scratch_operands = 1 : i64, tpu.core_type = #tpu.core_type<tc>, window_params = [{transform_indices = @transform_0, window_bounds = array<i64: 1, 256, 36>}, {pipeline_mode = #tpu.pipeline_mode<synchronous>, transform_indices = @transform_1, window_bounds = array<i64: 36, 128>}, {pipeline_mode = #tpu.pipeline_mode<synchronous>, transform_indices = @transform_2, window_bounds = array<i64: 1, 128>}, {pipeline_mode = #tpu.pipeline_mode<synchronous>, transform_indices = @transform_3, window_bounds = array<i64: 4, 128>}, {pipeline_mode = #tpu.pipeline_mode<synchronous>, transform_indices = @transform_4, window_bounds = array<i64: 1, 128>}, {pipeline_mode = #tpu.pipeline_mode<synchronous>, transform_indices = @transform_5, window_bounds = array<i64: 9, 128, 128>}, {pipeline_mode = #tpu.pipeline_mode<synchronous>, transform_indices = @transform_6, window_bounds = array<i64: 1, 128>}, {pipeline_mode = #tpu.pipeline_mode<synchronous>, transform_indices = @transform_7, window_bounds = array<i64: 256, 1>}, {transform_indices = @transform_8, window_bounds = array<i64: 1, 8, 256>}]} {
    %c0 = arith.constant 0 : index
    %c0_0 = arith.constant 0 : index
    %c0_1 = arith.constant 0 : index
    %0 = vector.load %arg1[%c0, %c0_0, %c0_1] : memref<1x256x36xbf16, #tpu.memory_space<vmem>>, vector<1x256x36xbf16>
    %1 = vector.shape_cast %0 : vector<1x256x36xbf16> to vector<256x36xbf16>
    %c0_2 = arith.constant 0 : index
    %c0_3 = arith.constant 0 : index
    %2 = vector.load %arg2[%c0_2, %c0_3] : memref<36x128xbf16, #tpu.memory_space<vmem>>, vector<36x128xbf16>
    %cst = arith.constant dense<0.000000e+00> : vector<256x128xf32>
    %3 = tpu.matmul %1, %2, %cst {dimension_numbers = #tpu.dot_dimension_numbers<[1], [0], [0], [1], [0, 0, 1, 1], [], []>} : vector<256x36xbf16>, vector<36x128xbf16>, vector<256x128xf32> -> vector<256x128xf32>
    %c0_4 = arith.constant 0 : index
    %c0_5 = arith.constant 0 : index
    %4 = vector.load %arg3[%c0_4, %c0_5] : memref<1x128xf32, #tpu.memory_space<vmem>>, vector<1x128xf32>
    %5 = vector.broadcast %4 : vector<1x128xf32> to vector<256x128xf32>
    %6 = arith.addf %3, %5 : vector<256x128xf32>
    %cst_6 = arith.constant 0.000000e+00 : f32
    %7 = vector.broadcast %cst_6 : f32 to vector<256x128xf32>
    %8 = arith.maximumf %6, %7 : vector<256x128xf32>
    %9 = vector.extract_strided_slice %1 {offsets = [0, 16], sizes = [256, 4], strides = [1, 1]} : vector<256x36xbf16> to vector<256x4xbf16>
    %c0_7 = arith.constant 0 : index
    %c0_8 = arith.constant 0 : index
    %10 = vector.load %arg4[%c0_7, %c0_8] : memref<4x128xbf16, #tpu.memory_space<vmem>>, vector<4x128xbf16>
    %cst_9 = arith.constant dense<0.000000e+00> : vector<256x128xf32>
    %11 = tpu.matmul %9, %10, %cst_9 {dimension_numbers = #tpu.dot_dimension_numbers<[1], [0], [0], [1], [0, 0, 1, 1], [], []>} : vector<256x4xbf16>, vector<4x128xbf16>, vector<256x128xf32> -> vector<256x128xf32>
    %c0_10 = arith.constant 0 : index
    %c0_11 = arith.constant 0 : index
    %12 = vector.load %arg5[%c0_10, %c0_11] : memref<1x128xf32, #tpu.memory_space<vmem>>, vector<1x128xf32>
    %13 = vector.broadcast %12 : vector<1x128xf32> to vector<256x128xf32>
    %14 = arith.addf %11, %13 : vector<256x128xf32>
    %cst_12 = arith.constant 0.000000e+00 : bf16
    %15 = vector.broadcast %cst_12 : bf16 to vector<32x128xbf16>
    %c0_13 = arith.constant 0 : index
    %c0_14 = arith.constant 0 : index
    %16 = vector.load %arg10[%c0_13, %c0_14] : memref<320x128xbf16, #tpu.memory_space<vmem>>, vector<32x128xbf16>
    tpu.vector_store %arg10[%c0_13, %c0_14], %15 {strides = array<i32>} : memref<320x128xbf16, #tpu.memory_space<vmem>>, vector<32x128xbf16>,
    %cst_15 = arith.constant 0.000000e+00 : bf16
    %17 = vector.broadcast %cst_15 : bf16 to vector<32x128xbf16>
    %c288 = arith.constant 288 : index
    %c0_16 = arith.constant 0 : index
    %18 = vector.load %arg10[%c288, %c0_16] : memref<320x128xbf16, #tpu.memory_space<vmem>>, vector<32x128xbf16>
    tpu.vector_store %arg10[%c288, %c0_16], %17 {strides = array<i32>} : memref<320x128xbf16, #tpu.memory_space<vmem>>, vector<32x128xbf16>,
    %19 = arith.truncf %8 : vector<256x128xf32> to vector<256x128xbf16>
    %c32 = arith.constant 32 : index
    %c0_17 = arith.constant 0 : index
    %20 = vector.load %arg10[%c32, %c0_17] : memref<320x128xbf16, #tpu.memory_space<vmem>>, vector<256x128xbf16>
    tpu.vector_store %arg10[%c32, %c0_17], %19 {strides = array<i32>} : memref<320x128xbf16, #tpu.memory_space<vmem>>, vector<256x128xbf16>,
    %c0_18 = arith.constant 0 : index
    %c0_19 = arith.constant 0 : index
    %21 = vector.load %arg8[%c0_18, %c0_19] : memref<256x1xi32, #tpu.memory_space<vmem>>, vector<256x1xi32>
    %c1_i32 = arith.constant 1 : i32
    %22 = vector.broadcast %c1_i32 : i32 to vector<256x1xi32>
    %23 = arith.cmpi sge, %21, %22 : vector<256x1xi32>
    %c15_i32 = arith.constant 15 : i32
    %24 = vector.broadcast %c15_i32 : i32 to vector<256x1xi32>
    %25 = arith.cmpi slt, %21, %24 : vector<256x1xi32>
    %c0_20 = arith.constant 0 : index
    %c0_21 = arith.constant 0 : index
    %26 = vector.load %arg7[%c0_20, %c0_21] : memref<1x128xf32, #tpu.memory_space<vmem>>, vector<1x128xf32>
    %27 = vector.broadcast %26 : vector<1x128xf32> to vector<256x128xf32>
    %28 = arith.addf %14, %27 : vector<256x128xf32>
    %c15 = arith.constant 15 : index
    %c0_22 = arith.constant 0 : index
    %29 = vector.load %arg10[%c15, %c0_22] : memref<320x128xbf16, #tpu.memory_space<vmem>>, vector<256x128xbf16>
    %c0_23 = arith.constant 0 : index
    %c0_24 = arith.constant 0 : index
    %c0_25 = arith.constant 0 : index
    %30 = vector.load %arg6[%c0_23, %c0_24, %c0_25] : memref<9x128x128xbf16, #tpu.memory_space<vmem>>, vector<1x128x128xbf16>
    %31 = vector.shape_cast %30 : vector<1x128x128xbf16> to vector<128x128xbf16>
    %cst_26 = arith.constant dense<0.000000e+00> : vector<256x128xf32>
    %32 = tpu.matmul %29, %31, %cst_26 {dimension_numbers = #tpu.dot_dimension_numbers<[1], [0], [0], [1], [0, 0, 1, 1], [], []>} : vector<256x128xbf16>, vector<128x128xbf16>, vector<256x128xf32> -> vector<256x128xf32>
    %cst_27 = arith.constant 0.000000e+00 : f32
    %33 = vector.shape_cast %23 : vector<256x1xi1> to vector<256x1xi1>
    %34 = vector.broadcast %33 : vector<256x1xi1> to vector<256x128xi1>
    %35 = vector.broadcast %cst_27 : f32 to vector<256x128xf32>
    %36 = arith.select %34, %32, %35 : vector<256x128xi1>, vector<256x128xf32>
    %37 = arith.addf %28, %36 : vector<256x128xf32>
    %c16 = arith.constant 16 : index
    %c0_28 = arith.constant 0 : index
    %38 = vector.load %arg10[%c16, %c0_28] : memref<320x128xbf16, #tpu.memory_space<vmem>>, vector<256x128xbf16>
    %c1 = arith.constant 1 : index
    %c0_29 = arith.constant 0 : index
    %c0_30 = arith.constant 0 : index
    %39 = vector.load %arg6[%c1, %c0_29, %c0_30] : memref<9x128x128xbf16, #tpu.memory_space<vmem>>, vector<1x128x128xbf16>
    %40 = vector.shape_cast %39 : vector<1x128x128xbf16> to vector<128x128xbf16>
    %cst_31 = arith.constant dense<0.000000e+00> : vector<256x128xf32>
    %41 = tpu.matmul %38, %40, %cst_31 {dimension_numbers = #tpu.dot_dimension_numbers<[1], [0], [0], [1], [0, 0, 1, 1], [], []>} : vector<256x128xbf16>, vector<128x128xbf16>, vector<256x128xf32> -> vector<256x128xf32>
    %42 = arith.addf %37, %41 : vector<256x128xf32>
    %c17 = arith.constant 17 : index
    %c0_32 = arith.constant 0 : index
    %43 = vector.load %arg10[%c17, %c0_32] : memref<320x128xbf16, #tpu.memory_space<vmem>>, vector<256x128xbf16>
    %c2 = arith.constant 2 : index
    %c0_33 = arith.constant 0 : index
    %c0_34 = arith.constant 0 : index
    %44 = vector.load %arg6[%c2, %c0_33, %c0_34] : memref<9x128x128xbf16, #tpu.memory_space<vmem>>, vector<1x128x128xbf16>
    %45 = vector.shape_cast %44 : vector<1x128x128xbf16> to vector<128x128xbf16>
    %cst_35 = arith.constant dense<0.000000e+00> : vector<256x128xf32>
    %46 = tpu.matmul %43, %45, %cst_35 {dimension_numbers = #tpu.dot_dimension_numbers<[1], [0], [0], [1], [0, 0, 1, 1], [], []>} : vector<256x128xbf16>, vector<128x128xbf16>, vector<256x128xf32> -> vector<256x128xf32>
    %cst_36 = arith.constant 0.000000e+00 : f32
    %47 = vector.shape_cast %25 : vector<256x1xi1> to vector<256x1xi1>
    %48 = vector.broadcast %47 : vector<256x1xi1> to vector<256x128xi1>
    %49 = vector.broadcast %cst_36 : f32 to vector<256x128xf32>
    %50 = arith.select %48, %46, %49 : vector<256x128xi1>, vector<256x128xf32>
    %51 = arith.addf %42, %50 : vector<256x128xf32>
    %c31 = arith.constant 31 : index
    %c0_37 = arith.constant 0 : index
    %52 = vector.load %arg10[%c31, %c0_37] : memref<320x128xbf16, #tpu.memory_space<vmem>>, vector<256x128xbf16>
    %c3 = arith.constant 3 : index
    %c0_38 = arith.constant 0 : index
    %c0_39 = arith.constant 0 : index
    %53 = vector.load %arg6[%c3, %c0_38, %c0_39] : memref<9x128x128xbf16, #tpu.memory_space<vmem>>, vector<1x128x128xbf16>
    %54 = vector.shape_cast %53 : vector<1x128x128xbf16> to vector<128x128xbf16>
    %cst_40 = arith.constant dense<0.000000e+00> : vector<256x128xf32>
    %55 = tpu.matmul %52, %54, %cst_40 {dimension_numbers = #tpu.dot_dimension_numbers<[1], [0], [0], [1], [0, 0, 1, 1], [], []>} : vector<256x128xbf16>, vector<128x128xbf16>, vector<256x128xf32> -> vector<256x128xf32>
    %cst_41 = arith.constant 0.000000e+00 : f32
    %56 = vector.shape_cast %23 : vector<256x1xi1> to vector<256x1xi1>
    %57 = vector.broadcast %56 : vector<256x1xi1> to vector<256x128xi1>
    %58 = vector.broadcast %cst_41 : f32 to vector<256x128xf32>
    %59 = arith.select %57, %55, %58 : vector<256x128xi1>, vector<256x128xf32>
    %60 = arith.addf %51, %59 : vector<256x128xf32>
    %c32_42 = arith.constant 32 : index
    %c0_43 = arith.constant 0 : index
    %61 = vector.load %arg10[%c32_42, %c0_43] : memref<320x128xbf16, #tpu.memory_space<vmem>>, vector<256x128xbf16>
    %c4 = arith.constant 4 : index
    %c0_44 = arith.constant 0 : index
    %c0_45 = arith.constant 0 : index
    %62 = vector.load %arg6[%c4, %c0_44, %c0_45] : memref<9x128x128xbf16, #tpu.memory_space<vmem>>, vector<1x128x128xbf16>
    %63 = vector.shape_cast %62 : vector<1x128x128xbf16> to vector<128x128xbf16>
    %cst_46 = arith.constant dense<0.000000e+00> : vector<256x128xf32>
    %64 = tpu.matmul %61, %63, %cst_46 {dimension_numbers = #tpu.dot_dimension_numbers<[1], [0], [0], [1], [0, 0, 1, 1], [], []>} : vector<256x128xbf16>, vector<128x128xbf16>, vector<256x128xf32> -> vector<256x128xf32>
    %65 = arith.addf %60, %64 : vector<256x128xf32>
    %c33 = arith.constant 33 : index
    %c0_47 = arith.constant 0 : index
    %66 = vector.load %arg10[%c33, %c0_47] : memref<320x128xbf16, #tpu.memory_space<vmem>>, vector<256x128xbf16>
    %c5 = arith.constant 5 : index
    %c0_48 = arith.constant 0 : index
    %c0_49 = arith.constant 0 : index
    %67 = vector.load %arg6[%c5, %c0_48, %c0_49] : memref<9x128x128xbf16, #tpu.memory_space<vmem>>, vector<1x128x128xbf16>
    %68 = vector.shape_cast %67 : vector<1x128x128xbf16> to vector<128x128xbf16>
    %cst_50 = arith.constant dense<0.000000e+00> : vector<256x128xf32>
    %69 = tpu.matmul %66, %68, %cst_50 {dimension_numbers = #tpu.dot_dimension_numbers<[1], [0], [0], [1], [0, 0, 1, 1], [], []>} : vector<256x128xbf16>, vector<128x128xbf16>, vector<256x128xf32> -> vector<256x128xf32>
    %cst_51 = arith.constant 0.000000e+00 : f32
    %70 = vector.shape_cast %25 : vector<256x1xi1> to vector<256x1xi1>
    %71 = vector.broadcast %70 : vector<256x1xi1> to vector<256x128xi1>
    %72 = vector.broadcast %cst_51 : f32 to vector<256x128xf32>
    %73 = arith.select %71, %69, %72 : vector<256x128xi1>, vector<256x128xf32>
    %74 = arith.addf %65, %73 : vector<256x128xf32>
    %c47 = arith.constant 47 : index
    %c0_52 = arith.constant 0 : index
    %75 = vector.load %arg10[%c47, %c0_52] : memref<320x128xbf16, #tpu.memory_space<vmem>>, vector<256x128xbf16>
    %c6 = arith.constant 6 : index
    %c0_53 = arith.constant 0 : index
    %c0_54 = arith.constant 0 : index
    %76 = vector.load %arg6[%c6, %c0_53, %c0_54] : memref<9x128x128xbf16, #tpu.memory_space<vmem>>, vector<1x128x128xbf16>
    %77 = vector.shape_cast %76 : vector<1x128x128xbf16> to vector<128x128xbf16>
    %cst_55 = arith.constant dense<0.000000e+00> : vector<256x128xf32>
    %78 = tpu.matmul %75, %77, %cst_55 {dimension_numbers = #tpu.dot_dimension_numbers<[1], [0], [0], [1], [0, 0, 1, 1], [], []>} : vector<256x128xbf16>, vector<128x128xbf16>, vector<256x128xf32> -> vector<256x128xf32>
    %cst_56 = arith.constant 0.000000e+00 : f32
    %79 = vector.shape_cast %23 : vector<256x1xi1> to vector<256x1xi1>
    %80 = vector.broadcast %79 : vector<256x1xi1> to vector<256x128xi1>
    %81 = vector.broadcast %cst_56 : f32 to vector<256x128xf32>
    %82 = arith.select %80, %78, %81 : vector<256x128xi1>, vector<256x128xf32>
    %83 = arith.addf %74, %82 : vector<256x128xf32>
    %c48 = arith.constant 48 : index
    %c0_57 = arith.constant 0 : index
    %84 = vector.load %arg10[%c48, %c0_57] : memref<320x128xbf16, #tpu.memory_space<vmem>>, vector<256x128xbf16>
    %c7 = arith.constant 7 : index
    %c0_58 = arith.constant 0 : index
    %c0_59 = arith.constant 0 : index
    %85 = vector.load %arg6[%c7, %c0_58, %c0_59] : memref<9x128x128xbf16, #tpu.memory_space<vmem>>, vector<1x128x128xbf16>
    %86 = vector.shape_cast %85 : vector<1x128x128xbf16> to vector<128x128xbf16>
    %cst_60 = arith.constant dense<0.000000e+00> : vector<256x128xf32>
    %87 = tpu.matmul %84, %86, %cst_60 {dimension_numbers = #tpu.dot_dimension_numbers<[1], [0], [0], [1], [0, 0, 1, 1], [], []>} : vector<256x128xbf16>, vector<128x128xbf16>, vector<256x128xf32> -> vector<256x128xf32>
    %88 = arith.addf %83, %87 : vector<256x128xf32>
    %c49 = arith.constant 49 : index
    %c0_61 = arith.constant 0 : index
    %89 = vector.load %arg10[%c49, %c0_61] : memref<320x128xbf16, #tpu.memory_space<vmem>>, vector<256x128xbf16>
    %c8 = arith.constant 8 : index
    %c0_62 = arith.constant 0 : index
    %c0_63 = arith.constant 0 : index
    %90 = vector.load %arg6[%c8, %c0_62, %c0_63] : memref<9x128x128xbf16, #tpu.memory_space<vmem>>, vector<1x128x128xbf16>
    %91 = vector.shape_cast %90 : vector<1x128x128xbf16> to vector<128x128xbf16>
    %cst_64 = arith.constant dense<0.000000e+00> : vector<256x128xf32>
    %92 = tpu.matmul %89, %91, %cst_64 {dimension_numbers = #tpu.dot_dimension_numbers<[1], [0], [0], [1], [0, 0, 1, 1], [], []>} : vector<256x128xbf16>, vector<128x128xbf16>, vector<256x128xf32> -> vector<256x128xf32>
    %cst_65 = arith.constant 0.000000e+00 : f32
    %93 = vector.shape_cast %25 : vector<256x1xi1> to vector<256x1xi1>
    %94 = vector.broadcast %93 : vector<256x1xi1> to vector<256x128xi1>
    %95 = vector.broadcast %cst_65 : f32 to vector<256x128xf32>
    %96 = arith.select %94, %92, %95 : vector<256x128xi1>, vector<256x128xf32>
    %97 = arith.addf %88, %96 : vector<256x128xf32>
    %cst_66 = arith.constant 0.000000e+00 : f32
    %98 = vector.broadcast %cst_66 : f32 to vector<256x128xf32>
    %99 = arith.maximumf %97, %98 : vector<256x128xf32>
    %100 = tpu.transpose %99, [1, 0] : vector<256x128xf32> -> vector<128x256xf32>
    %101 = vector.extract_strided_slice %100 {offsets = [0, 0], sizes = [8, 256], strides = [1, 1]} : vector<128x256xf32> to vector<8x256xf32>
    %c0_67 = arith.constant 0 : index
    %c0_68 = arith.constant 0 : index
    %c0_69 = arith.constant 0 : index
    %102 = vector.load %arg9[%c0_67, %c0_68, %c0_69] : memref<1x8x256xf32, #tpu.memory_space<vmem>>, vector<1x8x256xf32>
    %103 = vector.shape_cast %102 : vector<1x8x256xf32> to vector<8x256xf32>
    %104 = vector.shape_cast %101 : vector<8x256xf32> to vector<1x8x256xf32>
    tpu.vector_store %arg9[%c0_67, %c0_68, %c0_69], %104 {strides = array<i32>} : memref<1x8x256xf32, #tpu.memory_space<vmem>>, vector<1x8x256xf32>,
    return
  }
  func.func @transform_0(%arg0: i32) -> (i32, i32, i32) {
    %c0_i32 = arith.constant 0 : i32
    %c0_i32_0 = arith.constant 0 : i32
    %c0_i32_1 = arith.constant 0 : i32
    return %arg0, %c0_i32, %c0_i32_0 : i32, i32, i32
  }
  func.func @transform_1(%arg0: i32) -> (i32, i32) {
    %c0_i32 = arith.constant 0 : i32
    %c0_i32_0 = arith.constant 0 : i32
    %c0_i32_1 = arith.constant 0 : i32
    return %c0_i32, %c0_i32_0 : i32, i32
  }
  func.func @transform_2(%arg0: i32) -> (i32, i32) {
    %c0_i32 = arith.constant 0 : i32
    %c0_i32_0 = arith.constant 0 : i32
    %c0_i32_1 = arith.constant 0 : i32
    return %c0_i32, %c0_i32_0 : i32, i32
  }
  func.func @transform_3(%arg0: i32) -> (i32, i32) {
    %c0_i32 = arith.constant 0 : i32
    %c0_i32_0 = arith.constant 0 : i32
    %c0_i32_1 = arith.constant 0 : i32
    return %c0_i32, %c0_i32_0 : i32, i32
  }
  func.func @transform_4(%arg0: i32) -> (i32, i32) {
    %c0_i32 = arith.constant 0 : i32
    %c0_i32_0 = arith.constant 0 : i32
    %c0_i32_1 = arith.constant 0 : i32
    return %c0_i32, %c0_i32_0 : i32, i32
  }
  func.func @transform_5(%arg0: i32) -> (i32, i32, i32) {
    %c0_i32 = arith.constant 0 : i32
    %c0_i32_0 = arith.constant 0 : i32
    %c0_i32_1 = arith.constant 0 : i32
    %c0_i32_2 = arith.constant 0 : i32
    return %c0_i32, %c0_i32_0, %c0_i32_1 : i32, i32, i32
  }
  func.func @transform_6(%arg0: i32) -> (i32, i32) {
    %c0_i32 = arith.constant 0 : i32
    %c0_i32_0 = arith.constant 0 : i32
    %c0_i32_1 = arith.constant 0 : i32
    return %c0_i32, %c0_i32_0 : i32, i32
  }
  func.func @transform_7(%arg0: i32) -> (i32, i32) {
    %c0_i32 = arith.constant 0 : i32
    %c0_i32_0 = arith.constant 0 : i32
    %c0_i32_1 = arith.constant 0 : i32
    return %c0_i32, %c0_i32_0 : i32, i32
  }
  func.func @transform_8(%arg0: i32) -> (i32, i32, i32) {
    %c0_i32 = arith.constant 0 : i32
    %c0_i32_0 = arith.constant 0 : i32
    %c0_i32_1 = arith.constant 0 : i32
    return %arg0, %c0_i32, %c0_i32_0 : i32, i32, i32
  }
}

</mosaic_0001>

<llo_original>
// kernel: tile.0
$region0: #{tile.0}
  %s0 = inlined_call_operand.vmem [shape: s32[16,16], index: 0, kind: input, shape index: {}]
  %s1 = inlined_call_operand.vmem [shape: s32[256,1], index: 1, kind: output, shape index: {}]
  %v2 = vld [vmem:[%s0] sm:$0xff]
  %vm3 = vcmask 7168
  %4 = vst.msk [vmem:[%s1] ss:$16 sm:$0x3] %vm3, %v2
  %5 = vst.msk [vmem:[%s1] ss:$16 sm:$0xc] %vm3, %v2
  %6 = vst.msk [vmem:[%s1] ss:$16 sm:$0x30] %vm3, %v2
  %7 = vst.msk [vmem:[%s1] ss:$16 sm:$0xc0] %vm3, %v2
  %s8 = scalar_lea.vmem %s0, 8
  %v9 = vld [vmem:[%s8] sm:$0xff]
  %vm10 = vcmask 7168
  %s11 = scalar_lea.vmem %s1, 128
  %12 = vst.msk [vmem:[%s11] ss:$16 sm:$0x3] %vm10, %v9
  %s13 = scalar_lea.vmem %s1, 128
  %14 = vst.msk [vmem:[%s13] ss:$16 sm:$0xc] %vm10, %v9
  %s15 = scalar_lea.vmem %s1, 128
  %16 = vst.msk [vmem:[%s15] ss:$16 sm:$0x30] %vm10, %v9
  %s17 = scalar_lea.vmem %s1, 128
  %18 = vst.msk [vmem:[%s17] ss:$16 sm:$0xc0] %vm10, %v9
  %v19 = vld [vmem:[%s0] sm:$0xff]
  %20 = vrot.lane.b32.xlu0 %v19, 127
  %v21 = vpop.permute.xlu0 %20
  %vm22 = vcmask 7168
  %s23 = scalar_lea.vmem %s1, 1
  %24 = vst.msk [vmem:[%s23] ss:$16 sm:$0x3] %vm22, %v21
  %s25 = scalar_lea.vmem %s1, 1
  %26 = vst.msk [vmem:[%s25] ss:$16 sm:$0xc] %vm22, %v21
  %s27 = scalar_lea.vmem %s1, 1
  %28 = vst.msk [vmem:[%s27] ss:$16 sm:$0x30] %vm22, %v21
  %s29 = scalar_lea.vmem %s1, 1
  %30 = vst.msk [vmem:[%s29] ss:$16 sm:$0xc0] %vm22, %v21
  %s31 = scalar_lea.vmem %s0, 8
  %v32 = vld [vmem:[%s31] sm:$0xff]
  %33 = vrot.lane.b32.xlu0 %v32, 127
  %v34 = vpop.permute.xlu0 %33
  %vm35 = vcmask 7168
  %s36 = scalar_lea.vmem %s1, 129
  %37 = vst.msk [vmem:[%s36] ss:$16 sm:$0x3] %vm35, %v34
  %s38 = scalar_lea.vmem %s1, 129
  %39 = vst.msk [vmem:[%s38] ss:$16 sm:$0xc] %vm35, %v34
  %s40 = scalar_lea.vmem %s1, 129
  %41 = vst.msk [vmem:[%s40] ss:$16 sm:$0x30] %vm35, %v34
  %s42 = scalar_lea.vmem %s1, 129
  %43 = vst.msk [vmem:[%s42] ss:$16 sm:$0xc0] %vm35, %v34
  %v44 = vld [vmem:[%s0] sm:$0xff]
  %45 = vrot.lane.b32.xlu0 %v44, 126
  %v46 = vpop.permute.xlu0 %45
  %vm47 = vcmask 7168
  %s48 = scalar_lea.vmem %s1, 2
  %49 = vst.msk [vmem:[%s48] ss:$16 sm:$0x3] %vm47, %v46
  %s50 = scalar_lea.vmem %s1, 2
  %51 = vst.msk [vmem:[%s50] ss:$16 sm:$0xc] %vm47, %v46
  %s52 = scalar_lea.vmem %s1, 2
  %53 = vst.msk [vmem:[%s52] ss:$16 sm:$0x30] %vm47, %v46
  %s54 = scalar_lea.vmem %s1, 2
  %55 = vst.msk [vmem:[%s54] ss:$16 sm:$0xc0] %vm47, %v46
  %s56 = scalar_lea.vmem %s0, 8
  %v57 = vld [vmem:[%s56] sm:$0xff]
  %58 = vrot.lane.b32.xlu0 %v57, 126
  %v59 = vpop.permute.xlu0 %58
  %vm60 = vcmask 7168
  %s61 = scalar_lea.vmem %s1, 130
  %62 = vst.msk [vmem:[%s61] ss:$16 sm:$0x3] %vm60, %v59
  %s63 = scalar_lea.vmem %s1, 130
  %64 = vst.msk [vmem:[%s63] ss:$16 sm:$0xc] %vm60, %v59
  %s65 = scalar_lea.vmem %s1, 130
  %66 = vst.msk [vmem:[%s65] ss:$16 sm:$0x30] %vm60, %v59
  %s67 = scalar_lea.vmem %s1, 130
  %68 = vst.msk [vmem:[%s67] ss:$16 sm:$0xc0] %vm60, %v59
  %v69 = vld [vmem:[%s0] sm:$0xff]
  %70 = vrot.lane.b32.xlu0 %v69, 125
  %v71 = vpop.permute.xlu0 %70
  %vm72 = vcmask 7168
  %s73 = scalar_lea.vmem %s1, 3
  %74 = vst.msk [vmem:[%s73] ss:$16 sm:$0x3] %vm72, %v71
  %s75 = scalar_lea.vmem %s1, 3
  %76 = vst.msk [vmem:[%s75] ss:$16 sm:$0xc] %vm72, %v71
  %s77 = scalar_lea.vmem %s1, 3
  %78 = vst.msk [vmem:[%s77] ss:$16 sm:$0x30] %vm72, %v71
  %s79 = scalar_lea.vmem %s1, 3
  %80 = vst.msk [vmem:[%s79] ss:$16 sm:$0xc0] %vm72, %v71
  %s81 = scalar_lea.vmem %s0, 8
  %v82 = vld [vmem:[%s81] sm:$0xff]
  %83 = vrot.lane.b32.xlu0 %v82, 125
  %v84 = vpop.permute.xlu0 %83
  %vm85 = vcmask 7168
  %s86 = scalar_lea.vmem %s1, 131
  %87 = vst.msk [vmem:[%s86] ss:$16 sm:$0x3] %vm85, %v84
  %s88 = scalar_lea.vmem %s1, 131
  %89 = vst.msk [vmem:[%s88] ss:$16 sm:$0xc] %vm85, %v84
  %s90 = scalar_lea.vmem %s1, 131
  %91 = vst.msk [vmem:[%s90] ss:$16 sm:$0x30] %vm85, %v84
  %s92 = scalar_lea.vmem %s1, 131
  %93 = vst.msk [vmem:[%s92] ss:$16 sm:$0xc0] %vm85, %v84
  %v94 = vld [vmem:[%s0] sm:$0xff]
  %95 = vrot.lane.b32.xlu0 %v94, 124
  %v96 = vpop.permute.xlu0 %95
  %vm97 = vcmask 7168
  %s98 = scalar_lea.vmem %s1, 4
  %99 = vst.msk [vmem:[%s98] ss:$16 sm:$0x3] %vm97, %v96
  %s100 = scalar_lea.vmem %s1, 4
  %101 = vst.msk [vmem:[%s100] ss:$16 sm:$0xc] %vm97, %v96
  %s102 = scalar_lea.vmem %s1, 4
  %103 = vst.msk [vmem:[%s102] ss:$16 sm:$0x30] %vm97, %v96
  %s104 = scalar_lea.vmem %s1, 4
  %105 = vst.msk [vmem:[%s104] ss:$16 sm:$0xc0] %vm97, %v96
  %s106 = scalar_lea.vmem %s0, 8
  %v107 = vld [vmem:[%s106] sm:$0xff]
  %108 = vrot.lane.b32.xlu0 %v107, 124
  %v109 = vpop.permute.xlu0 %108
  %vm110 = vcmask 7168
  %s111 = scalar_lea.vmem %s1, 132
  %112 = vst.msk [vmem:[%s111] ss:$16 sm:$0x3] %vm110, %v109
  %s113 = scalar_lea.vmem %s1, 132
  %114 = vst.msk [vmem:[%s113] ss:$16 sm:$0xc] %vm110, %v109
  %s115 = scalar_lea.vmem %s1, 132
  %116 = vst.msk [vmem:[%s115] ss:$16 sm:$0x30] %vm110, %v109
  %s117 = scalar_lea.vmem %s1, 132
  %118 = vst.msk [vmem:[%s117] ss:$16 sm:$0xc0] %vm110, %v109
  %v119 = vld [vmem:[%s0] sm:$0xff]
  %120 = vrot.lane.b32.xlu0 %v119, 123
  %v121 = vpop.permute.xlu0 %120
  %vm122 = vcmask 7168
  %s123 = scalar_lea.vmem %s1, 5
  %124 = vst.msk [vmem:[%s123] ss:$16 sm:$0x3] %vm122, %v121
  %s125 = scalar_lea.vmem %s1, 5
  %126 = vst.msk [vmem:[%s125] ss:$16 sm:$0xc] %vm122, %v121
  %s127 = scalar_lea.vmem %s1, 5
  %128 = vst.msk [vmem:[%s127] ss:$16 sm:$0x30] %vm122, %v121
  %s129 = scalar_lea.vmem %s1, 5
  %130 = vst.msk [vmem:[%s129] ss:$16 sm:$0xc0] %vm122, %v121
  %s131 = scalar_lea.vmem %s0, 8
  %v132 = vld [vmem:[%s131] sm:$0xff]
  %133 = vrot.lane.b32.xlu0 %v132, 123
  %v134 = vpop.permute.xlu0 %133
  %vm135 = vcmask 7168
  %s136 = scalar_lea.vmem %s1, 133
  %137 = vst.msk [vmem:[%s136] ss:$16 sm:$0x3] %vm135, %v134
  %s138 = scalar_lea.vmem %s1, 133
  %139 = vst.msk [vmem:[%s138] ss:$16 sm:$0xc] %vm135, %v134
  %s140 = scalar_lea.vmem %s1, 133
  %141 = vst.msk [vmem:[%s140] ss:$16 sm:$0x30] %vm135, %v134
  %s142 = scalar_lea.vmem %s1, 133
  %143 = vst.msk [vmem:[%s142] ss:$16 sm:$0xc0] %vm135, %v134
  %v144 = vld [vmem:[%s0] sm:$0xff]
  %145 = vrot.lane.b32.xlu0 %v144, 122
  %v146 = vpop.permute.xlu0 %145
  %vm147 = vcmask 7168
  %s148 = scalar_lea.vmem %s1, 6
  %149 = vst.msk [vmem:[%s148] ss:$16 sm:$0x3] %vm147, %v146
  %s150 = scalar_lea.vmem %s1, 6
  %151 = vst.msk [vmem:[%s150] ss:$16 sm:$0xc] %vm147, %v146
  %s152 = scalar_lea.vmem %s1, 6
  %153 = vst.msk [vmem:[%s152] ss:$16 sm:$0x30] %vm147, %v146
  %s154 = scalar_lea.vmem %s1, 6
  %155 = vst.msk [vmem:[%s154] ss:$16 sm:$0xc0] %vm147, %v146
  %s156 = scalar_lea.vmem %s0, 8
  %v157 = vld [vmem:[%s156] sm:$0xff]
  %158 = vrot.lane.b32.xlu0 %v157, 122
  %v159 = vpop.permute.xlu0 %158
  %vm160 = vcmask 7168
  %s161 = scalar_lea.vmem %s1, 134
  %162 = vst.msk [vmem:[%s161] ss:$16 sm:$0x3] %vm160, %v159
  %s163 = scalar_lea.vmem %s1, 134
  %164 = vst.msk [vmem:[%s163] ss:$16 sm:$0xc] %vm160, %v159
  %s165 = scalar_lea.vmem %s1, 134
  %166 = vst.msk [vmem:[%s165] ss:$16 sm:$0x30] %vm160, %v159
  %s167 = scalar_lea.vmem %s1, 134
  %168 = vst.msk [vmem:[%s167] ss:$16 sm:$0xc0] %vm160, %v159
  %v169 = vld [vmem:[%s0] sm:$0xff]
  %170 = vrot.lane.b32.xlu0 %v169, 121
  %v171 = vpop.permute.xlu0 %170
  %vm172 = vcmask 7168
  %s173 = scalar_lea.vmem %s1, 7
  %174 = vst.msk [vmem:[%s173] ss:$16 sm:$0x3] %vm172, %v171
  %s175 = scalar_lea.vmem %s1, 7
  %176 = vst.msk [vmem:[%s175] ss:$16 sm:$0xc] %vm172, %v171
  %s177 = scalar_lea.vmem %s1, 7
  %178 = vst.msk [vmem:[%s177] ss:$16 sm:$0x30] %vm172, %v171
  %s179 = scalar_lea.vmem %s1, 7
  %180 = vst.msk [vmem:[%s179] ss:$16 sm:$0xc0] %vm172, %v171
  %s181 = scalar_lea.vmem %s0, 8
  %v182 = vld [vmem:[%s181] sm:$0xff]
  %183 = vrot.lane.b32.xlu0 %v182, 121
  %v184 = vpop.permute.xlu0 %183
  %vm185 = vcmask 7168
  %s186 = scalar_lea.vmem %s1, 135
  %187 = vst.msk [vmem:[%s186] ss:$16 sm:$0x3] %vm185, %v184
  %s188 = scalar_lea.vmem %s1, 135
  %189 = vst.msk [vmem:[%s188] ss:$16 sm:$0xc] %vm185, %v184
  %s190 = scalar_lea.vmem %s1, 135
  %191 = vst.msk [vmem:[%s190] ss:$16 sm:$0x30] %vm185, %v184
  %s192 = scalar_lea.vmem %s1, 135
  %193 = vst.msk [vmem:[%s192] ss:$16 sm:$0xc0] %vm185, %v184
  %v194 = vld [vmem:[%s0] sm:$0xff]
  %195 = vrot.lane.b32.xlu0 %v194, 120
  %v196 = vpop.permute.xlu0 %195
  %vm197 = vcmask 7168
  %s198 = scalar_lea.vmem %s1, 8
  %199 = vst.msk [vmem:[%s198] ss:$16 sm:$0x3] %vm197, %v196
  %s200 = scalar_lea.vmem %s1, 8
  %201 = vst.msk [vmem:[%s200] ss:$16 sm:$0xc] %vm197, %v196
  %s202 = scalar_lea.vmem %s1, 8
  %203 = vst.msk [vmem:[%s202] ss:$16 sm:$0x30] %vm197, %v196
  %s204 = scalar_lea.vmem %s1, 8
  %205 = vst.msk [vmem:[%s204] ss:$16 sm:$0xc0] %vm197, %v196
  %s206 = scalar_lea.vmem %s0, 8
  %v207 = vld [vmem:[%s206] sm:$0xff]
  %208 = vrot.lane.b32.xlu0 %v207, 120
  %v209 = vpop.permute.xlu0 %208
  %vm210 = vcmask 7168
  %s211 = scalar_lea.vmem %s1, 136
  %212 = vst.msk [vmem:[%s211] ss:$16 sm:$0x3] %vm210, %v209
  %s213 = scalar_lea.vmem %s1, 136
  %214 = vst.msk [vmem:[%s213] ss:$16 sm:$0xc] %vm210, %v209
  %s215 = scalar_lea.vmem %s1, 136
  %216 = vst.msk [vmem:[%s215] ss:$16 sm:$0x30] %vm210, %v209
  %s217 = scalar_lea.vmem %s1, 136
  %218 = vst.msk [vmem:[%s217] ss:$16 sm:$0xc0] %vm210, %v209
  %v219 = vld [vmem:[%s0] sm:$0xff]
  %220 = vrot.lane.b32.xlu0 %v219, 119
  %v221 = vpop.permute.xlu0 %220
  %vm222 = vcmask 7168
  %s223 = scalar_lea.vmem %s1, 9
  %224 = vst.msk [vmem:[%s223] ss:$16 sm:$0x3] %vm222, %v221
  %s225 = scalar_lea.vmem %s1, 9
  %226 = vst.msk [vmem:[%s225] ss:$16 sm:$0xc] %vm222, %v221
  %s227 = scalar_lea.vmem %s1, 9
  %228 = vst.msk [vmem:[%s227] ss:$16 sm:$0x30] %vm222, %v221
  %s229 = scalar_lea.vmem %s1, 9
  %230 = vst.msk [vmem:[%s229] ss:$16 sm:$0xc0] %vm222, %v221
  %s231 = scalar_lea.vmem %s0, 8
  %v232 = vld [vmem:[%s231] sm:$0xff]
  %233 = vrot.lane.b32.xlu0 %v232, 119
  %v234 = vpop.permute.xlu0 %233
  %vm235 = vcmask 7168
  %s236 = scalar_lea.vmem %s1, 137
  %237 = vst.msk [vmem:[%s236] ss:$16 sm:$0x3] %vm235, %v234
  %s238 = scalar_lea.vmem %s1, 137
  %239 = vst.msk [vmem:[%s238] ss:$16 sm:$0xc] %vm235, %v234
  %s240 = scalar_lea.vmem %s1, 137
  %241 = vst.msk [vmem:[%s240] ss:$16 sm:$0x30] %vm235, %v234
  %s242 = scalar_lea.vmem %s1, 137
  %243 = vst.msk [vmem:[%s242] ss:$16 sm:$0xc0] %vm235, %v234
  %v244 = vld [vmem:[%s0] sm:$0xff]
  %245 = vrot.lane.b32.xlu0 %v244, 118
  %v246 = vpop.permute.xlu0 %245
  %vm247 = vcmask 7168
  %s248 = scalar_lea.vmem %s1, 10
  %249 = vst.msk [vmem:[%s248] ss:$16 sm:$0x3] %vm247, %v246
  %s250 = scalar_lea.vmem %s1, 10
  %251 = vst.msk [vmem:[%s250] ss:$16 sm:$0xc] %vm247, %v246
  %s252 = scalar_lea.vmem %s1, 10
  %253 = vst.msk [vmem:[%s252] ss:$16 sm:$0x30] %vm247, %v246
  %s254 = scalar_lea.vmem %s1, 10
  %255 = vst.msk [vmem:[%s254] ss:$16 sm:$0xc0] %vm247, %v246
  %s256 = scalar_lea.vmem %s0, 8
  %v257 = vld [vmem:[%s256] sm:$0xff]
  %258 = vrot.lane.b32.xlu0 %v257, 118
  %v259 = vpop.permute.xlu0 %258
  %vm260 = vcmask 7168
  %s261 = scalar_lea.vmem %s1, 138
  %262 = vst.msk [vmem:[%s261] ss:$16 sm:$0x3] %vm260, %v259
  %s263 = scalar_lea.vmem %s1, 138
  %264 = vst.msk [vmem:[%s263] ss:$16 sm:$0xc] %vm260, %v259
  %s265 = scalar_lea.vmem %s1, 138
  %266 = vst.msk [vmem:[%s265] ss:$16 sm:$0x30] %vm260, %v259
  %s267 = scalar_lea.vmem %s1, 138
  %268 = vst.msk [vmem:[%s267] ss:$16 sm:$0xc0] %vm260, %v259
  %v269 = vld [vmem:[%s0] sm:$0xff]
  %270 = vrot.lane.b32.xlu0 %v269, 117
  %v271 = vpop.permute.xlu0 %270
  %vm272 = vcmask 7168
  %s273 = scalar_lea.vmem %s1, 11
  %274 = vst.msk [vmem:[%s273] ss:$16 sm:$0x3] %vm272, %v271
  %s275 = scalar_lea.vmem %s1, 11
  %276 = vst.msk [vmem:[%s275] ss:$16 sm:$0xc] %vm272, %v271
  %s277 = scalar_lea.vmem %s1, 11
  %278 = vst.msk [vmem:[%s277] ss:$16 sm:$0x30] %vm272, %v271
  %s279 = scalar_lea.vmem %s1, 11
  %280 = vst.msk [vmem:[%s279] ss:$16 sm:$0xc0] %vm272, %v271
  %s281 = scalar_lea.vmem %s0, 8
  %v282 = vld [vmem:[%s281] sm:$0xff]
  %283 = vrot.lane.b32.xlu0 %v282, 117
  %v284 = vpop.permute.xlu0 %283
  %vm285 = vcmask 7168
  %s286 = scalar_lea.vmem %s1, 139
  %287 = vst.msk [vmem:[%s286] ss:$16 sm:$0x3] %vm285, %v284
  %s288 = scalar_lea.vmem %s1, 139
  %289 = vst.msk [vmem:[%s288] ss:$16 sm:$0xc] %vm285, %v284
  %s290 = scalar_lea.vmem %s1, 139
  %291 = vst.msk [vmem:[%s290] ss:$16 sm:$0x30] %vm285, %v284
  %s292 = scalar_lea.vmem %s1, 139
  %293 = vst.msk [vmem:[%s292] ss:$16 sm:$0xc0] %vm285, %v284
  %v294 = vld [vmem:[%s0] sm:$0xff]
  %295 = vrot.lane.b32.xlu0 %v294, 116
  %v296 = vpop.permute.xlu0 %295
  %vm297 = vcmask 7168
  %s298 = scalar_lea.vmem %s1, 12
  %299 = vst.msk [vmem:[%s298] ss:$16 sm:$0x3] %vm297, %v296
  %s300 = scalar_lea.vmem %s1, 12
  %301 = vst.msk [vmem:[%s300] ss:$16 sm:$0xc] %vm297, %v296
  %s302 = scalar_lea.vmem %s1, 12
  %303 = vst.msk [vmem:[%s302] ss:$16 sm:$0x30] %vm297, %v296
  %s304 = scalar_lea.vmem %s1, 12
  %305 = vst.msk [vmem:[%s304] ss:$16 sm:$0xc0] %vm297, %v296
  %s306 = scalar_lea.vmem %s0, 8
  %v307 = vld [vmem:[%s306] sm:$0xff]
  %308 = vrot.lane.b32.xlu0 %v307, 116
  %v309 = vpop.permute.xlu0 %308
  %vm310 = vcmask 7168
  %s311 = scalar_lea.vmem %s1, 140
  %312 = vst.msk [vmem:[%s311] ss:$16 sm:$0x3] %vm310, %v309
  %s313 = scalar_lea.vmem %s1, 140
  %314 = vst.msk [vmem:[%s313] ss:$16 sm:$0xc] %vm310, %v309
  %s315 = scalar_lea.vmem %s1, 140
  %316 = vst.msk [vmem:[%s315] ss:$16 sm:$0x30] %vm310, %v309
  %s317 = scalar_lea.vmem %s1, 140
  %318 = vst.msk [vmem:[%s317] ss:$16 sm:$0xc0] %vm310, %v309
  %v319 = vld [vmem:[%s0] sm:$0xff]
  %320 = vrot.lane.b32.xlu0 %v319, 115
  %v321 = vpop.permute.xlu0 %320
  %vm322 = vcmask 7168
  %s323 = scalar_lea.vmem %s1, 13
  %324 = vst.msk [vmem:[%s323] ss:$16 sm:$0x3] %vm322, %v321
  %s325 = scalar_lea.vmem %s1, 13
  %326 = vst.msk [vmem:[%s325] ss:$16 sm:$0xc] %vm322, %v321
  %s327 = scalar_lea.vmem %s1, 13
  %328 = vst.msk [vmem:[%s327] ss:$16 sm:$0x30] %vm322, %v321
  %s329 = scalar_lea.vmem %s1, 13
  %330 = vst.msk [vmem:[%s329] ss:$16 sm:$0xc0] %vm322, %v321
  %s331 = scalar_lea.vmem %s0, 8
  %v332 = vld [vmem:[%s331] sm:$0xff]
  %333 = vrot.lane.b32.xlu0 %v332, 115
  %v334 = vpop.permute.xlu0 %333
  %vm335 = vcmask 7168
  %s336 = scalar_lea.vmem %s1, 141
  %337 = vst.msk [vmem:[%s336] ss:$16 sm:$0x3] %vm335, %v334
  %s338 = scalar_lea.vmem %s1, 141
  %339 = vst.msk [vmem:[%s338] ss:$16 sm:$0xc] %vm335, %v334
  %s340 = scalar_lea.vmem %s1, 141
  %341 = vst.msk [vmem:[%s340] ss:$16 sm:$0x30] %vm335, %v334
  %s342 = scalar_lea.vmem %s1, 141
  %343 = vst.msk [vmem:[%s342] ss:$16 sm:$0xc0] %vm335, %v334
  %v344 = vld [vmem:[%s0] sm:$0xff]
  %345 = vrot.lane.b32.xlu0 %v344, 114
  %v346 = vpop.permute.xlu0 %345
  %vm347 = vcmask 7168
  %s348 = scalar_lea.vmem %s1, 14
  %349 = vst.msk [vmem:[%s348] ss:$16 sm:$0x3] %vm347, %v346
  %s350 = scalar_lea.vmem %s1, 14
  %351 = vst.msk [vmem:[%s350] ss:$16 sm:$0xc] %vm347, %v346
  %s352 = scalar_lea.vmem %s1, 14
  %353 = vst.msk [vmem:[%s352] ss:$16 sm:$0x30] %vm347, %v346
  %s354 = scalar_lea.vmem %s1, 14
  %355 = vst.msk [vmem:[%s354] ss:$16 sm:$0xc0] %vm347, %v346
  %s356 = scalar_lea.vmem %s0, 8
  %v357 = vld [vmem:[%s356] sm:$0xff]
  %358 = vrot.lane.b32.xlu0 %v357, 114
  %v359 = vpop.permute.xlu0 %358
  %vm360 = vcmask 7168
  %s361 = scalar_lea.vmem %s1, 142
  %362 = vst.msk [vmem:[%s361] ss:$16 sm:$0x3] %vm360, %v359
  %s363 = scalar_lea.vmem %s1, 142
  %364 = vst.msk [vmem:[%s363] ss:$16 sm:$0xc] %vm360, %v359
  %s365 = scalar_lea.vmem %s1, 142
  %366 = vst.msk [vmem:[%s365] ss:$16 sm:$0x30] %vm360, %v359
  %s367 = scalar_lea.vmem %s1, 142
  %368 = vst.msk [vmem:[%s367] ss:$16 sm:$0xc0] %vm360, %v359
  %v369 = vld [vmem:[%s0] sm:$0xff]
  %370 = vrot.lane.b32.xlu0 %v369, 113
  %v371 = vpop.permute.xlu0 %370
  %vm372 = vcmask 7168
  %s373 = scalar_lea.vmem %s1, 15
  %374 = vst.msk [vmem:[%s373] ss:$16 sm:$0x3] %vm372, %v371
  %s375 = scalar_lea.vmem %s1, 15
  %376 = vst.msk [vmem:[%s375] ss:$16 sm:$0xc] %vm372, %v371
  %s377 = scalar_lea.vmem %s1, 15
  %378 = vst.msk [vmem:[%s377] ss:$16 sm:$0x30] %vm372, %v371
  %s379 = scalar_lea.vmem %s1, 15
  %380 = vst.msk [vmem:[%s379] ss:$16 sm:$0xc0] %vm372, %v371
  %s381 = scalar_lea.vmem %s0, 8
  %v382 = vld [vmem:[%s381] sm:$0xff]
  %383 = vrot.lane.b32.xlu0 %v382, 113
  %v384 = vpop.permute.xlu0 %383
  %vm385 = vcmask 7168
  %s386 = scalar_lea.vmem %s1, 143
  %387 = vst.msk [vmem:[%s386] ss:$16 sm:$0x3] %vm385, %v384
  %s388 = scalar_lea.vmem %s1, 143
  %389 = vst.msk [vmem:[%s388] ss:$16 sm:$0xc] %vm385, %v384
  %s390 = scalar_lea.vmem %s1, 143
  %391 = vst.msk [vmem:[%s390] ss:$16 sm:$0x30] %vm385, %v384
  %s392 = scalar_lea.vmem %s1, 143
  %393 = vst.msk [vmem:[%s392] ss:$16 sm:$0xc0] %vm385, %v384

// kernel: basic_block_learn_forward.1
$region0: #{basic_block_learn_forward.1}
  #allocation0 [shape = 'u32[]', space=smem, size = 0x4, offset = 0x4, fixed_abs, tag = 'smem constant byte address 0x4 - core index']
  #allocation1 [shape = 'u32[144,128]{1,0:T(1,128)}', space=vmem, size = 0x12000, scoped, tag = 'internal scratch']
  #allocation2 [shape = 'bf16[320,128]{1,0:T(8,128)(2,1)}', space=vmem, size = 0x14000, scoped, tag = 'scratch operand']
  %s0 = inlined_call_operand.vmem [shape: bf16[2,256,36], index: 0, kind: input, shape index: {}]
  %s1 = inlined_call_operand.vmem [shape: bf16[36,128], index: 1, kind: input, shape index: {}]
  %s2 = inlined_call_operand.vmem [shape: f32[1,128], index: 2, kind: input, shape index: {}]
  %s3 = inlined_call_operand.vmem [shape: bf16[4,128], index: 3, kind: input, shape index: {}]
  %s4 = inlined_call_operand.vmem [shape: f32[1,128], index: 4, kind: input, shape index: {}]
  %s5 = inlined_call_operand.vmem [shape: bf16[9,128,128], index: 5, kind: input, shape index: {}]
  %s6 = inlined_call_operand.vmem [shape: f32[1,128], index: 6, kind: input, shape index: {}]
  %s7 = inlined_call_operand.vmem [shape: s32[256,1], index: 7, kind: input, shape index: {}]
  %s8 = inlined_call_operand.vmem [shape: f32[2,8,256], index: 8, kind: output, shape index: {}]
  %s9 = sld [smem:[#allocation0]]
  $region65: #{basic_block_learn_forward.1} parent=0
    _
  %s11 = ssub.s32 1, %s9
  %s12 = scalar_select 0, %s11, %s9
  loop: start=0, step=1, limit=4
  $region2: #{basic_block_learn_forward.1} parent=0 // loop_pre_header
    _
  $region3: #{basic_block_learn_forward.1} parent=0 // loop_header
    %s14 = sphi 0, %s18
    %p15 = scmp.ge.s32.totalorder %s14, 4
    %s24 = sphi 0, %s26
    %s27 = sphi 0, %s24
    %s28 = sphi 0, %s27
    %s44 = sphi 0, %s28
    %s48 = sphi 0, %s48
    %s50 = sphi 0, %s48
    %s51 = sphi 0, %s50
    %s65 = sphi 0, %s51
    %s69 = sphi 0, %s69
    %s71 = sphi 0, %s69
    %s72 = sphi 0, %s71
    %s86 = sphi 0, %s72
    %s90 = sphi 0, %s90
    %s92 = sphi 0, %s90
    %s93 = sphi 0, %s92
    %s107 = sphi 0, %s93
    %s111 = sphi 0, %s111
    %s113 = sphi 0, %s111
    %s114 = sphi 0, %s113
    %s128 = sphi 0, %s114
    %s132 = sphi 0, %s132
    %s134 = sphi 0, %s132
    %s135 = sphi 0, %s134
    %s149 = sphi 0, %s135
    %s153 = sphi 0, %s153
    %s155 = sphi 0, %s153
    %s156 = sphi 0, %s155
    %s170 = sphi 0, %s156
    %s174 = sphi 0, %s174
    %s176 = sphi 0, %s174
    %s177 = sphi 0, %s176
    %s191 = sphi 0, %s177
    %s197 = sphi 0, %s199
    %s200 = sphi 0, %s197
    %s201 = sphi 0, %s200
    %s217 = sphi 0, %s201
  $region4: #{basic_block_learn_forward.1} parent=0 // loop_header_branch
    %17 = sbr.rel (%p15) target = $region8
  $region5: #{basic_block_learn_forward.1} parent=0 // loop_body
    %s19 = ssub.s32 %s14, 1
    %s20 = ssub.s32 %s14, 2
    %s21 = sadd.s32 %s14, 1
    %s22 = ssub.s32 %s14, %s21
    %p23 = scmp.eq.s32.totalorder %s22, 0
    %s25 = sadd.s32 %s24, 1
    %s26 = scalar_select %p23, %s24, %s25
    %p29 = pneg %p23
    %p30 = scmp.eq.s32.totalorder %s14, 1
    %p31 = por %p29, %p30
    %p32 = scmp.ne.s32.totalorder %s24, %s27
    %p33 = scmp.eq.s32.totalorder %s14, 0
    %p34 = por %p32, %p33
    %p35 = scmp.ne.s32.totalorder %s24, %s27
    %p36 = scmp.eq.s32.totalorder %s19, 1
    %p37 = por %p35, %p36
    %p38 = scmp.ne.s32.totalorder %s27, %s28
    %p39 = scmp.eq.s32.totalorder %s19, 0
    %p40 = por %p38, %p39
    %p41 = scmp.ne.s32.totalorder %s27, %s28
    %p42 = scmp.eq.s32.totalorder %s20, 1
    %p43 = por %p41, %p42
    %p45 = scmp.ne.s32.totalorder %s28, %s44
    %p46 = scmp.eq.s32.totalorder %s20, 0
    %p47 = por %p45, %p46
    %s49 = sadd.s32 %s48, 1
    %p52 = scmp.eq.s32.totalorder %s14, 1
    %p53 = scmp.ne.s32.totalorder %s48, %s50
    %p54 = scmp.eq.s32.totalorder %s14, 0
    %p55 = por %p53, %p54
    %p56 = scmp.ne.s32.totalorder %s48, %s50
    %p57 = scmp.eq.s32.totalorder %s19, 1
    %p58 = por %p56, %p57
    %p59 = scmp.ne.s32.totalorder %s50, %s51
    %p60 = scmp.eq.s32.totalorder %s19, 0
    %p61 = por %p59, %p60
    %p62 = scmp.ne.s32.totalorder %s50, %s51
    %p63 = scmp.eq.s32.totalorder %s20, 1
    %p64 = por %p62, %p63
    %p66 = scmp.ne.s32.totalorder %s51, %s65
    %p67 = scmp.eq.s32.totalorder %s20, 0
    %p68 = por %p66, %p67
    %s70 = sadd.s32 %s69, 1
    %p73 = scmp.eq.s32.totalorder %s14, 1
    %p74 = scmp.ne.s32.totalorder %s69, %s71
    %p75 = scmp.eq.s32.totalorder %s14, 0
    %p76 = por %p74, %p75
    %p77 = scmp.ne.s32.totalorder %s69, %s71
    %p78 = scmp.eq.s32.totalorder %s19, 1
    %p79 = por %p77, %p78
    %p80 = scmp.ne.s32.totalorder %s71, %s72
    %p81 = scmp.eq.s32.totalorder %s19, 0
    %p82 = por %p80, %p81
    %p83 = scmp.ne.s32.totalorder %s71, %s72
    %p84 = scmp.eq.s32.totalorder %s20, 1
    %p85 = por %p83, %p84
    %p87 = scmp.ne.s32.totalorder %s72, %s86
    %p88 = scmp.eq.s32.totalorder %s20, 0
    %p89 = por %p87, %p88
    %s91 = sadd.s32 %s90, 1
    %p94 = scmp.eq.s32.totalorder %s14, 1
    %p95 = scmp.ne.s32.totalorder %s90, %s92
    %p96 = scmp.eq.s32.totalorder %s14, 0
    %p97 = por %p95, %p96
    %p98 = scmp.ne.s32.totalorder %s90, %s92
    %p99 = scmp.eq.s32.totalorder %s19, 1
    %p100 = por %p98, %p99
    %p101 = scmp.ne.s32.totalorder %s92, %s93
    %p102 = scmp.eq.s32.totalorder %s19, 0
    %p103 = por %p101, %p102
    %p104 = scmp.ne.s32.totalorder %s92, %s93
    %p105 = scmp.eq.s32.totalorder %s20, 1
    %p106 = por %p104, %p105
    %p108 = scmp.ne.s32.totalorder %s93, %s107
    %p109 = scmp.eq.s32.totalorder %s20, 0
    %p110 = por %p108, %p109
    %s112 = sadd.s32 %s111, 1
    %p115 = scmp.eq.s32.totalorder %s14, 1
    %p116 = scmp.ne.s32.totalorder %s111, %s113
    %p117 = scmp.eq.s32.totalorder %s14, 0
    %p118 = por %p116, %p117
    %p119 = scmp.ne.s32.totalorder %s111, %s113
    %p120 = scmp.eq.s32.totalorder %s19, 1
    %p121 = por %p119, %p120
    %p122 = scmp.ne.s32.totalorder %s113, %s114
    %p123 = scmp.eq.s32.totalorder %s19, 0
    %p124 = por %p122, %p123
    %p125 = scmp.ne.s32.totalorder %s113, %s114
    %p126 = scmp.eq.s32.totalorder %s20, 1
    %p127 = por %p125, %p126
    %p129 = scmp.ne.s32.totalorder %s114, %s128
    %p130 = scmp.eq.s32.totalorder %s20, 0
    %p131 = por %p129, %p130
    %s133 = sadd.s32 %s132, 1
    %p136 = scmp.eq.s32.totalorder %s14, 1
    %p137 = scmp.ne.s32.totalorder %s132, %s134
    %p138 = scmp.eq.s32.totalorder %s14, 0
    %p139 = por %p137, %p138
    %p140 = scmp.ne.s32.totalorder %s132, %s134
    %p141 = scmp.eq.s32.totalorder %s19, 1
    %p142 = por %p140, %p141
    %p143 = scmp.ne.s32.totalorder %s134, %s135
    %p144 = scmp.eq.s32.totalorder %s19, 0
    %p145 = por %p143, %p144
    %p146 = scmp.ne.s32.totalorder %s134, %s135
    %p147 = scmp.eq.s32.totalorder %s20, 1
    %p148 = por %p146, %p147
    %p150 = scmp.ne.s32.totalorder %s135, %s149
    %p151 = scmp.eq.s32.totalorder %s20, 0
    %p152 = por %p150, %p151
    %s154 = sadd.s32 %s153, 1
    %p157 = scmp.eq.s32.totalorder %s14, 1
    %p158 = scmp.ne.s32.totalorder %s153, %s155
    %p159 = scmp.eq.s32.totalorder %s14, 0
    %p160 = por %p158, %p159
    %p161 = scmp.ne.s32.totalorder %s153, %s155
    %p162 = scmp.eq.s32.totalorder %s19, 1
    %p163 = por %p161, %p162
    %p164 = scmp.ne.s32.totalorder %s155, %s156
    %p165 = scmp.eq.s32.totalorder %s19, 0
    %p166 = por %p164, %p165
    %p167 = scmp.ne.s32.totalorder %s155, %s156
    %p168 = scmp.eq.s32.totalorder %s20, 1
    %p169 = por %p167, %p168
    %p171 = scmp.ne.s32.totalorder %s156, %s170
    %p172 = scmp.eq.s32.totalorder %s20, 0
    %p173 = por %p171, %p172
    %s175 = sadd.s32 %s174, 1
    %p178 = scmp.eq.s32.totalorder %s14, 1
    %p179 = scmp.ne.s32.totalorder %s174, %s176
    %p180 = scmp.eq.s32.totalorder %s14, 0
    %p181 = por %p179, %p180
    %p182 = scmp.ne.s32.totalorder %s174, %s176
    %p183 = scmp.eq.s32.totalorder %s19, 1
    %p184 = por %p182, %p183
    %p185 = scmp.ne.s32.totalorder %s176, %s177
    %p186 = scmp.eq.s32.totalorder %s19, 0
    %p187 = por %p185, %p186
    %p188 = scmp.ne.s32.totalorder %s176, %s177
    %p189 = scmp.eq.s32.totalorder %s20, 1
    %p190 = por %p188, %p189
    %p192 = scmp.ne.s32.totalorder %s177, %s191
    %p193 = scmp.eq.s32.totalorder %s20, 0
    %p194 = por %p192, %p193
    %s195 = ssub.s32 %s14, %s21
    %p196 = scmp.eq.s32.totalorder %s195, 0
    %s198 = sadd.s32 %s197, 1
    %s199 = scalar_select %p196, %s197, %s198
    %p202 = pneg %p196
    %p203 = scmp.eq.s32.totalorder %s14, 1
    %p204 = por %p202, %p203
    %p205 = scmp.ne.s32.totalorder %s197, %s200
    %p206 = scmp.eq.s32.totalorder %s14, 0
    %p207 = por %p205, %p206
    %p208 = scmp.ne.s32.totalorder %s197, %s200
    %p209 = scmp.eq.s32.totalorder %s19, 1
    %p210 = por %p208, %p209
    %p211 = scmp.ne.s32.totalorder %s200, %s201
    %p212 = scmp.eq.s32.totalorder %s19, 0
    %p213 = por %p211, %p212
    %p214 = scmp.ne.s32.totalorder %s200, %s201
    %p215 = scmp.eq.s32.totalorder %s20, 1
    %p216 = por %p214, %p215
    %p218 = scmp.ne.s32.totalorder %s201, %s217
    %p219 = scmp.eq.s32.totalorder %s20, 0
    %p220 = por %p218, %p219
    %p221 = scmp.le.s32.totalorder 1, %s14
    %p222 = scmp.lt.s32.totalorder %s14, 3
    %p223 = pnand %p221, %p222
    %p224 = pneg %p223
    // Predicated region
    $region9: #{basic_block_learn_forward.1} parent=5 // pred_check
      _
    $region10: #{basic_block_learn_forward.1} parent=5 // pred_check_branch
      %226 = sbr.rel (%p223) target = $region12
    $region11: #{basic_block_learn_forward.1} parent=5 // pred_region
      %s227 = ssub.s32 %s14, 1
      // Predicated region
      $region13: #{basic_block_learn_forward.1} parent=11 // pred_check
        %p228 = pneg %p61
      $region14: #{basic_block_learn_forward.1} parent=11 // pred_check_branch
        %230 = sbr.rel (%p228) target = $region16
      $region15: #{basic_block_learn_forward.1} parent=11 // pred_region
        _
      $region16: #{basic_block_learn_forward.1} parent=11 // pred_fallthru
        _
      // Predicated region
      $region17: #{basic_block_learn_forward.1} parent=11 // pred_check
        %p231 = pneg %p82
      $region18: #{basic_block_learn_forward.1} parent=11 // pred_check_branch
        %233 = sbr.rel (%p231) target = $region20
      $region19: #{basic_block_learn_forward.1} parent=11 // pred_region
        _
      $region20: #{basic_block_learn_forward.1} parent=11 // pred_fallthru
        _
      // Predicated region
      $region21: #{basic_block_learn_forward.1} parent=11 // pred_check
        %p234 = pneg %p103
      $region22: #{basic_block_learn_forward.1} parent=11 // pred_check_branch
        %236 = sbr.rel (%p234) target = $region24
      $region23: #{basic_block_learn_forward.1} parent=11 // pred_region
        _
      $region24: #{basic_block_learn_forward.1} parent=11 // pred_fallthru
        _
      // Predicated region
      $region25: #{basic_block_learn_forward.1} parent=11 // pred_check
        %p237 = pneg %p124
      $region26: #{basic_block_learn_forward.1} parent=11 // pred_check_branch
        %239 = sbr.rel (%p237) target = $region28
      $region27: #{basic_block_learn_forward.1} parent=11 // pred_region
        _
      $region28: #{basic_block_learn_forward.1} parent=11 // pred_fallthru
        _
      // Predicated region
      $region29: #{basic_block_learn_forward.1} parent=11 // pred_check
        %p240 = pneg %p145
      $region30: #{basic_block_learn_forward.1} parent=11 // pred_check_branch
        %242 = sbr.rel (%p240) target = $region32
      $region31: #{basic_block_learn_forward.1} parent=11 // pred_region
        _
      $region32: #{basic_block_learn_forward.1} parent=11 // pred_fallthru
        _
      // Predicated region
      $region33: #{basic_block_learn_forward.1} parent=11 // pred_check
        %p243 = pneg %p166
      $region34: #{basic_block_learn_forward.1} parent=11 // pred_check_branch
        %245 = sbr.rel (%p243) target = $region36
      $region35: #{basic_block_learn_forward.1} parent=11 // pred_region
        _
      $region36: #{basic_block_learn_forward.1} parent=11 // pred_fallthru
        _
      // Predicated region
      $region37: #{basic_block_learn_forward.1} parent=11 // pred_check
        %p246 = pneg %p187
      $region38: #{basic_block_learn_forward.1} parent=11 // pred_check_branch
        %248 = sbr.rel (%p246) target = $region40
      $region39: #{basic_block_learn_forward.1} parent=11 // pred_region
        _
      $region40: #{basic_block_learn_forward.1} parent=11 // pred_fallthru
        _
    $region12: #{basic_block_learn_forward.1} parent=5 // pred_fallthru
      _
    %p249 = scmp.lt.s32.totalorder %s14, 2
    // Predicated region
    $region41: #{basic_block_learn_forward.1} parent=5 // pred_check
      %p250 = pneg %p249
    $region42: #{basic_block_learn_forward.1} parent=5 // pred_check_branch
      %252 = sbr.rel (%p250) target = $region44
    $region43: #{basic_block_learn_forward.1} parent=5 // pred_region
      // Predicated region
      $region45: #{basic_block_learn_forward.1} parent=43 // pred_check
        %p253 = pneg %p34
      $region46: #{basic_block_learn_forward.1} parent=43 // pred_check_branch
        %255 = sbr.rel (%p253) target = $region48
      $region47: #{basic_block_learn_forward.1} parent=43 // pred_region
        %p256 = scmp.lt.s32.totalorder %s14, 1
        %s257 = scalar_select %p256, %s14, 1
        %s258 = smul.addr %s257, 32
        %s259 = smul.addr %s258, 4
        %s260 = scalar_lea.vmem %s0, %s259
      $region48: #{basic_block_learn_forward.1} parent=43 // pred_fallthru
        _
    $region44: #{basic_block_learn_forward.1} parent=5 // pred_fallthru
      _
    %p261 = scmp.le.s32.totalorder 1, %s14
    %p262 = scmp.lt.s32.totalorder %s14, 3
    %p263 = pnand %p261, %p262
    %p264 = pneg %p263
    // Predicated region
    $region49: #{basic_block_learn_forward.1} parent=5 // pred_check
      _
    $region50: #{basic_block_learn_forward.1} parent=5 // pred_check_branch
      %266 = sbr.rel (%p263) target = $region52
    $region51: #{basic_block_learn_forward.1} parent=5 // pred_region
      %s267 = ssub.s32 %s14, 1
      %p268 = scmp.lt.s32.totalorder %s19, 1
      %s269 = scalar_select %p268, %s19, 1
      %s270 = smul.addr %s269, 32
      %s271 = smul.addr %s270, 4
      %s272 = scalar_lea.vmem %s0, %s271
      %p273 = pneg %p40
      %p274 = pneg %p37
      %p275 = pneg %p61
      %p276 = pneg %p58
      %p277 = pneg %p82
      %p278 = pneg %p79
      %p279 = pneg %p103
      %p280 = pneg %p100
      %p281 = pneg %p124
      %p282 = pneg %p121
      %p283 = pneg %p145
      %p284 = pneg %p142
      %p285 = pneg %p166
      %p286 = pneg %p163
      %p287 = pneg %p187
      %p288 = pneg %p184
      %p289 = pneg %p213
      %p290 = pneg %p210
      %p291 = scmp.lt.s32.totalorder %s19, 1
      %s292 = scalar_select %p291, %s19, 1
      %s293 = smul.addr %s292, 2
      %s294 = smul.addr %s293, 8
      %s295 = scalar_lea.vmem %s8, %s294
      %p296 = scmp.lt.s32.totalorder %s19, 1
      %s297 = scalar_select %p296, %s19, 1
      %s298 = smul.addr %s297, 32
      %s299 = smul.addr %s298, 4
      %s300 = scalar_lea.vmem %s0, %s299
      %p301 = scmp.lt.s32.totalorder %s19, 1
      %s302 = scalar_select %p301, %s19, 1
      %s303 = smul.addr %s302, 2
      %s304 = smul.addr %s303, 8
      %s305 = scalar_lea.vmem %s8, %s304
      %v307 = vld [vmem:[%s300] sm:$0xf]
      %v308 = vld [vmem:[%s300 + $0x4] sm:$0xf]
      %v309 = vld [vmem:[%s300 + $0x8] sm:$0xf]
      %v310 = vld [vmem:[%s300 + $0xc] sm:$0xf]
      %v311 = vld [vmem:[%s300 + $0x10] sm:$0xf]
      %v312 = vld [vmem:[%s300 + $0x14] sm:$0xf]
      %v313 = vld [vmem:[%s300 + $0x18] sm:$0xf]
      %v314 = vld [vmem:[%s300 + $0x1c] sm:$0xf]
      %v315 = vld [vmem:[%s300 + $0x20] sm:$0xf]
      %v316 = vld [vmem:[%s300 + $0x24] sm:$0xf]
      %v317 = vld [vmem:[%s300 + $0x28] sm:$0xf]
      %v318 = vld [vmem:[%s300 + $0x2c] sm:$0xf]
      %v319 = vld [vmem:[%s300 + $0x30] sm:$0xf]
      %v320 = vld [vmem:[%s300 + $0x34] sm:$0xf]
      %v321 = vld [vmem:[%s300 + $0x38] sm:$0xf]
      %v322 = vld [vmem:[%s300 + $0x3c] sm:$0xf]
      %v323 = vld [vmem:[%s300 + $0x40] sm:$0xf]
      %v324 = vld [vmem:[%s300 + $0x44] sm:$0xf]
      %v325 = vld [vmem:[%s300 + $0x48] sm:$0xf]
      %v326 = vld [vmem:[%s300 + $0x4c] sm:$0xf]
      %v327 = vld [vmem:[%s300 + $0x50] sm:$0xf]
      %v328 = vld [vmem:[%s300 + $0x54] sm:$0xf]
      %v329 = vld [vmem:[%s300 + $0x58] sm:$0xf]
      %v330 = vld [vmem:[%s300 + $0x5c] sm:$0xf]
      %v331 = vld [vmem:[%s300 + $0x60] sm:$0xf]
      %v332 = vld [vmem:[%s300 + $0x64] sm:$0xf]
      %v333 = vld [vmem:[%s300 + $0x68] sm:$0xf]
      %v334 = vld [vmem:[%s300 + $0x6c] sm:$0xf]
      %v335 = vld [vmem:[%s300 + $0x70] sm:$0xf]
      %v336 = vld [vmem:[%s300 + $0x74] sm:$0xf]
      %v337 = vld [vmem:[%s300 + $0x78] sm:$0xf]
      %v338 = vld [vmem:[%s300 + $0x7c] sm:$0xf]
      %v339 = vld [vmem:[%s1] sm:$0xf]
      %v340 = vld [vmem:[%s1 + $0x4] sm:$0xf]
      %v341 = vld [vmem:[%s1 + $0x8] sm:$0xf]
      %v342 = vld [vmem:[%s1 + $0xc] sm:$0xf]
      %v343 = vld [vmem:[%s1 + $0x10] sm:$0x3]
      %v344 = vld [vmem:[%s2] sm:$0x1]
      %v346 = vlaneseq
      %v347 = vshrl.u32 %v346, 7
      %v348 = vsub.s32 0, %v347
      %v349 = vrot.slane %v344, %v348
      %v383 = vunpack.c.l.b16 %v307
      %v384 = vunpack.c.l.b16 %v308
      %v385 = vunpack.c.l.b16 %v309
      %v386 = vunpack.c.l.b16 %v310
      %v387 = vunpack.c.l.b16 %v311
      %v388 = vunpack.c.l.b16 %v312
      %v389 = vunpack.c.l.b16 %v313
      %v390 = vunpack.c.l.b16 %v314
      %v391 = vunpack.c.l.b16 %v315
      %v392 = vunpack.c.l.b16 %v316
      %v393 = vunpack.c.l.b16 %v317
      %v394 = vunpack.c.l.b16 %v318
      %v395 = vunpack.c.l.b16 %v319
      %v396 = vunpack.c.l.b16 %v320
      %v397 = vunpack.c.l.b16 %v321
      %v398 = vunpack.c.l.b16 %v322
      %v399 = vunpack.c.l.b16 %v323
      %v400 = vunpack.c.l.b16 %v324
      %v401 = vunpack.c.l.b16 %v325
      %v402 = vunpack.c.l.b16 %v326
      %v403 = vunpack.c.l.b16 %v327
      %v404 = vunpack.c.l.b16 %v328
      %v405 = vunpack.c.l.b16 %v329
      %v406 = vunpack.c.l.b16 %v330
      %v407 = vunpack.c.l.b16 %v331
      %v408 = vunpack.c.l.b16 %v332
      %v409 = vunpack.c.l.b16 %v333
      %v410 = vunpack.c.l.b16 %v334
      %v411 = vunpack.c.l.b16 %v335
      %v412 = vunpack.c.l.b16 %v336
      %v413 = vunpack.c.l.b16 %v337
      %v414 = vunpack.c.l.b16 %v338
      %v415 = vpack.c.b16 %v384, %v383
      %v416 = vpack.c.b16 %v386, %v385
      %v417 = vpack.c.b16 %v388, %v387
      %v418 = vpack.c.b16 %v390, %v389
      %v419 = vpack.c.b16 %v392, %v391
      %v420 = vpack.c.b16 %v394, %v393
      %v421 = vpack.c.b16 %v396, %v395
      %v422 = vpack.c.b16 %v398, %v397
      %v423 = vpack.c.b16 %v400, %v399
      %v424 = vpack.c.b16 %v402, %v401
      %v425 = vpack.c.b16 %v404, %v403
      %v426 = vpack.c.b16 %v406, %v405
      %v427 = vpack.c.b16 %v408, %v407
      %v428 = vpack.c.b16 %v410, %v409
      %v429 = vpack.c.b16 %v412, %v411
      %v430 = vpack.c.b16 %v414, %v413
      %v436 = vunpack.c.l.b16 %v339
      %v437 = vunpack.c.l.b16 %v340
      %v438 = vunpack.c.l.b16 %v341
      %v439 = vunpack.c.l.b16 %v342
      %v440 = vunpack.c.l.b16 %v343
      %v441 = vpack.c.b16 %v437, %v436
      %v442 = vpack.c.b16 %v439, %v438
      %v443 = vpack.c.b16 %v440, %v440
      %vm446 = vcmask 293888
      %v448 = vsel %vm446, %v415, 0
      %v451 = vsel %vm446, %v416, 0
      %v454 = vsel %vm446, %v417, 0
      %v457 = vsel %vm446, %v418, 0
      %v460 = vsel %vm446, %v419, 0
      %v463 = vsel %vm446, %v420, 0
      %v466 = vsel %vm446, %v421, 0
      %v469 = vsel %vm446, %v422, 0
      %v472 = vsel %vm446, %v423, 0
      %v475 = vsel %vm446, %v424, 0
      %v478 = vsel %vm446, %v425, 0
      %v481 = vsel %vm446, %v426, 0
      %v484 = vsel %vm446, %v427, 0
      %v487 = vsel %vm446, %v428, 0
      %v490 = vsel %vm446, %v429, 0
      %v493 = vsel %vm446, %v430, 0
      %vm495 = vcmask 1041408
      %v497 = vsel %vm495, %v443, 0
      %499 = vmatprep.subr.bf16.mxu0 0
      %500 = vmatpush1.bf16.msra.mxu0 0
      %501 = vmatprep.subr.bf16.mxu0 0
      %502 = vmatpush1.bf16.msra.mxu0 0
      %503 = vmatprep.subr.bf16.mxu0 0
      %504 = vmatpush1.bf16.msra.mxu0 0
      %505 = vmatprep.subr.bf16.mxu0 0
      %506 = vmatpush1.bf16.msra.mxu0 0
      %507 = vmatprep.subr.bf16.mxu0 0
      %508 = vmatpush1.bf16.msra.mxu0 0
      %509 = vmatprep.subr.bf16.mxu0 0
      %510 = vmatpush1.bf16.msra.mxu0 %v497
      %511 = vmatprep.subr.bf16.mxu0 0
      %512 = vmatpush1.bf16.msra.mxu0 %v442
      %513 = vmatprep.subr.bf16.mxu0 0
      %514 = vmatpush1.bf16.msra.mxu0 %v441
      %515 = vmatprep.subr.bf16.mxu0 0
      %516 = vmatpush2.bf16.msra.mxu0 0
      %517 = vmatprep.subr.bf16.mxu0 0
      %518 = vmatpush2.bf16.msra.mxu0 0
      %519 = vmatprep.subr.bf16.mxu0 0
      %520 = vmatpush2.bf16.msra.mxu0 0
      %521 = vmatprep.subr.bf16.mxu0 0
      %522 = vmatpush2.bf16.msra.mxu0 0
      %523 = vmatprep.subr.bf16.mxu0 0
      %524 = vmatpush2.bf16.msra.mxu0 0
      %525 = vmatprep.subr.bf16.mxu0 0
      %526 = vmatpush2.bf16.msra.mxu0 0
      %527 = vmatprep.subr.bf16.mxu0 0
      %528 = vmatpush2.bf16.msra.mxu0 0
      %529 = vmatprep.subr.bf16.mxu0 0
      %530 = vmatpush2.bf16.msra.mxu0 0
      %531 = vmatprep.mubr.bf16.mxu0 0
      %532 = vmatmul.mubr.bf16.gmra.mxu0 %v448
      %v533 = vpop.f32.mrf.mxu0
      %v534 = vadd.f32 %v349, %v533
      %v535 = vpop.f32.mrf.mxu0
      %v536 = vpop.f32.mrf.mxu0
      %v537 = vadd.f32 %v349, %v536
      %v538 = vpop.f32.mrf.mxu0
      %539 = vmatprep.mubr.bf16.mxu0 0
      %540 = vmatmul.mubr.bf16.gmra.mxu0 %v451
      %v541 = vpop.f32.mrf.mxu0
      %v542 = vadd.f32 %v349, %v541
      %v543 = vpop.f32.mrf.mxu0
      %v544 = vpop.f32.mrf.mxu0
      %v545 = vadd.f32 %v349, %v544
      %v546 = vpop.f32.mrf.mxu0
      %547 = vmatprep.mubr.bf16.mxu0 0
      %548 = vmatmul.mubr.bf16.gmra.mxu0 %v454
      %v549 = vpop.f32.mrf.mxu0
      %v550 = vadd.f32 %v349, %v549
      %v551 = vpop.f32.mrf.mxu0
      %v552 = vpop.f32.mrf.mxu0
      %v553 = vadd.f32 %v349, %v552
      %v554 = vpop.f32.mrf.mxu0
      %555 = vmatprep.mubr.bf16.mxu0 0
      %556 = vmatmul.mubr.bf16.gmra.mxu0 %v457
      %v557 = vpop.f32.mrf.mxu0
      %v558 = vadd.f32 %v349, %v557
      %v559 = vpop.f32.mrf.mxu0
      %v560 = vpop.f32.mrf.mxu0
      %v561 = vadd.f32 %v349, %v560
      %v562 = vpop.f32.mrf.mxu0
      %563 = vmatprep.mubr.bf16.mxu0 0
      %564 = vmatmul.mubr.bf16.gmra.mxu0 %v460
      %v565 = vpop.f32.mrf.mxu0
      %v566 = vadd.f32 %v349, %v565
      %v567 = vpop.f32.mrf.mxu0
      %v568 = vpop.f32.mrf.mxu0
      %v569 = vadd.f32 %v349, %v568
      %v570 = vpop.f32.mrf.mxu0
      %571 = vmatprep.mubr.bf16.mxu0 0
      %572 = vmatmul.mubr.bf16.gmra.mxu0 %v463
      %v573 = vpop.f32.mrf.mxu0
      %v574 = vadd.f32 %v349, %v573
      %v575 = vpop.f32.mrf.mxu0
      %v576 = vpop.f32.mrf.mxu0
      %v577 = vadd.f32 %v349, %v576
      %v578 = vpop.f32.mrf.mxu0
      %579 = vmatprep.mubr.bf16.mxu0 0
      %580 = vmatmul.mubr.bf16.gmra.mxu0 %v466
      %v581 = vpop.f32.mrf.mxu0
      %v582 = vadd.f32 %v349, %v581
      %v583 = vpop.f32.mrf.mxu0
      %v584 = vpop.f32.mrf.mxu0
      %v585 = vadd.f32 %v349, %v584
      %v586 = vpop.f32.mrf.mxu0
      %587 = vmatprep.mubr.bf16.mxu0 0
      %588 = vmatmul.mubr.bf16.gmra.mxu0 %v469
      %v589 = vpop.f32.mrf.mxu0
      %v590 = vadd.f32 %v349, %v589
      %v591 = vpop.f32.mrf.mxu0
      %v592 = vpop.f32.mrf.mxu0
      %v593 = vadd.f32 %v349, %v592
      %v594 = vpop.f32.mrf.mxu0
      %595 = vmatprep.mubr.bf16.mxu0 0
      %596 = vmatmul.mubr.bf16.gmra.mxu0 %v472
      %v597 = vpop.f32.mrf.mxu0
      %v598 = vadd.f32 %v349, %v597
      %v599 = vpop.f32.mrf.mxu0
      %v600 = vpop.f32.mrf.mxu0
      %v601 = vadd.f32 %v349, %v600
      %v602 = vpop.f32.mrf.mxu0
      %603 = vmatprep.mubr.bf16.mxu0 0
      %604 = vmatmul.mubr.bf16.gmra.mxu0 %v475
      %v605 = vpop.f32.mrf.mxu0
      %v606 = vadd.f32 %v349, %v605
      %v607 = vpop.f32.mrf.mxu0
      %v608 = vpop.f32.mrf.mxu0
      %v609 = vadd.f32 %v349, %v608
      %v610 = vpop.f32.mrf.mxu0
      %611 = vmatprep.mubr.bf16.mxu0 0
      %612 = vmatmul.mubr.bf16.gmra.mxu0 %v478
      %v613 = vpop.f32.mrf.mxu0
      %v614 = vadd.f32 %v349, %v613
      %v615 = vpop.f32.mrf.mxu0
      %v616 = vpop.f32.mrf.mxu0
      %v617 = vadd.f32 %v349, %v616
      %v618 = vpop.f32.mrf.mxu0
      %619 = vmatprep.mubr.bf16.mxu0 0
      %620 = vmatmul.mubr.bf16.gmra.mxu0 %v481
      %v621 = vpop.f32.mrf.mxu0
      %v622 = vadd.f32 %v349, %v621
      %v623 = vpop.f32.mrf.mxu0
      %v624 = vpop.f32.mrf.mxu0
      %v625 = vadd.f32 %v349, %v624
      %v626 = vpop.f32.mrf.mxu0
      %627 = vmatprep.mubr.bf16.mxu0 0
      %628 = vmatmul.mubr.bf16.gmra.mxu0 %v484
      %v629 = vpop.f32.mrf.mxu0
      %v630 = vadd.f32 %v349, %v629
      %v631 = vpop.f32.mrf.mxu0
      %v632 = vpop.f32.mrf.mxu0
      %v633 = vadd.f32 %v349, %v632
      %v634 = vpop.f32.mrf.mxu0
      %635 = vmatprep.mubr.bf16.mxu0 0
      %636 = vmatmul.mubr.bf16.gmra.mxu0 %v487
      %v637 = vpop.f32.mrf.mxu0
      %v638 = vadd.f32 %v349, %v637
      %v639 = vpop.f32.mrf.mxu0
      %v640 = vpop.f32.mrf.mxu0
      %v641 = vadd.f32 %v349, %v640
      %v642 = vpop.f32.mrf.mxu0
      %643 = vmatprep.mubr.bf16.mxu0 0
      %644 = vmatmul.mubr.bf16.gmra.mxu0 %v490
      %v645 = vpop.f32.mrf.mxu0
      %v646 = vadd.f32 %v349, %v645
      %v647 = vpop.f32.mrf.mxu0
      %v648 = vpop.f32.mrf.mxu0
      %v649 = vadd.f32 %v349, %v648
      %v650 = vpop.f32.mrf.mxu0
      %651 = vmatprep.mubr.bf16.mxu0 0
      %652 = vmatmul.mubr.bf16.gmra.mxu0 %v493
      %v653 = vpop.f32.mrf.mxu0
      %v654 = vadd.f32 %v349, %v653
      %v655 = vpop.f32.mrf.mxu0
      %v656 = vpop.f32.mrf.mxu0
      %v657 = vadd.f32 %v349, %v656
      %v658 = vpop.f32.mrf.mxu0
      %659 = vdwg.mxu0
      %v660 = vmax.f32 %v534, 0.0
      %v661 = vmax.f32 %v537, 0.0
      %v662 = vmax.f32 %v542, 0.0
      %v663 = vmax.f32 %v545, 0.0
      %v664 = vmax.f32 %v550, 0.0
      %v665 = vmax.f32 %v553, 0.0
      %v666 = vmax.f32 %v558, 0.0
      %v667 = vmax.f32 %v561, 0.0
      %v668 = vmax.f32 %v566, 0.0
      %v669 = vmax.f32 %v569, 0.0
      %v670 = vmax.f32 %v574, 0.0
      %v671 = vmax.f32 %v577, 0.0
      %v672 = vmax.f32 %v582, 0.0
      %v673 = vmax.f32 %v585, 0.0
      %v674 = vmax.f32 %v590, 0.0
      %v675 = vmax.f32 %v593, 0.0
      %v676 = vmax.f32 %v598, 0.0
      %v677 = vmax.f32 %v601, 0.0
      %v678 = vmax.f32 %v606, 0.0
      %v679 = vmax.f32 %v609, 0.0
      %v680 = vmax.f32 %v614, 0.0
      %v681 = vmax.f32 %v617, 0.0
      %v682 = vmax.f32 %v622, 0.0
      %v683 = vmax.f32 %v625, 0.0
      %v684 = vmax.f32 %v630, 0.0
      %v685 = vmax.f32 %v633, 0.0
      %v686 = vmax.f32 %v638, 0.0
      %v687 = vmax.f32 %v641, 0.0
      %v688 = vmax.f32 %v646, 0.0
      %v689 = vmax.f32 %v649, 0.0
      %v690 = vmax.f32 %v654, 0.0
      %v691 = vmax.f32 %v657, 0.0
      %v692 = vld [vmem:[%s3] sm:$0x3]
      %v693 = vld [vmem:[%s4] sm:$0x1]
      %v695 = vlaneseq
      %v696 = vshrl.u32 %v695, 7
      %v697 = vsub.s32 0, %v696
      %v698 = vrot.slane %v693, %v697
      %700 = vrot.lane.b32.xlu0 %v415, 112
      %v701 = vpop.permute.xlu0 %700
      %702 = vrot.lane.b32.xlu0 %v416, 112
      %v703 = vpop.permute.xlu0 %702
      %704 = vrot.lane.b32.xlu0 %v417, 112
      %v705 = vpop.permute.xlu0 %704
      %706 = vrot.lane.b32.xlu0 %v418, 112
      %v707 = vpop.permute.xlu0 %706
      %708 = vrot.lane.b32.xlu0 %v419, 112
      %v709 = vpop.permute.xlu0 %708
      %710 = vrot.lane.b32.xlu0 %v420, 112
      %v711 = vpop.permute.xlu0 %710
      %712 = vrot.lane.b32.xlu0 %v421, 112
      %v713 = vpop.permute.xlu0 %712
      %714 = vrot.lane.b32.xlu0 %v422, 112
      %v715 = vpop.permute.xlu0 %714
      %716 = vrot.lane.b32.xlu0 %v423, 112
      %v717 = vpop.permute.xlu0 %716
      %718 = vrot.lane.b32.xlu0 %v424, 112
      %v719 = vpop.permute.xlu0 %718
      %720 = vrot.lane.b32.xlu0 %v425, 112
      %v721 = vpop.permute.xlu0 %720
      %722 = vrot.lane.b32.xlu0 %v426, 112
      %v723 = vpop.permute.xlu0 %722
      %724 = vrot.lane.b32.xlu0 %v427, 112
      %v725 = vpop.permute.xlu0 %724
      %726 = vrot.lane.b32.xlu0 %v428, 112
      %v727 = vpop.permute.xlu0 %726
      %728 = vrot.lane.b32.xlu0 %v429, 112
      %v729 = vpop.permute.xlu0 %728
      %730 = vrot.lane.b32.xlu0 %v430, 112
      %v731 = vpop.permute.xlu0 %730
      %vm732 = vcmask 31744
      %v734 = vsel %vm732, %v701, 0
      %v737 = vsel %vm732, %v703, 0
      %v740 = vsel %vm732, %v705, 0
      %v743 = vsel %vm732, %v707, 0
      %v746 = vsel %vm732, %v709, 0
      %v749 = vsel %vm732, %v711, 0
      %v752 = vsel %vm732, %v713, 0
      %v755 = vsel %vm732, %v715, 0
      %v758 = vsel %vm732, %v717, 0
      %v761 = vsel %vm732, %v719, 0
      %v764 = vsel %vm732, %v721, 0
      %v767 = vsel %vm732, %v723, 0
      %v770 = vsel %vm732, %v725, 0
      %v773 = vsel %vm732, %v727, 0
      %v776 = vsel %vm732, %v729, 0
      %v779 = vsel %vm732, %v731, 0
      %v782 = vsel %vm495, %v692, 0
      %784 = vmatprep.subr.bf16.mxu0 0
      %785 = vmatpush1.bf16.msra.mxu0 0
      %786 = vmatprep.subr.bf16.mxu0 0
      %787 = vmatpush1.bf16.msra.mxu0 0
      %788 = vmatprep.subr.bf16.mxu0 0
      %789 = vmatpush1.bf16.msra.mxu0 0
      %790 = vmatprep.subr.bf16.mxu0 0
      %791 = vmatpush1.bf16.msra.mxu0 0
      %792 = vmatprep.subr.bf16.mxu0 0
      %793 = vmatpush1.bf16.msra.mxu0 0
      %794 = vmatprep.subr.bf16.mxu0 0
      %795 = vmatpush1.bf16.msra.mxu0 0
      %796 = vmatprep.subr.bf16.mxu0 0
      %797 = vmatpush1.bf16.msra.mxu0 0
      %798 = vmatprep.subr.bf16.mxu0 0
      %799 = vmatpush1.bf16.msra.mxu0 %v782
      %800 = vmatprep.subr.bf16.mxu0 0
      %801 = vmatpush2.bf16.msra.mxu0 0
      %802 = vmatprep.subr.bf16.mxu0 0
      %803 = vmatpush2.bf16.msra.mxu0 0
      %804 = vmatprep.subr.bf16.mxu0 0
      %805 = vmatpush2.bf16.msra.mxu0 0
      %806 = vmatprep.subr.bf16.mxu0 0
      %807 = vmatpush2.bf16.msra.mxu0 0
      %808 = vmatprep.subr.bf16.mxu0 0
      %809 = vmatpush2.bf16.msra.mxu0 0
      %810 = vmatprep.subr.bf16.mxu0 0
      %811 = vmatpush2.bf16.msra.mxu0 0
      %812 = vmatprep.subr.bf16.mxu0 0
      %813 = vmatpush2.bf16.msra.mxu0 0
      %814 = vmatprep.subr.bf16.mxu0 0
      %815 = vmatpush2.bf16.msra.mxu0 0
      %816 = vmatprep.mubr.bf16.mxu0 0
      %817 = vmatmul.mubr.bf16.gmra.mxu0 %v734
      %v818 = vpop.f32.mrf.mxu0
      %v819 = vadd.f32 %v698, %v818
      %v820 = vpop.f32.mrf.mxu0
      %v821 = vpop.f32.mrf.mxu0
      %v822 = vadd.f32 %v698, %v821
      %v823 = vpop.f32.mrf.mxu0
      %824 = vmatprep.mubr.bf16.mxu0 0
      %825 = vmatmul.mubr.bf16.gmra.mxu0 %v737
      %v826 = vpop.f32.mrf.mxu0
      %v827 = vadd.f32 %v698, %v826
      %v828 = vpop.f32.mrf.mxu0
      %v829 = vpop.f32.mrf.mxu0
      %v830 = vadd.f32 %v698, %v829
      %v831 = vpop.f32.mrf.mxu0
      %832 = vmatprep.mubr.bf16.mxu0 0
      %833 = vmatmul.mubr.bf16.gmra.mxu0 %v740
      %v834 = vpop.f32.mrf.mxu0
      %v835 = vadd.f32 %v698, %v834
      %v836 = vpop.f32.mrf.mxu0
      %v837 = vpop.f32.mrf.mxu0
      %v838 = vadd.f32 %v698, %v837
      %v839 = vpop.f32.mrf.mxu0
      %840 = vmatprep.mubr.bf16.mxu0 0
      %841 = vmatmul.mubr.bf16.gmra.mxu0 %v743
      %v842 = vpop.f32.mrf.mxu0
      %v843 = vadd.f32 %v698, %v842
      %v844 = vpop.f32.mrf.mxu0
      %v845 = vpop.f32.mrf.mxu0
      %v846 = vadd.f32 %v698, %v845
      %v847 = vpop.f32.mrf.mxu0
      %848 = vmatprep.mubr.bf16.mxu0 0
      %849 = vmatmul.mubr.bf16.gmra.mxu0 %v746
      %v850 = vpop.f32.mrf.mxu0
      %v851 = vadd.f32 %v698, %v850
      %v852 = vpop.f32.mrf.mxu0
      %v853 = vpop.f32.mrf.mxu0
      %v854 = vadd.f32 %v698, %v853
      %v855 = vpop.f32.mrf.mxu0
      %856 = vmatprep.mubr.bf16.mxu0 0
      %857 = vmatmul.mubr.bf16.gmra.mxu0 %v749
      %v858 = vpop.f32.mrf.mxu0
      %v859 = vadd.f32 %v698, %v858
      %v860 = vpop.f32.mrf.mxu0
      %v861 = vpop.f32.mrf.mxu0
      %v862 = vadd.f32 %v698, %v861
      %v863 = vpop.f32.mrf.mxu0
      %864 = vmatprep.mubr.bf16.mxu0 0
      %865 = vmatmul.mubr.bf16.gmra.mxu0 %v752
      %v866 = vpop.f32.mrf.mxu0
      %v867 = vadd.f32 %v698, %v866
      %v868 = vpop.f32.mrf.mxu0
      %v869 = vpop.f32.mrf.mxu0
      %v870 = vadd.f32 %v698, %v869
      %v871 = vpop.f32.mrf.mxu0
      %872 = vmatprep.mubr.bf16.mxu0 0
      %873 = vmatmul.mubr.bf16.gmra.mxu0 %v755
      %v874 = vpop.f32.mrf.mxu0
      %v875 = vadd.f32 %v698, %v874
      %v876 = vpop.f32.mrf.mxu0
      %v877 = vpop.f32.mrf.mxu0
      %v878 = vadd.f32 %v698, %v877
      %v879 = vpop.f32.mrf.mxu0
      %880 = vmatprep.mubr.bf16.mxu0 0
      %881 = vmatmul.mubr.bf16.gmra.mxu0 %v758
      %v882 = vpop.f32.mrf.mxu0
      %v883 = vadd.f32 %v698, %v882
      %v884 = vpop.f32.mrf.mxu0
      %v885 = vpop.f32.mrf.mxu0
      %v886 = vadd.f32 %v698, %v885
      %v887 = vpop.f32.mrf.mxu0
      %888 = vmatprep.mubr.bf16.mxu0 0
      %889 = vmatmul.mubr.bf16.gmra.mxu0 %v761
      %v890 = vpop.f32.mrf.mxu0
      %v891 = vadd.f32 %v698, %v890
      %v892 = vpop.f32.mrf.mxu0
      %v893 = vpop.f32.mrf.mxu0
      %v894 = vadd.f32 %v698, %v893
      %v895 = vpop.f32.mrf.mxu0
      %896 = vmatprep.mubr.bf16.mxu0 0
      %897 = vmatmul.mubr.bf16.gmra.mxu0 %v764
      %v898 = vpop.f32.mrf.mxu0
      %v899 = vadd.f32 %v698, %v898
      %v900 = vpop.f32.mrf.mxu0
      %v901 = vpop.f32.mrf.mxu0
      %v902 = vadd.f32 %v698, %v901
      %v903 = vpop.f32.mrf.mxu0
      %904 = vmatprep.mubr.bf16.mxu0 0
      %905 = vmatmul.mubr.bf16.gmra.mxu0 %v767
      %v906 = vpop.f32.mrf.mxu0
      %v907 = vadd.f32 %v698, %v906
      %v908 = vpop.f32.mrf.mxu0
      %v909 = vpop.f32.mrf.mxu0
      %v910 = vadd.f32 %v698, %v909
      %v911 = vpop.f32.mrf.mxu0
      %912 = vmatprep.mubr.bf16.mxu0 0
      %913 = vmatmul.mubr.bf16.gmra.mxu0 %v770
      %v914 = vpop.f32.mrf.mxu0
      %v915 = vadd.f32 %v698, %v914
      %v916 = vpop.f32.mrf.mxu0
      %v917 = vpop.f32.mrf.mxu0
      %v918 = vadd.f32 %v698, %v917
      %v919 = vpop.f32.mrf.mxu0
      %920 = vmatprep.mubr.bf16.mxu0 0
      %921 = vmatmul.mubr.bf16.gmra.mxu0 %v773
      %v922 = vpop.f32.mrf.mxu0
      %v923 = vadd.f32 %v698, %v922
      %v924 = vpop.f32.mrf.mxu0
      %v925 = vpop.f32.mrf.mxu0
      %v926 = vadd.f32 %v698, %v925
      %v927 = vpop.f32.mrf.mxu0
      %928 = vmatprep.mubr.bf16.mxu0 0
      %929 = vmatmul.mubr.bf16.gmra.mxu0 %v776
      %v930 = vpop.f32.mrf.mxu0
      %v931 = vadd.f32 %v698, %v930
      %v932 = vpop.f32.mrf.mxu0
      %v933 = vpop.f32.mrf.mxu0
      %v934 = vadd.f32 %v698, %v933
      %v935 = vpop.f32.mrf.mxu0
      %936 = vmatprep.mubr.bf16.mxu0 0
      %937 = vmatmul.mubr.bf16.gmra.mxu0 %v779
      %v938 = vpop.f32.mrf.mxu0
      %v939 = vadd.f32 %v698, %v938
      %v940 = vpop.f32.mrf.mxu0
      %v941 = vpop.f32.mrf.mxu0
      %v942 = vadd.f32 %v698, %v941
      %v943 = vpop.f32.mrf.mxu0
      %944 = vdwg.mxu0
      %945 = vst [vmem:[#allocation2] sm:$0xf] 0
      %946 = vst [vmem:[#allocation2 + $0x4] sm:$0xf] 0
      %947 = vst [vmem:[#allocation2 + $0x8] sm:$0xf] 0
      %948 = vst [vmem:[#allocation2 + $0xc] sm:$0xf] 0
      %949 = vst [vmem:[#allocation2 + $0x90] sm:$0xf] 0
      %950 = vst [vmem:[#allocation2 + $0x94] sm:$0xf] 0
      %951 = vst [vmem:[#allocation2 + $0x98] sm:$0xf] 0
      %952 = vst [vmem:[#allocation2 + $0x9c] sm:$0xf] 0
      %v953 = vpack.c.bf16 %v661, %v660
      %v954 = vpack.c.bf16 %v663, %v662
      %v955 = vpack.c.bf16 %v665, %v664
      %v956 = vpack.c.bf16 %v667, %v666
      %v957 = vpack.c.bf16 %v669, %v668
      %v958 = vpack.c.bf16 %v671, %v670
      %v959 = vpack.c.bf16 %v673, %v672
      %v960 = vpack.c.bf16 %v675, %v674
      %v961 = vpack.c.bf16 %v677, %v676
      %v962 = vpack.c.bf16 %v679, %v678
      %v963 = vpack.c.bf16 %v681, %v680
      %v964 = vpack.c.bf16 %v683, %v682
      %v965 = vpack.c.bf16 %v685, %v684
      %v966 = vpack.c.bf16 %v687, %v686
      %v967 = vpack.c.bf16 %v689, %v688
      %v968 = vpack.c.bf16 %v691, %v690
      %v985 = vunpack.c.l.b16 %v953
      %v986 = vunpack.c.h.b16 %v953
      %v987 = vunpack.c.l.b16 %v954
      %v988 = vunpack.c.h.b16 %v954
      %v989 = vunpack.c.l.b16 %v955
      %v990 = vunpack.c.h.b16 %v955
      %v991 = vunpack.c.l.b16 %v956
      %v992 = vunpack.c.h.b16 %v956
      %v993 = vunpack.c.l.b16 %v957
      %v994 = vunpack.c.h.b16 %v957
      %v995 = vunpack.c.l.b16 %v958
      %v996 = vunpack.c.h.b16 %v958
      %v997 = vunpack.c.l.b16 %v959
      %v998 = vunpack.c.h.b16 %v959
      %v999 = vunpack.c.l.b16 %v960
      %v1000 = vunpack.c.h.b16 %v960
      %v1001 = vunpack.c.l.b16 %v961
      %v1002 = vunpack.c.h.b16 %v961
      %v1003 = vunpack.c.l.b16 %v962
      %v1004 = vunpack.c.h.b16 %v962
      %v1005 = vunpack.c.l.b16 %v963
      %v1006 = vunpack.c.h.b16 %v963
      %v1007 = vunpack.c.l.b16 %v964
      %v1008 = vunpack.c.h.b16 %v964
      %v1009 = vunpack.c.l.b16 %v965
      %v1010 = vunpack.c.h.b16 %v965
      %v1011 = vunpack.c.l.b16 %v966
      %v1012 = vunpack.c.h.b16 %v966
      %v1013 = vunpack.c.l.b16 %v967
      %v1014 = vunpack.c.h.b16 %v967
      %v1015 = vunpack.c.l.b16 %v968
      %v1016 = vunpack.c.h.b16 %v968
      %v1017 = vpack.c.b16 %v985, %v985
      %v1018 = vpack.c.b16 %v986, %v986
      %v1019 = vpack.c.b16 %v987, %v987
      %v1020 = vpack.c.b16 %v988, %v988
      %v1021 = vpack.c.b16 %v989, %v989
      %v1022 = vpack.c.b16 %v990, %v990
      %v1023 = vpack.c.b16 %v991, %v991
      %v1024 = vpack.c.b16 %v992, %v992
      %v1025 = vpack.c.b16 %v993, %v993
      %v1026 = vpack.c.b16 %v994, %v994
      %v1027 = vpack.c.b16 %v995, %v995
      %v1028 = vpack.c.b16 %v996, %v996
      %v1029 = vpack.c.b16 %v997, %v997
      %v1030 = vpack.c.b16 %v998, %v998
      %v1031 = vpack.c.b16 %v999, %v999
      %v1032 = vpack.c.b16 %v1000, %v1000
      %v1033 = vpack.c.b16 %v1001, %v1001
      %v1034 = vpack.c.b16 %v1002, %v1002
      %v1035 = vpack.c.b16 %v1003, %v1003
      %v1036 = vpack.c.b16 %v1004, %v1004
      %v1037 = vpack.c.b16 %v1005, %v1005
      %v1038 = vpack.c.b16 %v1006, %v1006
      %v1039 = vpack.c.b16 %v1007, %v1007
      %v1040 = vpack.c.b16 %v1008, %v1008
      %v1041 = vpack.c.b16 %v1009, %v1009
      %v1042 = vpack.c.b16 %v1010, %v1010
      %v1043 = vpack.c.b16 %v1011, %v1011
      %v1044 = vpack.c.b16 %v1012, %v1012
      %v1045 = vpack.c.b16 %v1013, %v1013
      %v1046 = vpack.c.b16 %v1014, %v1014
      %v1047 = vpack.c.b16 %v1015, %v1015
      %v1048 = vpack.c.b16 %v1016, %v1016
      %1081 = vst [vmem:[#allocation2 + $0x10] sm:$0xf] %v1017
      %1082 = vst [vmem:[#allocation2 + $0x14] sm:$0xf] %v1018
      %1083 = vst [vmem:[#allocation2 + $0x18] sm:$0xf] %v1019
      %1084 = vst [vmem:[#allocation2 + $0x1c] sm:$0xf] %v1020
      %1085 = vst [vmem:[#allocation2 + $0x20] sm:$0xf] %v1021
      %1086 = vst [vmem:[#allocation2 + $0x24] sm:$0xf] %v1022
      %1087 = vst [vmem:[#allocation2 + $0x28] sm:$0xf] %v1023
      %1088 = vst [vmem:[#allocation2 + $0x2c] sm:$0xf] %v1024
      %1089 = vst [vmem:[#allocation2 + $0x30] sm:$0xf] %v1025
      %1090 = vst [vmem:[#allocation2 + $0x34] sm:$0xf] %v1026
      %1091 = vst [vmem:[#allocation2 + $0x38] sm:$0xf] %v1027
      %1092 = vst [vmem:[#allocation2 + $0x3c] sm:$0xf] %v1028
      %1093 = vst [vmem:[#allocation2 + $0x40] sm:$0xf] %v1029
      %1094 = vst [vmem:[#allocation2 + $0x44] sm:$0xf] %v1030
      %1095 = vst [vmem:[#allocation2 + $0x48] sm:$0xf] %v1031
      %1096 = vst [vmem:[#allocation2 + $0x4c] sm:$0xf] %v1032
      %1097 = vst [vmem:[#allocation2 + $0x50] sm:$0xf] %v1033
      %1098 = vst [vmem:[#allocation2 + $0x54] sm:$0xf] %v1034
      %1099 = vst [vmem:[#allocation2 + $0x58] sm:$0xf] %v1035
      %1100 = vst [vmem:[#allocation2 + $0x5c] sm:$0xf] %v1036
      %1101 = vst [vmem:[#allocation2 + $0x60] sm:$0xf] %v1037
      %1102 = vst [vmem:[#allocation2 + $0x64] sm:$0xf] %v1038
      %1103 = vst [vmem:[#allocation2 + $0x68] sm:$0xf] %v1039
      %1104 = vst [vmem:[#allocation2 + $0x6c] sm:$0xf] %v1040
      %1105 = vst [vmem:[#allocation2 + $0x70] sm:$0xf] %v1041
      %1106 = vst [vmem:[#allocation2 + $0x74] sm:$0xf] %v1042
      %1107 = vst [vmem:[#allocation2 + $0x78] sm:$0xf] %v1043
      %1108 = vst [vmem:[#allocation2 + $0x7c] sm:$0xf] %v1044
      %1109 = vst [vmem:[#allocation2 + $0x80] sm:$0xf] %v1045
      %1110 = vst [vmem:[#allocation2 + $0x84] sm:$0xf] %v1046
      %1111 = vst [vmem:[#allocation2 + $0x88] sm:$0xf] %v1047
      %1112 = vst [vmem:[#allocation2 + $0x8c] sm:$0xf] %v1048
      %v1113 = vld [vmem:[%s7] sm:$0xff]
      %v1114 = vld [vmem:[%s7 + $0x8] sm:$0xff]
      %v1115 = vld [vmem:[%s7 + $0x10] sm:$0xff]
      %v1116 = vld [vmem:[%s7 + $0x18] sm:$0xff]
      %v1117 = vld [vmem:[%s7 + $0x20] sm:$0xff]
      %v1118 = vld [vmem:[%s7 + $0x28] sm:$0xff]
      %v1119 = vld [vmem:[%s7 + $0x30] sm:$0xff]
      %v1120 = vld [vmem:[%s7 + $0x38] sm:$0xff]
      %v1121 = vld [vmem:[%s7 + $0x40] sm:$0xff]
      %v1122 = vld [vmem:[%s7 + $0x48] sm:$0xff]
      %v1123 = vld [vmem:[%s7 + $0x50] sm:$0xff]
      %v1124 = vld [vmem:[%s7 + $0x58] sm:$0xff]
      %v1125 = vld [vmem:[%s7 + $0x60] sm:$0xff]
      %v1126 = vld [vmem:[%s7 + $0x68] sm:$0xff]
      %v1127 = vld [vmem:[%s7 + $0x70] sm:$0xff]
      %v1128 = vld [vmem:[%s7 + $0x78] sm:$0xff]
      %v1129 = vld [vmem:[%s7 + $0x80] sm:$0xff]
      %v1130 = vld [vmem:[%s7 + $0x88] sm:$0xff]
      %v1131 = vld [vmem:[%s7 + $0x90] sm:$0xff]
      %v1132 = vld [vmem:[%s7 + $0x98] sm:$0xff]
      %v1133 = vld [vmem:[%s7 + $0xa0] sm:$0xff]
      %v1134 = vld [vmem:[%s7 + $0xa8] sm:$0xff]
      %v1135 = vld [vmem:[%s7 + $0xb0] sm:$0xff]
      %v1136 = vld [vmem:[%s7 + $0xb8] sm:$0xff]
      %v1137 = vld [vmem:[%s7 + $0xc0] sm:$0xff]
      %v1138 = vld [vmem:[%s7 + $0xc8] sm:$0xff]
      %v1139 = vld [vmem:[%s7 + $0xd0] sm:$0xff]
      %v1140 = vld [vmem:[%s7 + $0xd8] sm:$0xff]
      %v1141 = vld [vmem:[%s7 + $0xe0] sm:$0xff]
      %v1142 = vld [vmem:[%s7 + $0xe8] sm:$0xff]
      %v1143 = vld [vmem:[%s7 + $0xf0] sm:$0xff]
      %v1144 = vld [vmem:[%s7 + $0xf8] sm:$0xff]
      %vm1145 = vcmp.ge.s32.totalorder %v1113, 1
      %vm1146 = vcmp.ge.s32.totalorder %v1114, 1
      %vm1147 = vcmp.ge.s32.totalorder %v1115, 1
      %vm1148 = vcmp.ge.s32.totalorder %v1116, 1
      %vm1149 = vcmp.ge.s32.totalorder %v1117, 1
      %vm1150 = vcmp.ge.s32.totalorder %v1118, 1
      %vm1151 = vcmp.ge.s32.totalorder %v1119, 1
      %vm1152 = vcmp.ge.s32.totalorder %v1120, 1
      %vm1153 = vcmp.ge.s32.totalorder %v1121, 1
      %vm1154 = vcmp.ge.s32.totalorder %v1122, 1
      %vm1155 = vcmp.ge.s32.totalorder %v1123, 1
      %vm1156 = vcmp.ge.s32.totalorder %v1124, 1
      %vm1157 = vcmp.ge.s32.totalorder %v1125, 1
      %vm1158 = vcmp.ge.s32.totalorder %v1126, 1
      %vm1159 = vcmp.ge.s32.totalorder %v1127, 1
      %vm1160 = vcmp.ge.s32.totalorder %v1128, 1
      %vm1161 = vcmp.ge.s32.totalorder %v1129, 1
      %vm1162 = vcmp.ge.s32.totalorder %v1130, 1
      %vm1163 = vcmp.ge.s32.totalorder %v1131, 1
      %vm1164 = vcmp.ge.s32.totalorder %v1132, 1
      %vm1165 = vcmp.ge.s32.totalorder %v1133, 1
      %vm1166 = vcmp.ge.s32.totalorder %v1134, 1
      %vm1167 = vcmp.ge.s32.totalorder %v1135, 1
      %vm1168 = vcmp.ge.s32.totalorder %v1136, 1
      %vm1169 = vcmp.ge.s32.totalorder %v1137, 1
      %vm1170 = vcmp.ge.s32.totalorder %v1138, 1
      %vm1171 = vcmp.ge.s32.totalorder %v1139, 1
      %vm1172 = vcmp.ge.s32.totalorder %v1140, 1
      %vm1173 = vcmp.ge.s32.totalorder %v1141, 1
      %vm1174 = vcmp.ge.s32.totalorder %v1142, 1
      %vm1175 = vcmp.ge.s32.totalorder %v1143, 1
      %vm1176 = vcmp.ge.s32.totalorder %v1144, 1
      %vm1177 = vcmp.lt.s32.totalorder %v1113, 15
      %vm1178 = vcmp.lt.s32.totalorder %v1114, 15
      %vm1179 = vcmp.lt.s32.totalorder %v1115, 15
      %vm1180 = vcmp.lt.s32.totalorder %v1116, 15
      %vm1181 = vcmp.lt.s32.totalorder %v1117, 15
      %vm1182 = vcmp.lt.s32.totalorder %v1118, 15
      %vm1183 = vcmp.lt.s32.totalorder %v1119, 15
      %vm1184 = vcmp.lt.s32.totalorder %v1120, 15
      %vm1185 = vcmp.lt.s32.totalorder %v1121, 15
      %vm1186 = vcmp.lt.s32.totalorder %v1122, 15
      %vm1187 = vcmp.lt.s32.totalorder %v1123, 15
      %vm1188 = vcmp.lt.s32.totalorder %v1124, 15
      %vm1189 = vcmp.lt.s32.totalorder %v1125, 15
      %vm1190 = vcmp.lt.s32.totalorder %v1126, 15
      %vm1191 = vcmp.lt.s32.totalorder %v1127, 15
      %vm1192 = vcmp.lt.s32.totalorder %v1128, 15
      %vm1193 = vcmp.lt.s32.totalorder %v1129, 15
      %vm1194 = vcmp.lt.s32.totalorder %v1130, 15
      %vm1195 = vcmp.lt.s32.totalorder %v1131, 15
      %vm1196 = vcmp.lt.s32.totalorder %v1132, 15
      %vm1197 = vcmp.lt.s32.totalorder %v1133, 15
      %vm1198 = vcmp.lt.s32.totalorder %v1134, 15
      %vm1199 = vcmp.lt.s32.totalorder %v1135, 15
      %vm1200 = vcmp.lt.s32.totalorder %v1136, 15
      %vm1201 = vcmp.lt.s32.totalorder %v1137, 15
      %vm1202 = vcmp.lt.s32.totalorder %v1138, 15
      %vm1203 = vcmp.lt.s32.totalorder %v1139, 15
      %vm1204 = vcmp.lt.s32.totalorder %v1140, 15
      %vm1205 = vcmp.lt.s32.totalorder %v1141, 15
      %vm1206 = vcmp.lt.s32.totalorder %v1142, 15
      %vm1207 = vcmp.lt.s32.totalorder %v1143, 15
      %vm1208 = vcmp.lt.s32.totalorder %v1144, 15
      %v1209 = vld [vmem:[%s6] sm:$0x1]
      %v1211 = vlaneseq
      %v1212 = vshrl.u32 %v1211, 7
      %v1213 = vsub.s32 0, %v1212
      %v1214 = vrot.slane %v1209, %v1213
      %v1216 = vadd.f32 %v819, %v1214
      %v1217 = vadd.f32 %v822, %v1214
      %v1218 = vadd.f32 %v827, %v1214
      %v1219 = vadd.f32 %v830, %v1214
      %v1220 = vadd.f32 %v835, %v1214
      %v1221 = vadd.f32 %v838, %v1214
      %v1222 = vadd.f32 %v843, %v1214
      %v1223 = vadd.f32 %v846, %v1214
      %v1224 = vadd.f32 %v851, %v1214
      %v1225 = vadd.f32 %v854, %v1214
      %v1226 = vadd.f32 %v859, %v1214
      %v1227 = vadd.f32 %v862, %v1214
      %v1228 = vadd.f32 %v867, %v1214
      %v1229 = vadd.f32 %v870, %v1214
      %v1230 = vadd.f32 %v875, %v1214
      %v1231 = vadd.f32 %v878, %v1214
      %v1232 = vadd.f32 %v883, %v1214
      %v1233 = vadd.f32 %v886, %v1214
      %v1234 = vadd.f32 %v891, %v1214
      %v1235 = vadd.f32 %v894, %v1214
      %v1236 = vadd.f32 %v899, %v1214
      %v1237 = vadd.f32 %v902, %v1214
      %v1238 = vadd.f32 %v907, %v1214
      %v1239 = vadd.f32 %v910, %v1214
      %v1240 = vadd.f32 %v915, %v1214
      %v1241 = vadd.f32 %v918, %v1214
      %v1242 = vadd.f32 %v923, %v1214
      %v1243 = vadd.f32 %v926, %v1214
      %v1244 = vadd.f32 %v931, %v1214
      %v1245 = vadd.f32 %v934, %v1214
      %v1246 = vadd.f32 %v939, %v1214
      %v1247 = vadd.f32 %v942, %v1214
      %v1248 = vld [vmem:[#allocation2 + $0x4] sm:$0x8]
      %v1249 = vld [vmem:[#allocation2 + $0x8] sm:$0xf]
      %v1250 = vld [vmem:[#allocation2 + $0xc] sm:$0xf]
      %v1251 = vld [vmem:[#allocation2 + $0x10] sm:$0xf]
      %v1252 = vld [vmem:[#allocation2 + $0x14] sm:$0xf]
      %v1253 = vld [vmem:[#allocation2 + $0x18] sm:$0xf]
      %v1254 = vld [vmem:[#allocation2 + $0x1c] sm:$0xf]
      %v1255 = vld [vmem:[#allocation2 + $0x20] sm:$0xf]
      %v1256 = vld [vmem:[#allocation2 + $0x24] sm:$0xf]
      %v1257 = vld [vmem:[#allocation2 + $0x28] sm:$0xf]
      %v1258 = vld [vmem:[#allocation2 + $0x2c] sm:$0xf]
      %v1259 = vld [vmem:[#allocation2 + $0x30] sm:$0xf]
      %v1260 = vld [vmem:[#allocation2 + $0x34] sm:$0xf]
      %v1261 = vld [vmem:[#allocation2 + $0x38] sm:$0xf]
      %v1262 = vld [vmem:[#allocation2 + $0x3c] sm:$0xf]
      %v1263 = vld [vmem:[#allocation2 + $0x40] sm:$0xf]
      %v1264 = vld [vmem:[#allocation2 + $0x44] sm:$0xf]
      %v1265 = vld [vmem:[#allocation2 + $0x48] sm:$0xf]
      %v1266 = vld [vmem:[#allocation2 + $0x4c] sm:$0xf]
      %v1267 = vld [vmem:[#allocation2 + $0x50] sm:$0xf]
      %v1268 = vld [vmem:[#allocation2 + $0x54] sm:$0xf]
      %v1269 = vld [vmem:[#allocation2 + $0x58] sm:$0xf]
      %v1270 = vld [vmem:[#allocation2 + $0x5c] sm:$0xf]
      %v1271 = vld [vmem:[#allocation2 + $0x60] sm:$0xf]
      %v1272 = vld [vmem:[#allocation2 + $0x64] sm:$0xf]
      %v1273 = vld [vmem:[#allocation2 + $0x68] sm:$0xf]
      %v1274 = vld [vmem:[#allocation2 + $0x6c] sm:$0xf]
      %v1275 = vld [vmem:[#allocation2 + $0x70] sm:$0xf]
      %v1276 = vld [vmem:[#allocation2 + $0x74] sm:$0xf]
      %v1277 = vld [vmem:[#allocation2 + $0x78] sm:$0xf]
      %v1278 = vld [vmem:[#allocation2 + $0x7c] sm:$0xf]
      %v1279 = vld [vmem:[#allocation2 + $0x80] sm:$0xf]
      %v1280 = vld [vmem:[#allocation2 + $0x84] sm:$0xf]
      %v1281 = vld [vmem:[%s5] sm:$0xf]
      %v1282 = vld [vmem:[%s5 + $0x4] sm:$0xf]
      %v1283 = vld [vmem:[%s5 + $0x8] sm:$0xf]
      %v1284 = vld [vmem:[%s5 + $0xc] sm:$0xf]
      %v1285 = vld [vmem:[%s5 + $0x10] sm:$0xf]
      %v1286 = vld [vmem:[%s5 + $0x14] sm:$0xf]
      %v1287 = vld [vmem:[%s5 + $0x18] sm:$0xf]
      %v1288 = vld [vmem:[%s5 + $0x1c] sm:$0xf]
      %v1289 = vld [vmem:[%s5 + $0x20] sm:$0xf]
      %v1290 = vld [vmem:[%s5 + $0x24] sm:$0xf]
      %v1291 = vld [vmem:[%s5 + $0x28] sm:$0xf]
      %v1292 = vld [vmem:[%s5 + $0x2c] sm:$0xf]
      %v1293 = vld [vmem:[%s5 + $0x30] sm:$0xf]
      %v1294 = vld [vmem:[%s5 + $0x34] sm:$0xf]
      %v1295 = vld [vmem:[%s5 + $0x38] sm:$0xf]
      %v1296 = vld [vmem:[%s5 + $0x3c] sm:$0xf]
      %v1330 = vunpack.c.l.b16 %v1248
      %v1331 = vunpack.c.l.b16 %v1249
      %v1332 = vunpack.c.l.b16 %v1250
      %v1333 = vunpack.c.l.b16 %v1251
      %v1334 = vunpack.c.l.b16 %v1252
      %v1335 = vunpack.c.l.b16 %v1253
      %v1336 = vunpack.c.l.b16 %v1254
      %v1337 = vunpack.c.l.b16 %v1255
      %v1338 = vunpack.c.l.b16 %v1256
      %v1339 = vunpack.c.l.b16 %v1257
      %v1340 = vunpack.c.l.b16 %v1258
      %v1341 = vunpack.c.l.b16 %v1259
      %v1342 = vunpack.c.l.b16 %v1260
      %v1343 = vunpack.c.l.b16 %v1261
      %v1344 = vunpack.c.l.b16 %v1262
      %v1345 = vunpack.c.l.b16 %v1263
      %v1346 = vunpack.c.l.b16 %v1264
      %v1347 = vunpack.c.l.b16 %v1265
      %v1348 = vunpack.c.l.b16 %v1266
      %v1349 = vunpack.c.l.b16 %v1267
      %v1350 = vunpack.c.l.b16 %v1268
      %v1351 = vunpack.c.l.b16 %v1269
      %v1352 = vunpack.c.l.b16 %v1270
      %v1353 = vunpack.c.l.b16 %v1271
      %v1354 = vunpack.c.l.b16 %v1272
      %v1355 = vunpack.c.l.b16 %v1273
      %v1356 = vunpack.c.l.b16 %v1274
      %v1357 = vunpack.c.l.b16 %v1275
      %v1358 = vunpack.c.l.b16 %v1276
      %v1359 = vunpack.c.l.b16 %v1277
      %v1360 = vunpack.c.l.b16 %v1278
      %v1361 = vunpack.c.l.b16 %v1279
      %v1362 = vunpack.c.l.b16 %v1280
      %v1363 = vpack.c.b16 %v1331, %v1330
      %v1364 = vpack.c.b16 %v1333, %v1332
      %v1365 = vpack.c.b16 %v1335, %v1334
      %v1366 = vpack.c.b16 %v1337, %v1336
      %v1367 = vpack.c.b16 %v1339, %v1338
      %v1368 = vpack.c.b16 %v1341, %v1340
      %v1369 = vpack.c.b16 %v1343, %v1342
      %v1370 = vpack.c.b16 %v1345, %v1344
      %v1371 = vpack.c.b16 %v1347, %v1346
      %v1372 = vpack.c.b16 %v1349, %v1348
      %v1373 = vpack.c.b16 %v1351, %v1350
      %v1374 = vpack.c.b16 %v1353, %v1352
      %v1375 = vpack.c.b16 %v1355, %v1354
      %v1376 = vpack.c.b16 %v1357, %v1356
      %v1377 = vpack.c.b16 %v1359, %v1358
      %v1378 = vpack.c.b16 %v1361, %v1360
      %v1379 = vpack.c.b16 %v1362, %v1362
      %vm1380 = vsmask.f32 4352
      %v1382 = vshrl.u32 %v1363, 16
      %v1384 = vrot.slane %v1382, 3
      %v1385 = vshll.u32 %v1363, 16
      %v1387 = vrot.slane %v1385, 4
      %v1388 = vor.u32 %v1384, %v1387
      %v1390 = vshrl.u32 %v1364, 16
      %v1392 = vrot.slane %v1390, 3
      %v1393 = vshll.u32 %v1364, 16
      %v1395 = vrot.slane %v1393, 4
      %v1396 = vor.u32 %v1392, %v1395
      %v1397 = vsel %vm1380, %v1388, %v1396
      %v1399 = vshrl.u32 %v1365, 16
      %v1401 = vrot.slane %v1399, 3
      %v1402 = vshll.u32 %v1365, 16
      %v1404 = vrot.slane %v1402, 4
      %v1405 = vor.u32 %v1401, %v1404
      %v1406 = vsel %vm1380, %v1396, %v1405
      %v1408 = vshrl.u32 %v1366, 16
      %v1410 = vrot.slane %v1408, 3
      %v1411 = vshll.u32 %v1366, 16
      %v1413 = vrot.slane %v1411, 4
      %v1414 = vor.u32 %v1410, %v1413
      %v1415 = vsel %vm1380, %v1405, %v1414
      %v1417 = vshrl.u32 %v1367, 16
      %v1419 = vrot.slane %v1417, 3
      %v1420 = vshll.u32 %v1367, 16
      %v1422 = vrot.slane %v1420, 4
      %v1423 = vor.u32 %v1419, %v1422
      %v1424 = vsel %vm1380, %v1414, %v1423
      %v1426 = vshrl.u32 %v1368, 16
      %v1428 = vrot.slane %v1426, 3
      %v1429 = vshll.u32 %v1368, 16
      %v1431 = vrot.slane %v1429, 4
      %v1432 = vor.u32 %v1428, %v1431
      %v1433 = vsel %vm1380, %v1423, %v1432
      %v1435 = vshrl.u32 %v1369, 16
      %v1437 = vrot.slane %v1435, 3
      %v1438 = vshll.u32 %v1369, 16
      %v1440 = vrot.slane %v1438, 4
      %v1441 = vor.u32 %v1437, %v1440
      %v1442 = vsel %vm1380, %v1432, %v1441
      %v1444 = vshrl.u32 %v1370, 16
      %v1446 = vrot.slane %v1444, 3
      %v1447 = vshll.u32 %v1370, 16
      %v1449 = vrot.slane %v1447, 4
      %v1450 = vor.u32 %v1446, %v1449
      %v1451 = vsel %vm1380, %v1441, %v1450
      %v1453 = vshrl.u32 %v1371, 16
      %v1455 = vrot.slane %v1453, 3
      %v1456 = vshll.u32 %v1371, 16
      %v1458 = vrot.slane %v1456, 4
      %v1459 = vor.u32 %v1455, %v1458
      %v1460 = vsel %vm1380, %v1450, %v1459
      %v1462 = vshrl.u32 %v1372, 16
      %v1464 = vrot.slane %v1462, 3
      %v1465 = vshll.u32 %v1372, 16
      %v1467 = vrot.slane %v1465, 4
      %v1468 = vor.u32 %v1464, %v1467
      %v1469 = vsel %vm1380, %v1459, %v1468
      %v1471 = vshrl.u32 %v1373, 16
      %v1473 = vrot.slane %v1471, 3
      %v1474 = vshll.u32 %v1373, 16
      %v1476 = vrot.slane %v1474, 4
      %v1477 = vor.u32 %v1473, %v1476
      %v1478 = vsel %vm1380, %v1468, %v1477
      %v1480 = vshrl.u32 %v1374, 16
      %v1482 = vrot.slane %v1480, 3
      %v1483 = vshll.u32 %v1374, 16
      %v1485 = vrot.slane %v1483, 4
      %v1486 = vor.u32 %v1482, %v1485
      %v1487 = vsel %vm1380, %v1477, %v1486
      %v1489 = vshrl.u32 %v1375, 16
      %v1491 = vrot.slane %v1489, 3
      %v1492 = vshll.u32 %v1375, 16
      %v1494 = vrot.slane %v1492, 4
      %v1495 = vor.u32 %v1491, %v1494
      %v1496 = vsel %vm1380, %v1486, %v1495
      %v1498 = vshrl.u32 %v1376, 16
      %v1500 = vrot.slane %v1498, 3
      %v1501 = vshll.u32 %v1376, 16
      %v1503 = vrot.slane %v1501, 4
      %v1504 = vor.u32 %v1500, %v1503
      %v1505 = vsel %vm1380, %v1495, %v1504
      %v1507 = vshrl.u32 %v1377, 16
      %v1509 = vrot.slane %v1507, 3
      %v1510 = vshll.u32 %v1377, 16
      %v1512 = vrot.slane %v1510, 4
      %v1513 = vor.u32 %v1509, %v1512
      %v1514 = vsel %vm1380, %v1504, %v1513
      %v1516 = vshrl.u32 %v1378, 16
      %v1518 = vrot.slane %v1516, 3
      %v1519 = vshll.u32 %v1378, 16
      %v1521 = vrot.slane %v1519, 4
      %v1522 = vor.u32 %v1518, %v1521
      %v1523 = vsel %vm1380, %v1513, %v1522
      %v1525 = vshrl.u32 %v1379, 16
      %v1527 = vrot.slane %v1525, 3
      %v1528 = vshll.u32 %v1379, 16
      %v1530 = vrot.slane %v1528, 4
      %v1531 = vor.u32 %v1527, %v1530
      %v1532 = vsel %vm1380, %v1522, %v1531
      %v1565 = vunpack.c.l.b16 %v1281
      %v1566 = vunpack.c.l.b16 %v1282
      %v1567 = vunpack.c.l.b16 %v1283
      %v1568 = vunpack.c.l.b16 %v1284
      %v1569 = vunpack.c.l.b16 %v1285
      %v1570 = vunpack.c.l.b16 %v1286
      %v1571 = vunpack.c.l.b16 %v1287
      %v1572 = vunpack.c.l.b16 %v1288
      %v1573 = vunpack.c.l.b16 %v1289
      %v1574 = vunpack.c.l.b16 %v1290
      %v1575 = vunpack.c.l.b16 %v1291
      %v1576 = vunpack.c.l.b16 %v1292
      %v1577 = vunpack.c.l.b16 %v1293
      %v1578 = vunpack.c.l.b16 %v1294
      %v1579 = vunpack.c.l.b16 %v1295
      %v1580 = vunpack.c.l.b16 %v1296
      %v1581 = vpack.c.b16 %v1566, %v1565
      %v1582 = vpack.c.b16 %v1568, %v1567
      %v1583 = vpack.c.b16 %v1570, %v1569
      %v1584 = vpack.c.b16 %v1572, %v1571
      %v1585 = vpack.c.b16 %v1574, %v1573
      %v1586 = vpack.c.b16 %v1576, %v1575
      %v1587 = vpack.c.b16 %v1578, %v1577
      %v1588 = vpack.c.b16 %v1580, %v1579
      %1597 = vmatprep.subr.bf16.mxu0 0
      %1598 = vmatpush1.bf16.msra.mxu0 %v1588
      %1599 = vmatprep.subr.bf16.mxu0 0
      %1600 = vmatpush1.bf16.msra.mxu0 %v1587
      %1601 = vmatprep.subr.bf16.mxu0 0
      %1602 = vmatpush1.bf16.msra.mxu0 %v1586
      %1603 = vmatprep.subr.bf16.mxu0 0
      %1604 = vmatpush1.bf16.msra.mxu0 %v1585
      %1605 = vmatprep.subr.bf16.mxu0 0
      %1606 = vmatpush1.bf16.msra.mxu0 %v1584
      %1607 = vmatprep.subr.bf16.mxu0 0
      %1608 = vmatpush1.bf16.msra.mxu0 %v1583
      %1609 = vmatprep.subr.bf16.mxu0 0
      %1610 = vmatpush1.bf16.msra.mxu0 %v1582
      %1611 = vmatprep.subr.bf16.mxu0 0
      %1612 = vmatpush1.bf16.msra.mxu0 %v1581
      %1613 = vmatprep.subr.bf16.mxu0 0
      %1614 = vmatpush2.bf16.msra.mxu0 0
      %1615 = vmatprep.subr.bf16.mxu0 0
      %1616 = vmatpush2.bf16.msra.mxu0 0
      %1617 = vmatprep.subr.bf16.mxu0 0
      %1618 = vmatpush2.bf16.msra.mxu0 0
      %1619 = vmatprep.subr.bf16.mxu0 0
      %1620 = vmatpush2.bf16.msra.mxu0 0
      %1621 = vmatprep.subr.bf16.mxu0 0
      %1622 = vmatpush2.bf16.msra.mxu0 0
      %1623 = vmatprep.subr.bf16.mxu0 0
      %1624 = vmatpush2.bf16.msra.mxu0 0
      %1625 = vmatprep.subr.bf16.mxu0 0
      %1626 = vmatpush2.bf16.msra.mxu0 0
      %1627 = vmatprep.subr.bf16.mxu0 0
      %1628 = vmatpush2.bf16.msra.mxu0 0
      %1629 = vmatprep.mubr.bf16.mxu0 0
      %1630 = vmatmul.mubr.bf16.gmra.mxu0 %v1397
      %v1631 = vpop.f32.mrf.mxu0
      %v1632 = vadd.f32 0.0, %v1631
      %v1633 = vpop.f32.mrf.mxu0
      %v1634 = vpop.f32.mrf.mxu0
      %v1635 = vadd.f32 0.0, %v1634
      %v1636 = vpop.f32.mrf.mxu0
      %1637 = vmatprep.mubr.bf16.mxu0 0
      %1638 = vmatmul.mubr.bf16.gmra.mxu0 %v1406
      %v1639 = vpop.f32.mrf.mxu0
      %v1640 = vadd.f32 0.0, %v1639
      %v1641 = vpop.f32.mrf.mxu0
      %v1642 = vpop.f32.mrf.mxu0
      %v1643 = vadd.f32 0.0, %v1642
      %v1644 = vpop.f32.mrf.mxu0
      %1645 = vmatprep.mubr.bf16.mxu0 0
      %1646 = vmatmul.mubr.bf16.gmra.mxu0 %v1415
      %v1647 = vpop.f32.mrf.mxu0
      %v1648 = vadd.f32 0.0, %v1647
      %v1649 = vpop.f32.mrf.mxu0
      %v1650 = vpop.f32.mrf.mxu0
      %v1651 = vadd.f32 0.0, %v1650
      %v1652 = vpop.f32.mrf.mxu0
      %1653 = vmatprep.mubr.bf16.mxu0 0
      %1654 = vmatmul.mubr.bf16.gmra.mxu0 %v1424
      %v1655 = vpop.f32.mrf.mxu0
      %v1656 = vadd.f32 0.0, %v1655
      %v1657 = vpop.f32.mrf.mxu0
      %v1658 = vpop.f32.mrf.mxu0
      %v1659 = vadd.f32 0.0, %v1658
      %v1660 = vpop.f32.mrf.mxu0
      %1661 = vmatprep.mubr.bf16.mxu0 0
      %1662 = vmatmul.mubr.bf16.gmra.mxu0 %v1433
      %v1663 = vpop.f32.mrf.mxu0
      %v1664 = vadd.f32 0.0, %v1663
      %v1665 = vpop.f32.mrf.mxu0
      %v1666 = vpop.f32.mrf.mxu0
      %v1667 = vadd.f32 0.0, %v1666
      %v1668 = vpop.f32.mrf.mxu0
      %1669 = vmatprep.mubr.bf16.mxu0 0
      %1670 = vmatmul.mubr.bf16.gmra.mxu0 %v1442
      %v1671 = vpop.f32.mrf.mxu0
      %v1672 = vadd.f32 0.0, %v1671
      %v1673 = vpop.f32.mrf.mxu0
      %v1674 = vpop.f32.mrf.mxu0
      %v1675 = vadd.f32 0.0, %v1674
      %v1676 = vpop.f32.mrf.mxu0
      %1677 = vmatprep.mubr.bf16.mxu0 0
      %1678 = vmatmul.mubr.bf16.gmra.mxu0 %v1451
      %v1679 = vpop.f32.mrf.mxu0
      %v1680 = vadd.f32 0.0, %v1679
      %v1681 = vpop.f32.mrf.mxu0
      %v1682 = vpop.f32.mrf.mxu0
      %v1683 = vadd.f32 0.0, %v1682
      %v1684 = vpop.f32.mrf.mxu0
      %1685 = vmatprep.mubr.bf16.mxu0 0
      %1686 = vmatmul.mubr.bf16.gmra.mxu0 %v1460
      %v1687 = vpop.f32.mrf.mxu0
      %v1688 = vadd.f32 0.0, %v1687
      %v1689 = vpop.f32.mrf.mxu0
      %v1690 = vpop.f32.mrf.mxu0
      %v1691 = vadd.f32 0.0, %v1690
      %v1692 = vpop.f32.mrf.mxu0
      %1693 = vmatprep.mubr.bf16.mxu0 0
      %1694 = vmatmul.mubr.bf16.gmra.mxu0 %v1469
      %v1695 = vpop.f32.mrf.mxu0
      %v1696 = vadd.f32 0.0, %v1695
      %v1697 = vpop.f32.mrf.mxu0
      %v1698 = vpop.f32.mrf.mxu0
      %v1699 = vadd.f32 0.0, %v1698
      %v1700 = vpop.f32.mrf.mxu0
      %1701 = vmatprep.mubr.bf16.mxu0 0
      %1702 = vmatmul.mubr.bf16.gmra.mxu0 %v1478
      %v1703 = vpop.f32.mrf.mxu0
      %v1704 = vadd.f32 0.0, %v1703
      %v1705 = vpop.f32.mrf.mxu0
      %v1706 = vpop.f32.mrf.mxu0
      %v1707 = vadd.f32 0.0, %v1706
      %v1708 = vpop.f32.mrf.mxu0
      %1709 = vmatprep.mubr.bf16.mxu0 0
      %1710 = vmatmul.mubr.bf16.gmra.mxu0 %v1487
      %v1711 = vpop.f32.mrf.mxu0
      %v1712 = vadd.f32 0.0, %v1711
      %v1713 = vpop.f32.mrf.mxu0
      %v1714 = vpop.f32.mrf.mxu0
      %v1715 = vadd.f32 0.0, %v1714
      %v1716 = vpop.f32.mrf.mxu0
      %1717 = vmatprep.mubr.bf16.mxu0 0
      %1718 = vmatmul.mubr.bf16.gmra.mxu0 %v1496
      %v1719 = vpop.f32.mrf.mxu0
      %v1720 = vadd.f32 0.0, %v1719
      %v1721 = vpop.f32.mrf.mxu0
      %v1722 = vpop.f32.mrf.mxu0
      %v1723 = vadd.f32 0.0, %v1722
      %v1724 = vpop.f32.mrf.mxu0
      %1725 = vmatprep.mubr.bf16.mxu0 0
      %1726 = vmatmul.mubr.bf16.gmra.mxu0 %v1505
      %v1727 = vpop.f32.mrf.mxu0
      %v1728 = vadd.f32 0.0, %v1727
      %v1729 = vpop.f32.mrf.mxu0
      %v1730 = vpop.f32.mrf.mxu0
      %v1731 = vadd.f32 0.0, %v1730
      %v1732 = vpop.f32.mrf.mxu0
      %1733 = vmatprep.mubr.bf16.mxu0 0
      %1734 = vmatmul.mubr.bf16.gmra.mxu0 %v1514
      %v1735 = vpop.f32.mrf.mxu0
      %v1736 = vadd.f32 0.0, %v1735
      %v1737 = vpop.f32.mrf.mxu0
      %v1738 = vpop.f32.mrf.mxu0
      %v1739 = vadd.f32 0.0, %v1738
      %v1740 = vpop.f32.mrf.mxu0
      %1741 = vmatprep.mubr.bf16.mxu0 0
      %1742 = vmatmul.mubr.bf16.gmra.mxu0 %v1523
      %v1743 = vpop.f32.mrf.mxu0
      %v1744 = vadd.f32 0.0, %v1743
      %v1745 = vpop.f32.mrf.mxu0
      %v1746 = vpop.f32.mrf.mxu0
      %v1747 = vadd.f32 0.0, %v1746
      %v1748 = vpop.f32.mrf.mxu0
      %1749 = vmatprep.mubr.bf16.mxu0 0
      %1750 = vmatmul.mubr.bf16.gmra.mxu0 %v1532
      %v1751 = vpop.f32.mrf.mxu0
      %v1752 = vadd.f32 0.0, %v1751
      %v1753 = vpop.f32.mrf.mxu0
      %v1754 = vpop.f32.mrf.mxu0
      %v1755 = vadd.f32 0.0, %v1754
      %v1756 = vpop.f32.mrf.mxu0
      %1757 = vdwg.mxu0
      %v1758 = vsel %vm1145, 1, 0
      %v1759 = vsel %vm1146, 1, 0
      %v1760 = vsel %vm1147, 1, 0
      %v1761 = vsel %vm1148, 1, 0
      %v1762 = vsel %vm1149, 1, 0
      %v1763 = vsel %vm1150, 1, 0
      %v1764 = vsel %vm1151, 1, 0
      %v1765 = vsel %vm1152, 1, 0
      %v1766 = vsel %vm1153, 1, 0
      %v1767 = vsel %vm1154, 1, 0
      %v1768 = vsel %vm1155, 1, 0
      %v1769 = vsel %vm1156, 1, 0
      %v1770 = vsel %vm1157, 1, 0
      %v1771 = vsel %vm1158, 1, 0
      %v1772 = vsel %vm1159, 1, 0
      %v1773 = vsel %vm1160, 1, 0
      %v1774 = vsel %vm1161, 1, 0
      %v1775 = vsel %vm1162, 1, 0
      %v1776 = vsel %vm1163, 1, 0
      %v1777 = vsel %vm1164, 1, 0
      %v1778 = vsel %vm1165, 1, 0
      %v1779 = vsel %vm1166, 1, 0
      %v1780 = vsel %vm1167, 1, 0
      %v1781 = vsel %vm1168, 1, 0
      %v1782 = vsel %vm1169, 1, 0
      %v1783 = vsel %vm1170, 1, 0
      %v1784 = vsel %vm1171, 1, 0
      %v1785 = vsel %vm1172, 1, 0
      %v1786 = vsel %vm1173, 1, 0
      %v1787 = vsel %vm1174, 1, 0
      %v1788 = vsel %vm1175, 1, 0
      %v1789 = vsel %vm1176, 1, 0
      %1790 = vset.pattern.permute.xlu0 0
      %1791 = vperm.xlu0 %1790, %v1758
      %v1792 = vpop.permute.xlu0 %1791
      %1793 = vset.pattern.permute.xlu0 0
      %1794 = vperm.xlu0 %1793, %v1759
      %v1795 = vpop.permute.xlu0 %1794
      %1796 = vset.pattern.permute.xlu0 0
      %1797 = vperm.xlu0 %1796, %v1760
      %v1798 = vpop.permute.xlu0 %1797
      %1799 = vset.pattern.permute.xlu0 0
      %1800 = vperm.xlu0 %1799, %v1761
      %v1801 = vpop.permute.xlu0 %1800
      %1802 = vset.pattern.permute.xlu0 0
      %1803 = vperm.xlu0 %1802, %v1762
      %v1804 = vpop.permute.xlu0 %1803
      %1805 = vset.pattern.permute.xlu0 0
      %1806 = vperm.xlu0 %1805, %v1763
      %v1807 = vpop.permute.xlu0 %1806
      %1808 = vset.pattern.permute.xlu0 0
      %1809 = vperm.xlu0 %1808, %v1764
      %v1810 = vpop.permute.xlu0 %1809
      %1811 = vset.pattern.permute.xlu0 0
      %1812 = vperm.xlu0 %1811, %v1765
      %v1813 = vpop.permute.xlu0 %1812
      %1814 = vset.pattern.permute.xlu0 0
      %1815 = vperm.xlu0 %1814, %v1766
      %v1816 = vpop.permute.xlu0 %1815
      %1817 = vset.pattern.permute.xlu0 0
      %1818 = vperm.xlu0 %1817, %v1767
      %v1819 = vpop.permute.xlu0 %1818
      %1820 = vset.pattern.permute.xlu0 0
      %1821 = vperm.xlu0 %1820, %v1768
      %v1822 = vpop.permute.xlu0 %1821
      %1823 = vset.pattern.permute.xlu0 0
      %1824 = vperm.xlu0 %1823, %v1769
      %v1825 = vpop.permute.xlu0 %1824
      %1826 = vset.pattern.permute.xlu0 0
      %1827 = vperm.xlu0 %1826, %v1770
      %v1828 = vpop.permute.xlu0 %1827
      %1829 = vset.pattern.permute.xlu0 0
      %1830 = vperm.xlu0 %1829, %v1771
      %v1831 = vpop.permute.xlu0 %1830
      %1832 = vset.pattern.permute.xlu0 0
      %1833 = vperm.xlu0 %1832, %v1772
      %v1834 = vpop.permute.xlu0 %1833
      %1835 = vset.pattern.permute.xlu0 0
      %1836 = vperm.xlu0 %1835, %v1773
      %v1837 = vpop.permute.xlu0 %1836
      %1838 = vset.pattern.permute.xlu0 0
      %1839 = vperm.xlu0 %1838, %v1774
      %v1840 = vpop.permute.xlu0 %1839
      %1841 = vset.pattern.permute.xlu0 0
      %1842 = vperm.xlu0 %1841, %v1775
      %v1843 = vpop.permute.xlu0 %1842
      %1844 = vset.pattern.permute.xlu0 0
      %1845 = vperm.xlu0 %1844, %v1776
      %v1846 = vpop.permute.xlu0 %1845
      %1847 = vset.pattern.permute.xlu0 0
      %1848 = vperm.xlu0 %1847, %v1777
      %v1849 = vpop.permute.xlu0 %1848
      %1850 = vset.pattern.permute.xlu0 0
      %1851 = vperm.xlu0 %1850, %v1778
      %v1852 = vpop.permute.xlu0 %1851
      %1853 = vset.pattern.permute.xlu0 0
      %1854 = vperm.xlu0 %1853, %v1779
      %v1855 = vpop.permute.xlu0 %1854
      %1856 = vset.pattern.permute.xlu0 0
      %1857 = vperm.xlu0 %1856, %v1780
      %v1858 = vpop.permute.xlu0 %1857
      %1859 = vset.pattern.permute.xlu0 0
      %1860 = vperm.xlu0 %1859, %v1781
      %v1861 = vpop.permute.xlu0 %1860
      %1862 = vset.pattern.permute.xlu0 0
      %1863 = vperm.xlu0 %1862, %v1782
      %v1864 = vpop.permute.xlu0 %1863
      %1865 = vset.pattern.permute.xlu0 0
      %1866 = vperm.xlu0 %1865, %v1783
      %v1867 = vpop.permute.xlu0 %1866
      %1868 = vset.pattern.permute.xlu0 0
      %1869 = vperm.xlu0 %1868, %v1784
      %v1870 = vpop.permute.xlu0 %1869
      %1871 = vset.pattern.permute.xlu0 0
      %1872 = vperm.xlu0 %1871, %v1785
      %v1873 = vpop.permute.xlu0 %1872
      %1874 = vset.pattern.permute.xlu0 0
      %1875 = vperm.xlu0 %1874, %v1786
      %v1876 = vpop.permute.xlu0 %1875
      %1877 = vset.pattern.permute.xlu0 0
      %1878 = vperm.xlu0 %1877, %v1787
      %v1879 = vpop.permute.xlu0 %1878
      %1880 = vset.pattern.permute.xlu0 0
      %1881 = vperm.xlu0 %1880, %v1788
      %v1882 = vpop.permute.xlu0 %1881
      %1883 = vset.pattern.permute.xlu0 0
      %1884 = vperm.xlu0 %1883, %v1789
      %v1885 = vpop.permute.xlu0 %1884
      %vm1886 = vcmp.eq.s32.totalorder %v1792, 1
      %vm1887 = vcmp.eq.s32.totalorder %v1795, 1
      %vm1888 = vcmp.eq.s32.totalorder %v1798, 1
      %vm1889 = vcmp.eq.s32.totalorder %v1801, 1
      %vm1890 = vcmp.eq.s32.totalorder %v1804, 1
      %vm1891 = vcmp.eq.s32.totalorder %v1807, 1
      %vm1892 = vcmp.eq.s32.totalorder %v1810, 1
      %vm1893 = vcmp.eq.s32.totalorder %v1813, 1
      %vm1894 = vcmp.eq.s32.totalorder %v1816, 1
      %vm1895 = vcmp.eq.s32.totalorder %v1819, 1
      %vm1896 = vcmp.eq.s32.totalorder %v1822, 1
      %vm1897 = vcmp.eq.s32.totalorder %v1825, 1
      %vm1898 = vcmp.eq.s32.totalorder %v1828, 1
      %vm1899 = vcmp.eq.s32.totalorder %v1831, 1
      %vm1900 = vcmp.eq.s32.totalorder %v1834, 1
      %vm1901 = vcmp.eq.s32.totalorder %v1837, 1
      %vm1902 = vcmp.eq.s32.totalorder %v1840, 1
      %vm1903 = vcmp.eq.s32.totalorder %v1843, 1
      %vm1904 = vcmp.eq.s32.totalorder %v1846, 1
      %vm1905 = vcmp.eq.s32.totalorder %v1849, 1
      %vm1906 = vcmp.eq.s32.totalorder %v1852, 1
      %vm1907 = vcmp.eq.s32.totalorder %v1855, 1
      %vm1908 = vcmp.eq.s32.totalorder %v1858, 1
      %vm1909 = vcmp.eq.s32.totalorder %v1861, 1
      %vm1910 = vcmp.eq.s32.totalorder %v1864, 1
      %vm1911 = vcmp.eq.s32.totalorder %v1867, 1
      %vm1912 = vcmp.eq.s32.totalorder %v1870, 1
      %vm1913 = vcmp.eq.s32.totalorder %v1873, 1
      %vm1914 = vcmp.eq.s32.totalorder %v1876, 1
      %vm1915 = vcmp.eq.s32.totalorder %v1879, 1
      %vm1916 = vcmp.eq.s32.totalorder %v1882, 1
      %vm1917 = vcmp.eq.s32.totalorder %v1885, 1
      %v1918 = vsel %vm1886, %v1632, 0.0
      %v1919 = vsel %vm1887, %v1635, 0.0
      %v1920 = vsel %vm1888, %v1640, 0.0
      %v1921 = vsel %vm1889, %v1643, 0.0
      %v1922 = vsel %vm1890, %v1648, 0.0
      %v1923 = vsel %vm1891, %v1651, 0.0
      %v1924 = vsel %vm1892, %v1656, 0.0
      %v1925 = vsel %vm1893, %v1659, 0.0
      %v1926 = vsel %vm1894, %v1664, 0.0
      %v1927 = vsel %vm1895, %v1667, 0.0
      %v1928 = vsel %vm1896, %v1672, 0.0
      %v1929 = vsel %vm1897, %v1675, 0.0
      %v1930 = vsel %vm1898, %v1680, 0.0
      %v1931 = vsel %vm1899, %v1683, 0.0
      %v1932 = vsel %vm1900, %v1688, 0.0
      %v1933 = vsel %vm1901, %v1691, 0.0
      %v1934 = vsel %vm1902, %v1696, 0.0
      %v1935 = vsel %vm1903, %v1699, 0.0
      %v1936 = vsel %vm1904, %v1704, 0.0
      %v1937 = vsel %vm1905, %v1707, 0.0
      %v1938 = vsel %vm1906, %v1712, 0.0
      %v1939 = vsel %vm1907, %v1715, 0.0
      %v1940 = vsel %vm1908, %v1720, 0.0
      %v1941 = vsel %vm1909, %v1723, 0.0
      %v1942 = vsel %vm1910, %v1728, 0.0
      %v1943 = vsel %vm1911, %v1731, 0.0
      %v1944 = vsel %vm1912, %v1736, 0.0
      %v1945 = vsel %vm1913, %v1739, 0.0
      %v1946 = vsel %vm1914, %v1744, 0.0
      %v1947 = vsel %vm1915, %v1747, 0.0
      %v1948 = vsel %vm1916, %v1752, 0.0
      %v1949 = vsel %vm1917, %v1755, 0.0
      %v1950 = vadd.f32 %v1216, %v1918
      %v1951 = vadd.f32 %v1217, %v1919
      %v1952 = vadd.f32 %v1218, %v1920
      %v1953 = vadd.f32 %v1219, %v1921
      %v1954 = vadd.f32 %v1220, %v1922
      %v1955 = vadd.f32 %v1221, %v1923
      %v1956 = vadd.f32 %v1222, %v1924
      %v1957 = vadd.f32 %v1223, %v1925
      %v1958 = vadd.f32 %v1224, %v1926
      %v1959 = vadd.f32 %v1225, %v1927
      %v1960 = vadd.f32 %v1226, %v1928
      %v1961 = vadd.f32 %v1227, %v1929
      %v1962 = vadd.f32 %v1228, %v1930
      %v1963 = vadd.f32 %v1229, %v1931
      %v1964 = vadd.f32 %v1230, %v1932
      %v1965 = vadd.f32 %v1231, %v1933
      %v1966 = vadd.f32 %v1232, %v1934
      %v1967 = vadd.f32 %v1233, %v1935
      %v1968 = vadd.f32 %v1234, %v1936
      %v1969 = vadd.f32 %v1235, %v1937
      %v1970 = vadd.f32 %v1236, %v1938
      %v1971 = vadd.f32 %v1237, %v1939
      %v1972 = vadd.f32 %v1238, %v1940
      %v1973 = vadd.f32 %v1239, %v1941
      %v1974 = vadd.f32 %v1240, %v1942
      %v1975 = vadd.f32 %v1241, %v1943
      %v1976 = vadd.f32 %v1242, %v1944
      %v1977 = vadd.f32 %v1243, %v1945
      %v1978 = vadd.f32 %v1244, %v1946
      %v1979 = vadd.f32 %v1245, %v1947
      %v1980 = vadd.f32 %v1246, %v1948
      %v1981 = vadd.f32 %v1247, %v1949
      %s1982 = scalar_lea.vmem %s5, 64
      %v1983 = vld [vmem:[%s1982] sm:$0xf]
      %v1984 = vld [vmem:[%s1982 + $0x4] sm:$0xf]
      %v1985 = vld [vmem:[%s1982 + $0x8] sm:$0xf]
      %v1986 = vld [vmem:[%s1982 + $0xc] sm:$0xf]
      %v1987 = vld [vmem:[%s1982 + $0x10] sm:$0xf]
      %v1988 = vld [vmem:[%s1982 + $0x14] sm:$0xf]
      %v1989 = vld [vmem:[%s1982 + $0x18] sm:$0xf]
      %v1990 = vld [vmem:[%s1982 + $0x1c] sm:$0xf]
      %v1991 = vld [vmem:[%s1982 + $0x20] sm:$0xf]
      %v1992 = vld [vmem:[%s1982 + $0x24] sm:$0xf]
      %v1993 = vld [vmem:[%s1982 + $0x28] sm:$0xf]
      %v1994 = vld [vmem:[%s1982 + $0x2c] sm:$0xf]
      %v1995 = vld [vmem:[%s1982 + $0x30] sm:$0xf]
      %v1996 = vld [vmem:[%s1982 + $0x34] sm:$0xf]
      %v1997 = vld [vmem:[%s1982 + $0x38] sm:$0xf]
      %v1998 = vld [vmem:[%s1982 + $0x3c] sm:$0xf]
      %v1999 = vpack.c.b16 %v1332, %v1331
      %v2000 = vpack.c.b16 %v1334, %v1333
      %v2001 = vpack.c.b16 %v1336, %v1335
      %v2002 = vpack.c.b16 %v1338, %v1337
      %v2003 = vpack.c.b16 %v1340, %v1339
      %v2004 = vpack.c.b16 %v1342, %v1341
      %v2005 = vpack.c.b16 %v1344, %v1343
      %v2006 = vpack.c.b16 %v1346, %v1345
      %v2007 = vpack.c.b16 %v1348, %v1347
      %v2008 = vpack.c.b16 %v1350, %v1349
      %v2009 = vpack.c.b16 %v1352, %v1351
      %v2010 = vpack.c.b16 %v1354, %v1353
      %v2011 = vpack.c.b16 %v1356, %v1355
      %v2012 = vpack.c.b16 %v1358, %v1357
      %v2013 = vpack.c.b16 %v1360, %v1359
      %v2014 = vpack.c.b16 %v1362, %v1361
      %v2047 = vunpack.c.l.b16 %v1983
      %v2048 = vunpack.c.l.b16 %v1984
      %v2049 = vunpack.c.l.b16 %v1985
      %v2050 = vunpack.c.l.b16 %v1986
      %v2051 = vunpack.c.l.b16 %v1987
      %v2052 = vunpack.c.l.b16 %v1988
      %v2053 = vunpack.c.l.b16 %v1989
      %v2054 = vunpack.c.l.b16 %v1990
      %v2055 = vunpack.c.l.b16 %v1991
      %v2056 = vunpack.c.l.b16 %v1992
      %v2057 = vunpack.c.l.b16 %v1993
      %v2058 = vunpack.c.l.b16 %v1994
      %v2059 = vunpack.c.l.b16 %v1995
      %v2060 = vunpack.c.l.b16 %v1996
      %v2061 = vunpack.c.l.b16 %v1997
      %v2062 = vunpack.c.l.b16 %v1998
      %v2063 = vpack.c.b16 %v2048, %v2047
      %v2064 = vpack.c.b16 %v2050, %v2049
      %v2065 = vpack.c.b16 %v2052, %v2051
      %v2066 = vpack.c.b16 %v2054, %v2053
      %v2067 = vpack.c.b16 %v2056, %v2055
      %v2068 = vpack.c.b16 %v2058, %v2057
      %v2069 = vpack.c.b16 %v2060, %v2059
      %v2070 = vpack.c.b16 %v2062, %v2061
      %2079 = vmatprep.subr.bf16.mxu0 0
      %2080 = vmatpush1.bf16.msra.mxu0 %v2070
      %2081 = vmatprep.subr.bf16.mxu0 0
      %2082 = vmatpush1.bf16.msra.mxu0 %v2069
      %2083 = vmatprep.subr.bf16.mxu0 0
      %2084 = vmatpush1.bf16.msra.mxu0 %v2068
      %2085 = vmatprep.subr.bf16.mxu0 0
      %2086 = vmatpush1.bf16.msra.mxu0 %v2067
      %2087 = vmatprep.subr.bf16.mxu0 0
      %2088 = vmatpush1.bf16.msra.mxu0 %v2066
      %2089 = vmatprep.subr.bf16.mxu0 0
      %2090 = vmatpush1.bf16.msra.mxu0 %v2065
      %2091 = vmatprep.subr.bf16.mxu0 0
      %2092 = vmatpush1.bf16.msra.mxu0 %v2064
      %2093 = vmatprep.subr.bf16.mxu0 0
      %2094 = vmatpush1.bf16.msra.mxu0 %v2063
      %2095 = vmatprep.subr.bf16.mxu0 0
      %2096 = vmatpush2.bf16.msra.mxu0 0
      %2097 = vmatprep.subr.bf16.mxu0 0
      %2098 = vmatpush2.bf16.msra.mxu0 0
      %2099 = vmatprep.subr.bf16.mxu0 0
      %2100 = vmatpush2.bf16.msra.mxu0 0
      %2101 = vmatprep.subr.bf16.mxu0 0
      %2102 = vmatpush2.bf16.msra.mxu0 0
      %2103 = vmatprep.subr.bf16.mxu0 0
      %2104 = vmatpush2.bf16.msra.mxu0 0
      %2105 = vmatprep.subr.bf16.mxu0 0
      %2106 = vmatpush2.bf16.msra.mxu0 0
      %2107 = vmatprep.subr.bf16.mxu0 0
      %2108 = vmatpush2.bf16.msra.mxu0 0
      %2109 = vmatprep.subr.bf16.mxu0 0
      %2110 = vmatpush2.bf16.msra.mxu0 0
      %2111 = vmatprep.mubr.bf16.mxu0 0
      %2112 = vmatmul.mubr.bf16.gmra.mxu0 %v1999
      %v2113 = vpop.f32.mrf.mxu0
      %v2114 = vadd.f32 0.0, %v2113
      %v2115 = vpop.f32.mrf.mxu0
      %v2116 = vpop.f32.mrf.mxu0
      %v2117 = vadd.f32 0.0, %v2116
      %v2118 = vpop.f32.mrf.mxu0
      %2119 = vmatprep.mubr.bf16.mxu0 0
      %2120 = vmatmul.mubr.bf16.gmra.mxu0 %v2000
      %v2121 = vpop.f32.mrf.mxu0
      %v2122 = vadd.f32 0.0, %v2121
      %v2123 = vpop.f32.mrf.mxu0
      %v2124 = vpop.f32.mrf.mxu0
      %v2125 = vadd.f32 0.0, %v2124
      %v2126 = vpop.f32.mrf.mxu0
      %2127 = vmatprep.mubr.bf16.mxu0 0
      %2128 = vmatmul.mubr.bf16.gmra.mxu0 %v2001
      %v2129 = vpop.f32.mrf.mxu0
      %v2130 = vadd.f32 0.0, %v2129
      %v2131 = vpop.f32.mrf.mxu0
      %v2132 = vpop.f32.mrf.mxu0
      %v2133 = vadd.f32 0.0, %v2132
      %v2134 = vpop.f32.mrf.mxu0
      %2135 = vmatprep.mubr.bf16.mxu0 0
      %2136 = vmatmul.mubr.bf16.gmra.mxu0 %v2002
      %v2137 = vpop.f32.mrf.mxu0
      %v2138 = vadd.f32 0.0, %v2137
      %v2139 = vpop.f32.mrf.mxu0
      %v2140 = vpop.f32.mrf.mxu0
      %v2141 = vadd.f32 0.0, %v2140
      %v2142 = vpop.f32.mrf.mxu0
      %2143 = vmatprep.mubr.bf16.mxu0 0
      %2144 = vmatmul.mubr.bf16.gmra.mxu0 %v2003
      %v2145 = vpop.f32.mrf.mxu0
      %v2146 = vadd.f32 0.0, %v2145
      %v2147 = vpop.f32.mrf.mxu0
      %v2148 = vpop.f32.mrf.mxu0
      %v2149 = vadd.f32 0.0, %v2148
      %v2150 = vpop.f32.mrf.mxu0
      %2151 = vmatprep.mubr.bf16.mxu0 0
      %2152 = vmatmul.mubr.bf16.gmra.mxu0 %v2004
      %v2153 = vpop.f32.mrf.mxu0
      %v2154 = vadd.f32 0.0, %v2153
      %v2155 = vpop.f32.mrf.mxu0
      %v2156 = vpop.f32.mrf.mxu0
      %v2157 = vadd.f32 0.0, %v2156
      %v2158 = vpop.f32.mrf.mxu0
      %2159 = vmatprep.mubr.bf16.mxu0 0
      %2160 = vmatmul.mubr.bf16.gmra.mxu0 %v2005
      %v2161 = vpop.f32.mrf.mxu0
      %v2162 = vadd.f32 0.0, %v2161
      %v2163 = vpop.f32.mrf.mxu0
      %v2164 = vpop.f32.mrf.mxu0
      %v2165 = vadd.f32 0.0, %v2164
      %v2166 = vpop.f32.mrf.mxu0
      %2167 = vmatprep.mubr.bf16.mxu0 0
      %2168 = vmatmul.mubr.bf16.gmra.mxu0 %v2006
      %v2169 = vpop.f32.mrf.mxu0
      %v2170 = vadd.f32 0.0, %v2169
      %v2171 = vpop.f32.mrf.mxu0
      %v2172 = vpop.f32.mrf.mxu0
      %v2173 = vadd.f32 0.0, %v2172
      %v2174 = vpop.f32.mrf.mxu0
      %2175 = vmatprep.mubr.bf16.mxu0 0
      %2176 = vmatmul.mubr.bf16.gmra.mxu0 %v2007
      %v2177 = vpop.f32.mrf.mxu0
      %v2178 = vadd.f32 0.0, %v2177
      %v2179 = vpop.f32.mrf.mxu0
      %v2180 = vpop.f32.mrf.mxu0
      %v2181 = vadd.f32 0.0, %v2180
      %v2182 = vpop.f32.mrf.mxu0
      %2183 = vmatprep.mubr.bf16.mxu0 0
      %2184 = vmatmul.mubr.bf16.gmra.mxu0 %v2008
      %v2185 = vpop.f32.mrf.mxu0
      %v2186 = vadd.f32 0.0, %v2185
      %v2187 = vpop.f32.mrf.mxu0
      %v2188 = vpop.f32.mrf.mxu0
      %v2189 = vadd.f32 0.0, %v2188
      %v2190 = vpop.f32.mrf.mxu0
      %2191 = vmatprep.mubr.bf16.mxu0 0
      %2192 = vmatmul.mubr.bf16.gmra.mxu0 %v2009
      %v2193 = vpop.f32.mrf.mxu0
      %v2194 = vadd.f32 0.0, %v2193
      %v2195 = vpop.f32.mrf.mxu0
      %v2196 = vpop.f32.mrf.mxu0
      %v2197 = vadd.f32 0.0, %v2196
      %v2198 = vpop.f32.mrf.mxu0
      %2199 = vmatprep.mubr.bf16.mxu0 0
      %2200 = vmatmul.mubr.bf16.gmra.mxu0 %v2010
      %v2201 = vpop.f32.mrf.mxu0
      %v2202 = vadd.f32 0.0, %v2201
      %v2203 = vpop.f32.mrf.mxu0
      %v2204 = vpop.f32.mrf.mxu0
      %v2205 = vadd.f32 0.0, %v2204
      %v2206 = vpop.f32.mrf.mxu0
      %2207 = vmatprep.mubr.bf16.mxu0 0
      %2208 = vmatmul.mubr.bf16.gmra.mxu0 %v2011
      %v2209 = vpop.f32.mrf.mxu0
      %v2210 = vadd.f32 0.0, %v2209
      %v2211 = vpop.f32.mrf.mxu0
      %v2212 = vpop.f32.mrf.mxu0
      %v2213 = vadd.f32 0.0, %v2212
      %v2214 = vpop.f32.mrf.mxu0
      %2215 = vmatprep.mubr.bf16.mxu0 0
      %2216 = vmatmul.mubr.bf16.gmra.mxu0 %v2012
      %v2217 = vpop.f32.mrf.mxu0
      %v2218 = vadd.f32 0.0, %v2217
      %v2219 = vpop.f32.mrf.mxu0
      %v2220 = vpop.f32.mrf.mxu0
      %v2221 = vadd.f32 0.0, %v2220
      %v2222 = vpop.f32.mrf.mxu0
      %2223 = vmatprep.mubr.bf16.mxu0 0
      %2224 = vmatmul.mubr.bf16.gmra.mxu0 %v2013
      %v2225 = vpop.f32.mrf.mxu0
      %v2226 = vadd.f32 0.0, %v2225
      %v2227 = vpop.f32.mrf.mxu0
      %v2228 = vpop.f32.mrf.mxu0
      %v2229 = vadd.f32 0.0, %v2228
      %v2230 = vpop.f32.mrf.mxu0
      %2231 = vmatprep.mubr.bf16.mxu0 0
      %2232 = vmatmul.mubr.bf16.gmra.mxu0 %v2014
      %v2233 = vpop.f32.mrf.mxu0
      %v2234 = vadd.f32 0.0, %v2233
      %v2235 = vpop.f32.mrf.mxu0
      %v2236 = vpop.f32.mrf.mxu0
      %v2237 = vadd.f32 0.0, %v2236
      %v2238 = vpop.f32.mrf.mxu0
      %2239 = vdwg.mxu0
      %v2240 = vadd.f32 %v1950, %v2114
      %v2241 = vadd.f32 %v1951, %v2117
      %v2242 = vadd.f32 %v1952, %v2122
      %v2243 = vadd.f32 %v1953, %v2125
      %v2244 = vadd.f32 %v1954, %v2130
      %v2245 = vadd.f32 %v1955, %v2133
      %v2246 = vadd.f32 %v1956, %v2138
      %v2247 = vadd.f32 %v1957, %v2141
      %v2248 = vadd.f32 %v1958, %v2146
      %v2249 = vadd.f32 %v1959, %v2149
      %v2250 = vadd.f32 %v1960, %v2154
      %v2251 = vadd.f32 %v1961, %v2157
      %v2252 = vadd.f32 %v1962, %v2162
      %v2253 = vadd.f32 %v1963, %v2165
      %v2254 = vadd.f32 %v1964, %v2170
      %v2255 = vadd.f32 %v1965, %v2173
      %v2256 = vadd.f32 %v1966, %v2178
      %v2257 = vadd.f32 %v1967, %v2181
      %v2258 = vadd.f32 %v1968, %v2186
      %v2259 = vadd.f32 %v1969, %v2189
      %v2260 = vadd.f32 %v1970, %v2194
      %v2261 = vadd.f32 %v1971, %v2197
      %v2262 = vadd.f32 %v1972, %v2202
      %v2263 = vadd.f32 %v1973, %v2205
      %v2264 = vadd.f32 %v1974, %v2210
      %v2265 = vadd.f32 %v1975, %v2213
      %v2266 = vadd.f32 %v1976, %v2218
      %v2267 = vadd.f32 %v1977, %v2221
      %v2268 = vadd.f32 %v1978, %v2226
      %v2269 = vadd.f32 %v1979, %v2229
      %v2270 = vadd.f32 %v1980, %v2234
      %v2271 = vadd.f32 %v1981, %v2237
      %v2272 = vld [vmem:[#allocation2 + $0x8] sm:$0xf]
      %v2273 = vld [vmem:[#allocation2 + $0xc] sm:$0xf]
      %v2274 = vld [vmem:[#allocation2 + $0x10] sm:$0xf]
      %v2275 = vld [vmem:[#allocation2 + $0x14] sm:$0xf]
      %v2276 = vld [vmem:[#allocation2 + $0x18] sm:$0xf]
      %v2277 = vld [vmem:[#allocation2 + $0x1c] sm:$0xf]
      %v2278 = vld [vmem:[#allocation2 + $0x20] sm:$0xf]
      %v2279 = vld [vmem:[#allocation2 + $0x24] sm:$0xf]
      %v2280 = vld [vmem:[#allocation2 + $0x28] sm:$0xf]
      %v2281 = vld [vmem:[#allocation2 + $0x2c] sm:$0xf]
      %v2282 = vld [vmem:[#allocation2 + $0x30] sm:$0xf]
      %v2283 = vld [vmem:[#allocation2 + $0x34] sm:$0xf]
      %v2284 = vld [vmem:[#allocation2 + $0x38] sm:$0xf]
      %v2285 = vld [vmem:[#allocation2 + $0x3c] sm:$0xf]
      %v2286 = vld [vmem:[#allocation2 + $0x40] sm:$0xf]
      %v2287 = vld [vmem:[#allocation2 + $0x44] sm:$0xf]
      %v2288 = vld [vmem:[#allocation2 + $0x48] sm:$0xf]
      %v2289 = vld [vmem:[#allocation2 + $0x4c] sm:$0xf]
      %v2290 = vld [vmem:[#allocation2 + $0x50] sm:$0xf]
      %v2291 = vld [vmem:[#allocation2 + $0x54] sm:$0xf]
      %v2292 = vld [vmem:[#allocation2 + $0x58] sm:$0xf]
      %v2293 = vld [vmem:[#allocation2 + $0x5c] sm:$0xf]
      %v2294 = vld [vmem:[#allocation2 + $0x60] sm:$0xf]
      %v2295 = vld [vmem:[#allocation2 + $0x64] sm:$0xf]
      %v2296 = vld [vmem:[#allocation2 + $0x68] sm:$0xf]
      %v2297 = vld [vmem:[#allocation2 + $0x6c] sm:$0xf]
      %v2298 = vld [vmem:[#allocation2 + $0x70] sm:$0xf]
      %v2299 = vld [vmem:[#allocation2 + $0x74] sm:$0xf]
      %v2300 = vld [vmem:[#allocation2 + $0x78] sm:$0xf]
      %v2301 = vld [vmem:[#allocation2 + $0x7c] sm:$0xf]
      %v2302 = vld [vmem:[#allocation2 + $0x80] sm:$0xf]
      %v2303 = vld [vmem:[#allocation2 + $0x84] sm:$0xf]
      %v2304 = vld [vmem:[#allocation2 + $0x88] sm:$0x1]
      %s2305 = scalar_lea.vmem %s5, 128
      %v2306 = vld [vmem:[%s2305] sm:$0xf]
      %v2307 = vld [vmem:[%s2305 + $0x4] sm:$0xf]
      %v2308 = vld [vmem:[%s2305 + $0x8] sm:$0xf]
      %v2309 = vld [vmem:[%s2305 + $0xc] sm:$0xf]
      %v2310 = vld [vmem:[%s2305 + $0x10] sm:$0xf]
      %v2311 = vld [vmem:[%s2305 + $0x14] sm:$0xf]
      %v2312 = vld [vmem:[%s2305 + $0x18] sm:$0xf]
      %v2313 = vld [vmem:[%s2305 + $0x1c] sm:$0xf]
      %v2314 = vld [vmem:[%s2305 + $0x20] sm:$0xf]
      %v2315 = vld [vmem:[%s2305 + $0x24] sm:$0xf]
      %v2316 = vld [vmem:[%s2305 + $0x28] sm:$0xf]
      %v2317 = vld [vmem:[%s2305 + $0x2c] sm:$0xf]
      %v2318 = vld [vmem:[%s2305 + $0x30] sm:$0xf]
      %v2319 = vld [vmem:[%s2305 + $0x34] sm:$0xf]
      %v2320 = vld [vmem:[%s2305 + $0x38] sm:$0xf]
      %v2321 = vld [vmem:[%s2305 + $0x3c] sm:$0xf]
      %v2355 = vunpack.c.l.b16 %v2272
      %v2356 = vunpack.c.l.b16 %v2273
      %v2357 = vunpack.c.l.b16 %v2274
      %v2358 = vunpack.c.l.b16 %v2275
      %v2359 = vunpack.c.l.b16 %v2276
      %v2360 = vunpack.c.l.b16 %v2277
      %v2361 = vunpack.c.l.b16 %v2278
      %v2362 = vunpack.c.l.b16 %v2279
      %v2363 = vunpack.c.l.b16 %v2280
      %v2364 = vunpack.c.l.b16 %v2281
      %v2365 = vunpack.c.l.b16 %v2282
      %v2366 = vunpack.c.l.b16 %v2283
      %v2367 = vunpack.c.l.b16 %v2284
      %v2368 = vunpack.c.l.b16 %v2285
      %v2369 = vunpack.c.l.b16 %v2286
      %v2370 = vunpack.c.l.b16 %v2287
      %v2371 = vunpack.c.l.b16 %v2288
      %v2372 = vunpack.c.l.b16 %v2289
      %v2373 = vunpack.c.l.b16 %v2290
      %v2374 = vunpack.c.l.b16 %v2291
      %v2375 = vunpack.c.l.b16 %v2292
      %v2376 = vunpack.c.l.b16 %v2293
      %v2377 = vunpack.c.l.b16 %v2294
      %v2378 = vunpack.c.l.b16 %v2295
      %v2379 = vunpack.c.l.b16 %v2296
      %v2380 = vunpack.c.l.b16 %v2297
      %v2381 = vunpack.c.l.b16 %v2298
      %v2382 = vunpack.c.l.b16 %v2299
      %v2383 = vunpack.c.l.b16 %v2300
      %v2384 = vunpack.c.l.b16 %v2301
      %v2385 = vunpack.c.l.b16 %v2302
      %v2386 = vunpack.c.l.b16 %v2303
      %v2387 = vunpack.c.l.b16 %v2304
      %v2388 = vpack.c.b16 %v2356, %v2355
      %v2389 = vpack.c.b16 %v2358, %v2357
      %v2390 = vpack.c.b16 %v2360, %v2359
      %v2391 = vpack.c.b16 %v2362, %v2361
      %v2392 = vpack.c.b16 %v2364, %v2363
      %v2393 = vpack.c.b16 %v2366, %v2365
      %v2394 = vpack.c.b16 %v2368, %v2367
      %v2395 = vpack.c.b16 %v2370, %v2369
      %v2396 = vpack.c.b16 %v2372, %v2371
      %v2397 = vpack.c.b16 %v2374, %v2373
      %v2398 = vpack.c.b16 %v2376, %v2375
      %v2399 = vpack.c.b16 %v2378, %v2377
      %v2400 = vpack.c.b16 %v2380, %v2379
      %v2401 = vpack.c.b16 %v2382, %v2381
      %v2402 = vpack.c.b16 %v2384, %v2383
      %v2403 = vpack.c.b16 %v2386, %v2385
      %v2404 = vpack.c.b16 %v2387, %v2387
      %vm2405 = vsmask.f32 7424
      %v2407 = vshrl.u32 %v2388, 16
      %v2409 = vshll.u32 %v2388, 16
      %v2411 = vrot.slane %v2409, 1
      %v2412 = vor.u32 %v2407, %v2411
      %v2414 = vshll.u32 %v2389, 16
      %v2416 = vrot.slane %v2414, 1
      %v2417 = vsel %vm2405, %v2412, %v2416
      %v2418 = vshrl.u32 %v2389, 16
      %v2420 = vor.u32 %v2418, %v2416
      %v2422 = vshll.u32 %v2390, 16
      %v2424 = vrot.slane %v2422, 1
      %v2425 = vsel %vm2405, %v2420, %v2424
      %v2426 = vshrl.u32 %v2390, 16
      %v2428 = vor.u32 %v2426, %v2424
      %v2430 = vshll.u32 %v2391, 16
      %v2432 = vrot.slane %v2430, 1
      %v2433 = vsel %vm2405, %v2428, %v2432
      %v2434 = vshrl.u32 %v2391, 16
      %v2436 = vor.u32 %v2434, %v2432
      %v2438 = vshll.u32 %v2392, 16
      %v2440 = vrot.slane %v2438, 1
      %v2441 = vsel %vm2405, %v2436, %v2440
      %v2442 = vshrl.u32 %v2392, 16
      %v2444 = vor.u32 %v2442, %v2440
      %v2446 = vshll.u32 %v2393, 16
      %v2448 = vrot.slane %v2446, 1
      %v2449 = vsel %vm2405, %v2444, %v2448
      %v2450 = vshrl.u32 %v2393, 16
      %v2452 = vor.u32 %v2450, %v2448
      %v2454 = vshll.u32 %v2394, 16
      %v2456 = vrot.slane %v2454, 1
      %v2457 = vsel %vm2405, %v2452, %v2456
      %v2458 = vshrl.u32 %v2394, 16
      %v2460 = vor.u32 %v2458, %v2456
      %v2462 = vshll.u32 %v2395, 16
      %v2464 = vrot.slane %v2462, 1
      %v2465 = vsel %vm2405, %v2460, %v2464
      %v2466 = vshrl.u32 %v2395, 16
      %v2468 = vor.u32 %v2466, %v2464
      %v2470 = vshll.u32 %v2396, 16
      %v2472 = vrot.slane %v2470, 1
      %v2473 = vsel %vm2405, %v2468, %v2472
      %v2474 = vshrl.u32 %v2396, 16
      %v2476 = vor.u32 %v2474, %v2472
      %v2478 = vshll.u32 %v2397, 16
      %v2480 = vrot.slane %v2478, 1
      %v2481 = vsel %vm2405, %v2476, %v2480
      %v2482 = vshrl.u32 %v2397, 16
      %v2484 = vor.u32 %v2482, %v2480
      %v2486 = vshll.u32 %v2398, 16
      %v2488 = vrot.slane %v2486, 1
      %v2489 = vsel %vm2405, %v2484, %v2488
      %v2490 = vshrl.u32 %v2398, 16
      %v2492 = vor.u32 %v2490, %v2488
      %v2494 = vshll.u32 %v2399, 16
      %v2496 = vrot.slane %v2494, 1
      %v2497 = vsel %vm2405, %v2492, %v2496
      %v2498 = vshrl.u32 %v2399, 16
      %v2500 = vor.u32 %v2498, %v2496
      %v2502 = vshll.u32 %v2400, 16
      %v2504 = vrot.slane %v2502, 1
      %v2505 = vsel %vm2405, %v2500, %v2504
      %v2506 = vshrl.u32 %v2400, 16
      %v2508 = vor.u32 %v2506, %v2504
      %v2510 = vshll.u32 %v2401, 16
      %v2512 = vrot.slane %v2510, 1
      %v2513 = vsel %vm2405, %v2508, %v2512
      %v2514 = vshrl.u32 %v2401, 16
      %v2516 = vor.u32 %v2514, %v2512
      %v2518 = vshll.u32 %v2402, 16
      %v2520 = vrot.slane %v2518, 1
      %v2521 = vsel %vm2405, %v2516, %v2520
      %v2522 = vshrl.u32 %v2402, 16
      %v2524 = vor.u32 %v2522, %v2520
      %v2526 = vshll.u32 %v2403, 16
      %v2528 = vrot.slane %v2526, 1
      %v2529 = vsel %vm2405, %v2524, %v2528
      %v2530 = vshrl.u32 %v2403, 16
      %v2532 = vor.u32 %v2530, %v2528
      %v2534 = vshll.u32 %v2404, 16
      %v2536 = vrot.slane %v2534, 1
      %v2537 = vsel %vm2405, %v2532, %v2536
      %v2570 = vunpack.c.l.b16 %v2306
      %v2571 = vunpack.c.l.b16 %v2307
      %v2572 = vunpack.c.l.b16 %v2308
      %v2573 = vunpack.c.l.b16 %v2309
      %v2574 = vunpack.c.l.b16 %v2310
      %v2575 = vunpack.c.l.b16 %v2311
      %v2576 = vunpack.c.l.b16 %v2312
      %v2577 = vunpack.c.l.b16 %v2313
      %v2578 = vunpack.c.l.b16 %v2314
      %v2579 = vunpack.c.l.b16 %v2315
      %v2580 = vunpack.c.l.b16 %v2316
      %v2581 = vunpack.c.l.b16 %v2317
      %v2582 = vunpack.c.l.b16 %v2318
      %v2583 = vunpack.c.l.b16 %v2319
      %v2584 = vunpack.c.l.b16 %v2320
      %v2585 = vunpack.c.l.b16 %v2321
      %v2586 = vpack.c.b16 %v2571, %v2570
      %v2587 = vpack.c.b16 %v2573, %v2572
      %v2588 = vpack.c.b16 %v2575, %v2574
      %v2589 = vpack.c.b16 %v2577, %v2576
      %v2590 = vpack.c.b16 %v2579, %v2578
      %v2591 = vpack.c.b16 %v2581, %v2580
      %v2592 = vpack.c.b16 %v2583, %v2582
      %v2593 = vpack.c.b16 %v2585, %v2584
      %2602 = vmatprep.subr.bf16.mxu0 0
      %2603 = vmatpush1.bf16.msra.mxu0 %v2593
      %2604 = vmatprep.subr.bf16.mxu0 0
      %2605 = vmatpush1.bf16.msra.mxu0 %v2592
      %2606 = vmatprep.subr.bf16.mxu0 0
      %2607 = vmatpush1.bf16.msra.mxu0 %v2591
      %2608 = vmatprep.subr.bf16.mxu0 0
      %2609 = vmatpush1.bf16.msra.mxu0 %v2590
      %2610 = vmatprep.subr.bf16.mxu0 0
      %2611 = vmatpush1.bf16.msra.mxu0 %v2589
      %2612 = vmatprep.subr.bf16.mxu0 0
      %2613 = vmatpush1.bf16.msra.mxu0 %v2588
      %2614 = vmatprep.subr.bf16.mxu0 0
      %2615 = vmatpush1.bf16.msra.mxu0 %v2587
      %2616 = vmatprep.subr.bf16.mxu0 0
      %2617 = vmatpush1.bf16.msra.mxu0 %v2586
      %2618 = vmatprep.subr.bf16.mxu0 0
      %2619 = vmatpush2.bf16.msra.mxu0 0
      %2620 = vmatprep.subr.bf16.mxu0 0
      %2621 = vmatpush2.bf16.msra.mxu0 0
      %2622 = vmatprep.subr.bf16.mxu0 0
      %2623 = vmatpush2.bf16.msra.mxu0 0
      %2624 = vmatprep.subr.bf16.mxu0 0
      %2625 = vmatpush2.bf16.msra.mxu0 0
      %2626 = vmatprep.subr.bf16.mxu0 0
      %2627 = vmatpush2.bf16.msra.mxu0 0
      %2628 = vmatprep.subr.bf16.mxu0 0
      %2629 = vmatpush2.bf16.msra.mxu0 0
      %2630 = vmatprep.subr.bf16.mxu0 0
      %2631 = vmatpush2.bf16.msra.mxu0 0
      %2632 = vmatprep.subr.bf16.mxu0 0
      %2633 = vmatpush2.bf16.msra.mxu0 0
      %2634 = vmatprep.mubr.bf16.mxu0 0
      %2635 = vmatmul.mubr.bf16.gmra.mxu0 %v2417
      %v2636 = vpop.f32.mrf.mxu0
      %v2637 = vadd.f32 0.0, %v2636
      %v2638 = vpop.f32.mrf.mxu0
      %v2639 = vpop.f32.mrf.mxu0
      %v2640 = vadd.f32 0.0, %v2639
      %v2641 = vpop.f32.mrf.mxu0
      %2642 = vmatprep.mubr.bf16.mxu0 0
      %2643 = vmatmul.mubr.bf16.gmra.mxu0 %v2425
      %v2644 = vpop.f32.mrf.mxu0
      %v2645 = vadd.f32 0.0, %v2644
      %v2646 = vpop.f32.mrf.mxu0
      %v2647 = vpop.f32.mrf.mxu0
      %v2648 = vadd.f32 0.0, %v2647
      %v2649 = vpop.f32.mrf.mxu0
      %2650 = vmatprep.mubr.bf16.mxu0 0
      %2651 = vmatmul.mubr.bf16.gmra.mxu0 %v2433
      %v2652 = vpop.f32.mrf.mxu0
      %v2653 = vadd.f32 0.0, %v2652
      %v2654 = vpop.f32.mrf.mxu0
      %v2655 = vpop.f32.mrf.mxu0
      %v2656 = vadd.f32 0.0, %v2655
      %v2657 = vpop.f32.mrf.mxu0
      %2658 = vmatprep.mubr.bf16.mxu0 0
      %2659 = vmatmul.mubr.bf16.gmra.mxu0 %v2441
      %v2660 = vpop.f32.mrf.mxu0
      %v2661 = vadd.f32 0.0, %v2660
      %v2662 = vpop.f32.mrf.mxu0
      %v2663 = vpop.f32.mrf.mxu0
      %v2664 = vadd.f32 0.0, %v2663
      %v2665 = vpop.f32.mrf.mxu0
      %2666 = vmatprep.mubr.bf16.mxu0 0
      %2667 = vmatmul.mubr.bf16.gmra.mxu0 %v2449
      %v2668 = vpop.f32.mrf.mxu0
      %v2669 = vadd.f32 0.0, %v2668
      %v2670 = vpop.f32.mrf.mxu0
      %v2671 = vpop.f32.mrf.mxu0
      %v2672 = vadd.f32 0.0, %v2671
      %v2673 = vpop.f32.mrf.mxu0
      %2674 = vmatprep.mubr.bf16.mxu0 0
      %2675 = vmatmul.mubr.bf16.gmra.mxu0 %v2457
      %v2676 = vpop.f32.mrf.mxu0
      %v2677 = vadd.f32 0.0, %v2676
      %v2678 = vpop.f32.mrf.mxu0
      %v2679 = vpop.f32.mrf.mxu0
      %v2680 = vadd.f32 0.0, %v2679
      %v2681 = vpop.f32.mrf.mxu0
      %2682 = vmatprep.mubr.bf16.mxu0 0
      %2683 = vmatmul.mubr.bf16.gmra.mxu0 %v2465
      %v2684 = vpop.f32.mrf.mxu0
      %v2685 = vadd.f32 0.0, %v2684
      %v2686 = vpop.f32.mrf.mxu0
      %v2687 = vpop.f32.mrf.mxu0
      %v2688 = vadd.f32 0.0, %v2687
      %v2689 = vpop.f32.mrf.mxu0
      %2690 = vmatprep.mubr.bf16.mxu0 0
      %2691 = vmatmul.mubr.bf16.gmra.mxu0 %v2473
      %v2692 = vpop.f32.mrf.mxu0
      %v2693 = vadd.f32 0.0, %v2692
      %v2694 = vpop.f32.mrf.mxu0
      %v2695 = vpop.f32.mrf.mxu0
      %v2696 = vadd.f32 0.0, %v2695
      %v2697 = vpop.f32.mrf.mxu0
      %2698 = vmatprep.mubr.bf16.mxu0 0
      %2699 = vmatmul.mubr.bf16.gmra.mxu0 %v2481
      %v2700 = vpop.f32.mrf.mxu0
      %v2701 = vadd.f32 0.0, %v2700
      %v2702 = vpop.f32.mrf.mxu0
      %v2703 = vpop.f32.mrf.mxu0
      %v2704 = vadd.f32 0.0, %v2703
      %v2705 = vpop.f32.mrf.mxu0
      %2706 = vmatprep.mubr.bf16.mxu0 0
      %2707 = vmatmul.mubr.bf16.gmra.mxu0 %v2489
      %v2708 = vpop.f32.mrf.mxu0
      %v2709 = vadd.f32 0.0, %v2708
      %v2710 = vpop.f32.mrf.mxu0
      %v2711 = vpop.f32.mrf.mxu0
      %v2712 = vadd.f32 0.0, %v2711
      %v2713 = vpop.f32.mrf.mxu0
      %2714 = vmatprep.mubr.bf16.mxu0 0
      %2715 = vmatmul.mubr.bf16.gmra.mxu0 %v2497
      %v2716 = vpop.f32.mrf.mxu0
      %v2717 = vadd.f32 0.0, %v2716
      %v2718 = vpop.f32.mrf.mxu0
      %v2719 = vpop.f32.mrf.mxu0
      %v2720 = vadd.f32 0.0, %v2719
      %v2721 = vpop.f32.mrf.mxu0
      %2722 = vmatprep.mubr.bf16.mxu0 0
      %2723 = vmatmul.mubr.bf16.gmra.mxu0 %v2505
      %v2724 = vpop.f32.mrf.mxu0
      %v2725 = vadd.f32 0.0, %v2724
      %v2726 = vpop.f32.mrf.mxu0
      %v2727 = vpop.f32.mrf.mxu0
      %v2728 = vadd.f32 0.0, %v2727
      %v2729 = vpop.f32.mrf.mxu0
      %2730 = vmatprep.mubr.bf16.mxu0 0
      %2731 = vmatmul.mubr.bf16.gmra.mxu0 %v2513
      %v2732 = vpop.f32.mrf.mxu0
      %v2733 = vadd.f32 0.0, %v2732
      %v2734 = vpop.f32.mrf.mxu0
      %v2735 = vpop.f32.mrf.mxu0
      %v2736 = vadd.f32 0.0, %v2735
      %v2737 = vpop.f32.mrf.mxu0
      %2738 = vmatprep.mubr.bf16.mxu0 0
      %2739 = vmatmul.mubr.bf16.gmra.mxu0 %v2521
      %v2740 = vpop.f32.mrf.mxu0
      %v2741 = vadd.f32 0.0, %v2740
      %v2742 = vpop.f32.mrf.mxu0
      %v2743 = vpop.f32.mrf.mxu0
      %v2744 = vadd.f32 0.0, %v2743
      %v2745 = vpop.f32.mrf.mxu0
      %2746 = vmatprep.mubr.bf16.mxu0 0
      %2747 = vmatmul.mubr.bf16.gmra.mxu0 %v2529
      %v2748 = vpop.f32.mrf.mxu0
      %v2749 = vadd.f32 0.0, %v2748
      %v2750 = vpop.f32.mrf.mxu0
      %v2751 = vpop.f32.mrf.mxu0
      %v2752 = vadd.f32 0.0, %v2751
      %v2753 = vpop.f32.mrf.mxu0
      %2754 = vmatprep.mubr.bf16.mxu0 0
      %2755 = vmatmul.mubr.bf16.gmra.mxu0 %v2537
      %v2756 = vpop.f32.mrf.mxu0
      %v2757 = vadd.f32 0.0, %v2756
      %v2758 = vpop.f32.mrf.mxu0
      %v2759 = vpop.f32.mrf.mxu0
      %v2760 = vadd.f32 0.0, %v2759
      %v2761 = vpop.f32.mrf.mxu0
      %2762 = vdwg.mxu0
      %v2763 = vsel %vm1177, 1, 0
      %v2764 = vsel %vm1178, 1, 0
      %v2765 = vsel %vm1179, 1, 0
      %v2766 = vsel %vm1180, 1, 0
      %v2767 = vsel %vm1181, 1, 0
      %v2768 = vsel %vm1182, 1, 0
      %v2769 = vsel %vm1183, 1, 0
      %v2770 = vsel %vm1184, 1, 0
      %v2771 = vsel %vm1185, 1, 0
      %v2772 = vsel %vm1186, 1, 0
      %v2773 = vsel %vm1187, 1, 0
      %v2774 = vsel %vm1188, 1, 0
      %v2775 = vsel %vm1189, 1, 0
      %v2776 = vsel %vm1190, 1, 0
      %v2777 = vsel %vm1191, 1, 0
      %v2778 = vsel %vm1192, 1, 0
      %v2779 = vsel %vm1193, 1, 0
      %v2780 = vsel %vm1194, 1, 0
      %v2781 = vsel %vm1195, 1, 0
      %v2782 = vsel %vm1196, 1, 0
      %v2783 = vsel %vm1197, 1, 0
      %v2784 = vsel %vm1198, 1, 0
      %v2785 = vsel %vm1199, 1, 0
      %v2786 = vsel %vm1200, 1, 0
      %v2787 = vsel %vm1201, 1, 0
      %v2788 = vsel %vm1202, 1, 0
      %v2789 = vsel %vm1203, 1, 0
      %v2790 = vsel %vm1204, 1, 0
      %v2791 = vsel %vm1205, 1, 0
      %v2792 = vsel %vm1206, 1, 0
      %v2793 = vsel %vm1207, 1, 0
      %v2794 = vsel %vm1208, 1, 0
      %2795 = vset.pattern.permute.xlu0 0
      %2796 = vperm.xlu0 %2795, %v2763
      %v2797 = vpop.permute.xlu0 %2796
      %2798 = vset.pattern.permute.xlu0 0
      %2799 = vperm.xlu0 %2798, %v2764
      %v2800 = vpop.permute.xlu0 %2799
      %2801 = vset.pattern.permute.xlu0 0
      %2802 = vperm.xlu0 %2801, %v2765
      %v2803 = vpop.permute.xlu0 %2802
      %2804 = vset.pattern.permute.xlu0 0
      %2805 = vperm.xlu0 %2804, %v2766
      %v2806 = vpop.permute.xlu0 %2805
      %2807 = vset.pattern.permute.xlu0 0
      %2808 = vperm.xlu0 %2807, %v2767
      %v2809 = vpop.permute.xlu0 %2808
      %2810 = vset.pattern.permute.xlu0 0
      %2811 = vperm.xlu0 %2810, %v2768
      %v2812 = vpop.permute.xlu0 %2811
      %2813 = vset.pattern.permute.xlu0 0
      %2814 = vperm.xlu0 %2813, %v2769
      %v2815 = vpop.permute.xlu0 %2814
      %2816 = vset.pattern.permute.xlu0 0
      %2817 = vperm.xlu0 %2816, %v2770
      %v2818 = vpop.permute.xlu0 %2817
      %2819 = vset.pattern.permute.xlu0 0
      %2820 = vperm.xlu0 %2819, %v2771
      %v2821 = vpop.permute.xlu0 %2820
      %2822 = vset.pattern.permute.xlu0 0
      %2823 = vperm.xlu0 %2822, %v2772
      %v2824 = vpop.permute.xlu0 %2823
      %2825 = vset.pattern.permute.xlu0 0
      %2826 = vperm.xlu0 %2825, %v2773
      %v2827 = vpop.permute.xlu0 %2826
      %2828 = vset.pattern.permute.xlu0 0
      %2829 = vperm.xlu0 %2828, %v2774
      %v2830 = vpop.permute.xlu0 %2829
      %2831 = vset.pattern.permute.xlu0 0
      %2832 = vperm.xlu0 %2831, %v2775
      %v2833 = vpop.permute.xlu0 %2832
      %2834 = vset.pattern.permute.xlu0 0
      %2835 = vperm.xlu0 %2834, %v2776
      %v2836 = vpop.permute.xlu0 %2835
      %2837 = vset.pattern.permute.xlu0 0
      %2838 = vperm.xlu0 %2837, %v2777
      %v2839 = vpop.permute.xlu0 %2838
      %2840 = vset.pattern.permute.xlu0 0
      %2841 = vperm.xlu0 %2840, %v2778
      %v2842 = vpop.permute.xlu0 %2841
      %2843 = vset.pattern.permute.xlu0 0
      %2844 = vperm.xlu0 %2843, %v2779
      %v2845 = vpop.permute.xlu0 %2844
      %2846 = vset.pattern.permute.xlu0 0
      %2847 = vperm.xlu0 %2846, %v2780
      %v2848 = vpop.permute.xlu0 %2847
      %2849 = vset.pattern.permute.xlu0 0
      %2850 = vperm.xlu0 %2849, %v2781
      %v2851 = vpop.permute.xlu0 %2850
      %2852 = vset.pattern.permute.xlu0 0
      %2853 = vperm.xlu0 %2852, %v2782
      %v2854 = vpop.permute.xlu0 %2853
      %2855 = vset.pattern.permute.xlu0 0
      %2856 = vperm.xlu0 %2855, %v2783
      %v2857 = vpop.permute.xlu0 %2856
      %2858 = vset.pattern.permute.xlu0 0
      %2859 = vperm.xlu0 %2858, %v2784
      %v2860 = vpop.permute.xlu0 %2859
      %2861 = vset.pattern.permute.xlu0 0
      %2862 = vperm.xlu0 %2861, %v2785
      %v2863 = vpop.permute.xlu0 %2862
      %2864 = vset.pattern.permute.xlu0 0
      %2865 = vperm.xlu0 %2864, %v2786
      %v2866 = vpop.permute.xlu0 %2865
      %2867 = vset.pattern.permute.xlu0 0
      %2868 = vperm.xlu0 %2867, %v2787
      %v2869 = vpop.permute.xlu0 %2868
      %2870 = vset.pattern.permute.xlu0 0
      %2871 = vperm.xlu0 %2870, %v2788
      %v2872 = vpop.permute.xlu0 %2871
      %2873 = vset.pattern.permute.xlu0 0
      %2874 = vperm.xlu0 %2873, %v2789
      %v2875 = vpop.permute.xlu0 %2874
      %2876 = vset.pattern.permute.xlu0 0
      %2877 = vperm.xlu0 %2876, %v2790
      %v2878 = vpop.permute.xlu0 %2877
      %2879 = vset.pattern.permute.xlu0 0
      %2880 = vperm.xlu0 %2879, %v2791
      %v2881 = vpop.permute.xlu0 %2880
      %2882 = vset.pattern.permute.xlu0 0
      %2883 = vperm.xlu0 %2882, %v2792
      %v2884 = vpop.permute.xlu0 %2883
      %2885 = vset.pattern.permute.xlu0 0
      %2886 = vperm.xlu0 %2885, %v2793
      %v2887 = vpop.permute.xlu0 %2886
      %2888 = vset.pattern.permute.xlu0 0
      %2889 = vperm.xlu0 %2888, %v2794
      %v2890 = vpop.permute.xlu0 %2889
      %vm2891 = vcmp.eq.s32.totalorder %v2797, 1
      %vm2892 = vcmp.eq.s32.totalorder %v2800, 1
      %vm2893 = vcmp.eq.s32.totalorder %v2803, 1
      %vm2894 = vcmp.eq.s32.totalorder %v2806, 1
      %vm2895 = vcmp.eq.s32.totalorder %v2809, 1
      %vm2896 = vcmp.eq.s32.totalorder %v2812, 1
      %vm2897 = vcmp.eq.s32.totalorder %v2815, 1
      %vm2898 = vcmp.eq.s32.totalorder %v2818, 1
      %vm2899 = vcmp.eq.s32.totalorder %v2821, 1
      %vm2900 = vcmp.eq.s32.totalorder %v2824, 1
      %vm2901 = vcmp.eq.s32.totalorder %v2827, 1
      %vm2902 = vcmp.eq.s32.totalorder %v2830, 1
      %vm2903 = vcmp.eq.s32.totalorder %v2833, 1
      %vm2904 = vcmp.eq.s32.totalorder %v2836, 1
      %vm2905 = vcmp.eq.s32.totalorder %v2839, 1
      %vm2906 = vcmp.eq.s32.totalorder %v2842, 1
      %vm2907 = vcmp.eq.s32.totalorder %v2845, 1
      %vm2908 = vcmp.eq.s32.totalorder %v2848, 1
      %vm2909 = vcmp.eq.s32.totalorder %v2851, 1
      %vm2910 = vcmp.eq.s32.totalorder %v2854, 1
      %vm2911 = vcmp.eq.s32.totalorder %v2857, 1
      %vm2912 = vcmp.eq.s32.totalorder %v2860, 1
      %vm2913 = vcmp.eq.s32.totalorder %v2863, 1
      %vm2914 = vcmp.eq.s32.totalorder %v2866, 1
      %vm2915 = vcmp.eq.s32.totalorder %v2869, 1
      %vm2916 = vcmp.eq.s32.totalorder %v2872, 1
      %vm2917 = vcmp.eq.s32.totalorder %v2875, 1
      %vm2918 = vcmp.eq.s32.totalorder %v2878, 1
      %vm2919 = vcmp.eq.s32.totalorder %v2881, 1
      %vm2920 = vcmp.eq.s32.totalorder %v2884, 1
      %vm2921 = vcmp.eq.s32.totalorder %v2887, 1
      %vm2922 = vcmp.eq.s32.totalorder %v2890, 1
      %v2923 = vsel %vm2891, %v2637, 0.0
      %v2924 = vsel %vm2892, %v2640, 0.0
      %v2925 = vsel %vm2893, %v2645, 0.0
      %v2926 = vsel %vm2894, %v2648, 0.0
      %v2927 = vsel %vm2895, %v2653, 0.0
      %v2928 = vsel %vm2896, %v2656, 0.0
      %v2929 = vsel %vm2897, %v2661, 0.0
      %v2930 = vsel %vm2898, %v2664, 0.0
      %v2931 = vsel %vm2899, %v2669, 0.0
      %v2932 = vsel %vm2900, %v2672, 0.0
      %v2933 = vsel %vm2901, %v2677, 0.0
      %v2934 = vsel %vm2902, %v2680, 0.0
      %v2935 = vsel %vm2903, %v2685, 0.0
      %v2936 = vsel %vm2904, %v2688, 0.0
      %v2937 = vsel %vm2905, %v2693, 0.0
      %v2938 = vsel %vm2906, %v2696, 0.0
      %v2939 = vsel %vm2907, %v2701, 0.0
      %v2940 = vsel %vm2908, %v2704, 0.0
      %v2941 = vsel %vm2909, %v2709, 0.0
      %v2942 = vsel %vm2910, %v2712, 0.0
      %v2943 = vsel %vm2911, %v2717, 0.0
      %v2944 = vsel %vm2912, %v2720, 0.0
      %v2945 = vsel %vm2913, %v2725, 0.0
      %v2946 = vsel %vm2914, %v2728, 0.0
      %v2947 = vsel %vm2915, %v2733, 0.0
      %v2948 = vsel %vm2916, %v2736, 0.0
      %v2949 = vsel %vm2917, %v2741, 0.0
      %v2950 = vsel %vm2918, %v2744, 0.0
      %v2951 = vsel %vm2919, %v2749, 0.0
      %v2952 = vsel %vm2920, %v2752, 0.0
      %v2953 = vsel %vm2921, %v2757, 0.0
      %v2954 = vsel %vm2922, %v2760, 0.0
      %v2955 = vadd.f32 %v2240, %v2923
      %v2956 = vadd.f32 %v2241, %v2924
      %v2957 = vadd.f32 %v2242, %v2925
      %v2958 = vadd.f32 %v2243, %v2926
      %v2959 = vadd.f32 %v2244, %v2927
      %v2960 = vadd.f32 %v2245, %v2928
      %v2961 = vadd.f32 %v2246, %v2929
      %v2962 = vadd.f32 %v2247, %v2930
      %v2963 = vadd.f32 %v2248, %v2931
      %v2964 = vadd.f32 %v2249, %v2932
      %v2965 = vadd.f32 %v2250, %v2933
      %v2966 = vadd.f32 %v2251, %v2934
      %v2967 = vadd.f32 %v2252, %v2935
      %v2968 = vadd.f32 %v2253, %v2936
      %v2969 = vadd.f32 %v2254, %v2937
      %v2970 = vadd.f32 %v2255, %v2938
      %v2971 = vadd.f32 %v2256, %v2939
      %v2972 = vadd.f32 %v2257, %v2940
      %v2973 = vadd.f32 %v2258, %v2941
      %v2974 = vadd.f32 %v2259, %v2942
      %v2975 = vadd.f32 %v2260, %v2943
      %v2976 = vadd.f32 %v2261, %v2944
      %v2977 = vadd.f32 %v2262, %v2945
      %v2978 = vadd.f32 %v2263, %v2946
      %v2979 = vadd.f32 %v2264, %v2947
      %v2980 = vadd.f32 %v2265, %v2948
      %v2981 = vadd.f32 %v2266, %v2949
      %v2982 = vadd.f32 %v2267, %v2950
      %v2983 = vadd.f32 %v2268, %v2951
      %v2984 = vadd.f32 %v2269, %v2952
      %v2985 = vadd.f32 %v2270, %v2953
      %v2986 = vadd.f32 %v2271, %v2954
      %v2987 = vld [vmem:[#allocation2 + $0xc] sm:$0x8]
      %v2988 = vld [vmem:[#allocation2 + $0x10] sm:$0xf]
      %v2989 = vld [vmem:[#allocation2 + $0x14] sm:$0xf]
      %v2990 = vld [vmem:[#allocation2 + $0x18] sm:$0xf]
      %v2991 = vld [vmem:[#allocation2 + $0x1c] sm:$0xf]
      %v2992 = vld [vmem:[#allocation2 + $0x20] sm:$0xf]
      %v2993 = vld [vmem:[#allocation2 + $0x24] sm:$0xf]
      %v2994 = vld [vmem:[#allocation2 + $0x28] sm:$0xf]
      %v2995 = vld [vmem:[#allocation2 + $0x2c] sm:$0xf]
      %v2996 = vld [vmem:[#allocation2 + $0x30] sm:$0xf]
      %v2997 = vld [vmem:[#allocation2 + $0x34] sm:$0xf]
      %v2998 = vld [vmem:[#allocation2 + $0x38] sm:$0xf]
      %v2999 = vld [vmem:[#allocation2 + $0x3c] sm:$0xf]
      %v3000 = vld [vmem:[#allocation2 + $0x40] sm:$0xf]
      %v3001 = vld [vmem:[#allocation2 + $0x44] sm:$0xf]
      %v3002 = vld [vmem:[#allocation2 + $0x48] sm:$0xf]
      %v3003 = vld [vmem:[#allocation2 + $0x4c] sm:$0xf]
      %v3004 = vld [vmem:[#allocation2 + $0x50] sm:$0xf]
      %v3005 = vld [vmem:[#allocation2 + $0x54] sm:$0xf]
      %v3006 = vld [vmem:[#allocation2 + $0x58] sm:$0xf]
      %v3007 = vld [vmem:[#allocation2 + $0x5c] sm:$0xf]
      %v3008 = vld [vmem:[#allocation2 + $0x60] sm:$0xf]
      %v3009 = vld [vmem:[#allocation2 + $0x64] sm:$0xf]
      %v3010 = vld [vmem:[#allocation2 + $0x68] sm:$0xf]
      %v3011 = vld [vmem:[#allocation2 + $0x6c] sm:$0xf]
      %v3012 = vld [vmem:[#allocation2 + $0x70] sm:$0xf]
      %v3013 = vld [vmem:[#allocation2 + $0x74] sm:$0xf]
      %v3014 = vld [vmem:[#allocation2 + $0x78] sm:$0xf]
      %v3015 = vld [vmem:[#allocation2 + $0x7c] sm:$0xf]
      %v3016 = vld [vmem:[#allocation2 + $0x80] sm:$0xf]
      %v3017 = vld [vmem:[#allocation2 + $0x84] sm:$0xf]
      %v3018 = vld [vmem:[#allocation2 + $0x88] sm:$0xf]
      %v3019 = vld [vmem:[#allocation2 + $0x8c] sm:$0xf]
      %s3020 = scalar_lea.vmem %s5, 192
      %v3021 = vld [vmem:[%s3020] sm:$0xf]
      %v3022 = vld [vmem:[%s3020 + $0x4] sm:$0xf]
      %v3023 = vld [vmem:[%s3020 + $0x8] sm:$0xf]
      %v3024 = vld [vmem:[%s3020 + $0xc] sm:$0xf]
      %v3025 = vld [vmem:[%s3020 + $0x10] sm:$0xf]
      %v3026 = vld [vmem:[%s3020 + $0x14] sm:$0xf]
      %v3027 = vld [vmem:[%s3020 + $0x18] sm:$0xf]
      %v3028 = vld [vmem:[%s3020 + $0x1c] sm:$0xf]
      %v3029 = vld [vmem:[%s3020 + $0x20] sm:$0xf]
      %v3030 = vld [vmem:[%s3020 + $0x24] sm:$0xf]
      %v3031 = vld [vmem:[%s3020 + $0x28] sm:$0xf]
      %v3032 = vld [vmem:[%s3020 + $0x2c] sm:$0xf]
      %v3033 = vld [vmem:[%s3020 + $0x30] sm:$0xf]
      %v3034 = vld [vmem:[%s3020 + $0x34] sm:$0xf]
      %v3035 = vld [vmem:[%s3020 + $0x38] sm:$0xf]
      %v3036 = vld [vmem:[%s3020 + $0x3c] sm:$0xf]
      %v3070 = vunpack.c.l.b16 %v2987
      %v3071 = vunpack.c.l.b16 %v2988
      %v3072 = vunpack.c.l.b16 %v2989
      %v3073 = vunpack.c.l.b16 %v2990
      %v3074 = vunpack.c.l.b16 %v2991
      %v3075 = vunpack.c.l.b16 %v2992
      %v3076 = vunpack.c.l.b16 %v2993
      %v3077 = vunpack.c.l.b16 %v2994
      %v3078 = vunpack.c.l.b16 %v2995
      %v3079 = vunpack.c.l.b16 %v2996
      %v3080 = vunpack.c.l.b16 %v2997
      %v3081 = vunpack.c.l.b16 %v2998
      %v3082 = vunpack.c.l.b16 %v2999
      %v3083 = vunpack.c.l.b16 %v3000
      %v3084 = vunpack.c.l.b16 %v3001
      %v3085 = vunpack.c.l.b16 %v3002
      %v3086 = vunpack.c.l.b16 %v3003
      %v3087 = vunpack.c.l.b16 %v3004
      %v3088 = vunpack.c.l.b16 %v3005
      %v3089 = vunpack.c.l.b16 %v3006
      %v3090 = vunpack.c.l.b16 %v3007
      %v3091 = vunpack.c.l.b16 %v3008
      %v3092 = vunpack.c.l.b16 %v3009
      %v3093 = vunpack.c.l.b16 %v3010
      %v3094 = vunpack.c.l.b16 %v3011
      %v3095 = vunpack.c.l.b16 %v3012
      %v3096 = vunpack.c.l.b16 %v3013
      %v3097 = vunpack.c.l.b16 %v3014
      %v3098 = vunpack.c.l.b16 %v3015
      %v3099 = vunpack.c.l.b16 %v3016
      %v3100 = vunpack.c.l.b16 %v3017
      %v3101 = vunpack.c.l.b16 %v3018
      %v3102 = vunpack.c.l.b16 %v3019
      %v3103 = vpack.c.b16 %v3071, %v3070
      %v3104 = vpack.c.b16 %v3073, %v3072
      %v3105 = vpack.c.b16 %v3075, %v3074
      %v3106 = vpack.c.b16 %v3077, %v3076
      %v3107 = vpack.c.b16 %v3079, %v3078
      %v3108 = vpack.c.b16 %v3081, %v3080
      %v3109 = vpack.c.b16 %v3083, %v3082
      %v3110 = vpack.c.b16 %v3085, %v3084
      %v3111 = vpack.c.b16 %v3087, %v3086
      %v3112 = vpack.c.b16 %v3089, %v3088
      %v3113 = vpack.c.b16 %v3091, %v3090
      %v3114 = vpack.c.b16 %v3093, %v3092
      %v3115 = vpack.c.b16 %v3095, %v3094
      %v3116 = vpack.c.b16 %v3097, %v3096
      %v3117 = vpack.c.b16 %v3099, %v3098
      %v3118 = vpack.c.b16 %v3101, %v3100
      %v3119 = vpack.c.b16 %v3102, %v3102
      %v3121 = vshrl.u32 %v3103, 16
      %v3123 = vrot.slane %v3121, 3
      %v3124 = vshll.u32 %v3103, 16
      %v3126 = vrot.slane %v3124, 4
      %v3127 = vor.u32 %v3123, %v3126
      %v3129 = vshrl.u32 %v3104, 16
      %v3131 = vrot.slane %v3129, 3
      %v3132 = vshll.u32 %v3104, 16
      %v3134 = vrot.slane %v3132, 4
      %v3135 = vor.u32 %v3131, %v3134
      %v3136 = vsel %vm1380, %v3127, %v3135
      %v3138 = vshrl.u32 %v3105, 16
      %v3140 = vrot.slane %v3138, 3
      %v3141 = vshll.u32 %v3105, 16
      %v3143 = vrot.slane %v3141, 4
      %v3144 = vor.u32 %v3140, %v3143
      %v3145 = vsel %vm1380, %v3135, %v3144
      %v3147 = vshrl.u32 %v3106, 16
      %v3149 = vrot.slane %v3147, 3
      %v3150 = vshll.u32 %v3106, 16
      %v3152 = vrot.slane %v3150, 4
      %v3153 = vor.u32 %v3149, %v3152
      %v3154 = vsel %vm1380, %v3144, %v3153
      %v3156 = vshrl.u32 %v3107, 16
      %v3158 = vrot.slane %v3156, 3
      %v3159 = vshll.u32 %v3107, 16
      %v3161 = vrot.slane %v3159, 4
      %v3162 = vor.u32 %v3158, %v3161
      %v3163 = vsel %vm1380, %v3153, %v3162
      %v3165 = vshrl.u32 %v3108, 16
      %v3167 = vrot.slane %v3165, 3
      %v3168 = vshll.u32 %v3108, 16
      %v3170 = vrot.slane %v3168, 4
      %v3171 = vor.u32 %v3167, %v3170
      %v3172 = vsel %vm1380, %v3162, %v3171
      %v3174 = vshrl.u32 %v3109, 16
      %v3176 = vrot.slane %v3174, 3
      %v3177 = vshll.u32 %v3109, 16
      %v3179 = vrot.slane %v3177, 4
      %v3180 = vor.u32 %v3176, %v3179
      %v3181 = vsel %vm1380, %v3171, %v3180
      %v3183 = vshrl.u32 %v3110, 16
      %v3185 = vrot.slane %v3183, 3
      %v3186 = vshll.u32 %v3110, 16
      %v3188 = vrot.slane %v3186, 4
      %v3189 = vor.u32 %v3185, %v3188
      %v3190 = vsel %vm1380, %v3180, %v3189
      %v3192 = vshrl.u32 %v3111, 16
      %v3194 = vrot.slane %v3192, 3
      %v3195 = vshll.u32 %v3111, 16
      %v3197 = vrot.slane %v3195, 4
      %v3198 = vor.u32 %v3194, %v3197
      %v3199 = vsel %vm1380, %v3189, %v3198
      %v3201 = vshrl.u32 %v3112, 16
      %v3203 = vrot.slane %v3201, 3
      %v3204 = vshll.u32 %v3112, 16
      %v3206 = vrot.slane %v3204, 4
      %v3207 = vor.u32 %v3203, %v3206
      %v3208 = vsel %vm1380, %v3198, %v3207
      %v3210 = vshrl.u32 %v3113, 16
      %v3212 = vrot.slane %v3210, 3
      %v3213 = vshll.u32 %v3113, 16
      %v3215 = vrot.slane %v3213, 4
      %v3216 = vor.u32 %v3212, %v3215
      %v3217 = vsel %vm1380, %v3207, %v3216
      %v3219 = vshrl.u32 %v3114, 16
      %v3221 = vrot.slane %v3219, 3
      %v3222 = vshll.u32 %v3114, 16
      %v3224 = vrot.slane %v3222, 4
      %v3225 = vor.u32 %v3221, %v3224
      %v3226 = vsel %vm1380, %v3216, %v3225
      %v3228 = vshrl.u32 %v3115, 16
      %v3230 = vrot.slane %v3228, 3
      %v3231 = vshll.u32 %v3115, 16
      %v3233 = vrot.slane %v3231, 4
      %v3234 = vor.u32 %v3230, %v3233
      %v3235 = vsel %vm1380, %v3225, %v3234
      %v3237 = vshrl.u32 %v3116, 16
      %v3239 = vrot.slane %v3237, 3
      %v3240 = vshll.u32 %v3116, 16
      %v3242 = vrot.slane %v3240, 4
      %v3243 = vor.u32 %v3239, %v3242
      %v3244 = vsel %vm1380, %v3234, %v3243
      %v3246 = vshrl.u32 %v3117, 16
      %v3248 = vrot.slane %v3246, 3
      %v3249 = vshll.u32 %v3117, 16
      %v3251 = vrot.slane %v3249, 4
      %v3252 = vor.u32 %v3248, %v3251
      %v3253 = vsel %vm1380, %v3243, %v3252
      %v3255 = vshrl.u32 %v3118, 16
      %v3257 = vrot.slane %v3255, 3
      %v3258 = vshll.u32 %v3118, 16
      %v3260 = vrot.slane %v3258, 4
      %v3261 = vor.u32 %v3257, %v3260
      %v3262 = vsel %vm1380, %v3252, %v3261
      %v3264 = vshrl.u32 %v3119, 16
      %v3266 = vrot.slane %v3264, 3
      %v3267 = vshll.u32 %v3119, 16
      %v3269 = vrot.slane %v3267, 4
      %v3270 = vor.u32 %v3266, %v3269
      %v3271 = vsel %vm1380, %v3261, %v3270
      %v3304 = vunpack.c.l.b16 %v3021
      %v3305 = vunpack.c.l.b16 %v3022
      %v3306 = vunpack.c.l.b16 %v3023
      %v3307 = vunpack.c.l.b16 %v3024
      %v3308 = vunpack.c.l.b16 %v3025
      %v3309 = vunpack.c.l.b16 %v3026
      %v3310 = vunpack.c.l.b16 %v3027
      %v3311 = vunpack.c.l.b16 %v3028
      %v3312 = vunpack.c.l.b16 %v3029
      %v3313 = vunpack.c.l.b16 %v3030
      %v3314 = vunpack.c.l.b16 %v3031
      %v3315 = vunpack.c.l.b16 %v3032
      %v3316 = vunpack.c.l.b16 %v3033
      %v3317 = vunpack.c.l.b16 %v3034
      %v3318 = vunpack.c.l.b16 %v3035
      %v3319 = vunpack.c.l.b16 %v3036
      %v3320 = vpack.c.b16 %v3305, %v3304
      %v3321 = vpack.c.b16 %v3307, %v3306
      %v3322 = vpack.c.b16 %v3309, %v3308
      %v3323 = vpack.c.b16 %v3311, %v3310
      %v3324 = vpack.c.b16 %v3313, %v3312
      %v3325 = vpack.c.b16 %v3315, %v3314
      %v3326 = vpack.c.b16 %v3317, %v3316
      %v3327 = vpack.c.b16 %v3319, %v3318
      %3336 = vmatprep.subr.bf16.mxu0 0
      %3337 = vmatpush1.bf16.msra.mxu0 %v3327
      %3338 = vmatprep.subr.bf16.mxu0 0
      %3339 = vmatpush1.bf16.msra.mxu0 %v3326
      %3340 = vmatprep.subr.bf16.mxu0 0
      %3341 = vmatpush1.bf16.msra.mxu0 %v3325
      %3342 = vmatprep.subr.bf16.mxu0 0
      %3343 = vmatpush1.bf16.msra.mxu0 %v3324
      %3344 = vmatprep.subr.bf16.mxu0 0
      %3345 = vmatpush1.bf16.msra.mxu0 %v3323
      %3346 = vmatprep.subr.bf16.mxu0 0
      %3347 = vmatpush1.bf16.msra.mxu0 %v3322
      %3348 = vmatprep.subr.bf16.mxu0 0
      %3349 = vmatpush1.bf16.msra.mxu0 %v3321
      %3350 = vmatprep.subr.bf16.mxu0 0
      %3351 = vmatpush1.bf16.msra.mxu0 %v3320
      %3352 = vmatprep.subr.bf16.mxu0 0
      %3353 = vmatpush2.bf16.msra.mxu0 0
      %3354 = vmatprep.subr.bf16.mxu0 0
      %3355 = vmatpush2.bf16.msra.mxu0 0
      %3356 = vmatprep.subr.bf16.mxu0 0
      %3357 = vmatpush2.bf16.msra.mxu0 0
      %3358 = vmatprep.subr.bf16.mxu0 0
      %3359 = vmatpush2.bf16.msra.mxu0 0
      %3360 = vmatprep.subr.bf16.mxu0 0
      %3361 = vmatpush2.bf16.msra.mxu0 0
      %3362 = vmatprep.subr.bf16.mxu0 0
      %3363 = vmatpush2.bf16.msra.mxu0 0
      %3364 = vmatprep.subr.bf16.mxu0 0
      %3365 = vmatpush2.bf16.msra.mxu0 0
      %3366 = vmatprep.subr.bf16.mxu0 0
      %3367 = vmatpush2.bf16.msra.mxu0 0
      %3368 = vmatprep.mubr.bf16.mxu0 0
      %3369 = vmatmul.mubr.bf16.gmra.mxu0 %v3136
      %v3370 = vpop.f32.mrf.mxu0
      %v3371 = vadd.f32 0.0, %v3370
      %v3372 = vpop.f32.mrf.mxu0
      %v3373 = vpop.f32.mrf.mxu0
      %v3374 = vadd.f32 0.0, %v3373
      %v3375 = vpop.f32.mrf.mxu0
      %3376 = vmatprep.mubr.bf16.mxu0 0
      %3377 = vmatmul.mubr.bf16.gmra.mxu0 %v3145
      %v3378 = vpop.f32.mrf.mxu0
      %v3379 = vadd.f32 0.0, %v3378
      %v3380 = vpop.f32.mrf.mxu0
      %v3381 = vpop.f32.mrf.mxu0
      %v3382 = vadd.f32 0.0, %v3381
      %v3383 = vpop.f32.mrf.mxu0
      %3384 = vmatprep.mubr.bf16.mxu0 0
      %3385 = vmatmul.mubr.bf16.gmra.mxu0 %v3154
      %v3386 = vpop.f32.mrf.mxu0
      %v3387 = vadd.f32 0.0, %v3386
      %v3388 = vpop.f32.mrf.mxu0
      %v3389 = vpop.f32.mrf.mxu0
      %v3390 = vadd.f32 0.0, %v3389
      %v3391 = vpop.f32.mrf.mxu0
      %3392 = vmatprep.mubr.bf16.mxu0 0
      %3393 = vmatmul.mubr.bf16.gmra.mxu0 %v3163
      %v3394 = vpop.f32.mrf.mxu0
      %v3395 = vadd.f32 0.0, %v3394
      %v3396 = vpop.f32.mrf.mxu0
      %v3397 = vpop.f32.mrf.mxu0
      %v3398 = vadd.f32 0.0, %v3397
      %v3399 = vpop.f32.mrf.mxu0
      %3400 = vmatprep.mubr.bf16.mxu0 0
      %3401 = vmatmul.mubr.bf16.gmra.mxu0 %v3172
      %v3402 = vpop.f32.mrf.mxu0
      %v3403 = vadd.f32 0.0, %v3402
      %v3404 = vpop.f32.mrf.mxu0
      %v3405 = vpop.f32.mrf.mxu0
      %v3406 = vadd.f32 0.0, %v3405
      %v3407 = vpop.f32.mrf.mxu0
      %3408 = vmatprep.mubr.bf16.mxu0 0
      %3409 = vmatmul.mubr.bf16.gmra.mxu0 %v3181
      %v3410 = vpop.f32.mrf.mxu0
      %v3411 = vadd.f32 0.0, %v3410
      %v3412 = vpop.f32.mrf.mxu0
      %v3413 = vpop.f32.mrf.mxu0
      %v3414 = vadd.f32 0.0, %v3413
      %v3415 = vpop.f32.mrf.mxu0
      %3416 = vmatprep.mubr.bf16.mxu0 0
      %3417 = vmatmul.mubr.bf16.gmra.mxu0 %v3190
      %v3418 = vpop.f32.mrf.mxu0
      %v3419 = vadd.f32 0.0, %v3418
      %v3420 = vpop.f32.mrf.mxu0
      %v3421 = vpop.f32.mrf.mxu0
      %v3422 = vadd.f32 0.0, %v3421
      %v3423 = vpop.f32.mrf.mxu0
      %3424 = vmatprep.mubr.bf16.mxu0 0
      %3425 = vmatmul.mubr.bf16.gmra.mxu0 %v3199
      %v3426 = vpop.f32.mrf.mxu0
      %v3427 = vadd.f32 0.0, %v3426
      %v3428 = vpop.f32.mrf.mxu0
      %v3429 = vpop.f32.mrf.mxu0
      %v3430 = vadd.f32 0.0, %v3429
      %v3431 = vpop.f32.mrf.mxu0
      %3432 = vmatprep.mubr.bf16.mxu0 0
      %3433 = vmatmul.mubr.bf16.gmra.mxu0 %v3208
      %v3434 = vpop.f32.mrf.mxu0
      %v3435 = vadd.f32 0.0, %v3434
      %v3436 = vpop.f32.mrf.mxu0
      %v3437 = vpop.f32.mrf.mxu0
      %v3438 = vadd.f32 0.0, %v3437
      %v3439 = vpop.f32.mrf.mxu0
      %3440 = vmatprep.mubr.bf16.mxu0 0
      %3441 = vmatmul.mubr.bf16.gmra.mxu0 %v3217
      %v3442 = vpop.f32.mrf.mxu0
      %v3443 = vadd.f32 0.0, %v3442
      %v3444 = vpop.f32.mrf.mxu0
      %v3445 = vpop.f32.mrf.mxu0
      %v3446 = vadd.f32 0.0, %v3445
      %v3447 = vpop.f32.mrf.mxu0
      %3448 = vmatprep.mubr.bf16.mxu0 0
      %3449 = vmatmul.mubr.bf16.gmra.mxu0 %v3226
      %v3450 = vpop.f32.mrf.mxu0
      %v3451 = vadd.f32 0.0, %v3450
      %v3452 = vpop.f32.mrf.mxu0
      %v3453 = vpop.f32.mrf.mxu0
      %v3454 = vadd.f32 0.0, %v3453
      %v3455 = vpop.f32.mrf.mxu0
      %3456 = vmatprep.mubr.bf16.mxu0 0
      %3457 = vmatmul.mubr.bf16.gmra.mxu0 %v3235
      %v3458 = vpop.f32.mrf.mxu0
      %v3459 = vadd.f32 0.0, %v3458
      %v3460 = vpop.f32.mrf.mxu0
      %v3461 = vpop.f32.mrf.mxu0
      %v3462 = vadd.f32 0.0, %v3461
      %v3463 = vpop.f32.mrf.mxu0
      %3464 = vmatprep.mubr.bf16.mxu0 0
      %3465 = vmatmul.mubr.bf16.gmra.mxu0 %v3244
      %v3466 = vpop.f32.mrf.mxu0
      %v3467 = vadd.f32 0.0, %v3466
      %v3468 = vpop.f32.mrf.mxu0
      %v3469 = vpop.f32.mrf.mxu0
      %v3470 = vadd.f32 0.0, %v3469
      %v3471 = vpop.f32.mrf.mxu0
      %3472 = vmatprep.mubr.bf16.mxu0 0
      %3473 = vmatmul.mubr.bf16.gmra.mxu0 %v3253
      %v3474 = vpop.f32.mrf.mxu0
      %v3475 = vadd.f32 0.0, %v3474
      %v3476 = vpop.f32.mrf.mxu0
      %v3477 = vpop.f32.mrf.mxu0
      %v3478 = vadd.f32 0.0, %v3477
      %v3479 = vpop.f32.mrf.mxu0
      %3480 = vmatprep.mubr.bf16.mxu0 0
      %3481 = vmatmul.mubr.bf16.gmra.mxu0 %v3262
      %v3482 = vpop.f32.mrf.mxu0
      %v3483 = vadd.f32 0.0, %v3482
      %v3484 = vpop.f32.mrf.mxu0
      %v3485 = vpop.f32.mrf.mxu0
      %v3486 = vadd.f32 0.0, %v3485
      %v3487 = vpop.f32.mrf.mxu0
      %3488 = vmatprep.mubr.bf16.mxu0 0
      %3489 = vmatmul.mubr.bf16.gmra.mxu0 %v3271
      %v3490 = vpop.f32.mrf.mxu0
      %v3491 = vadd.f32 0.0, %v3490
      %v3492 = vpop.f32.mrf.mxu0
      %v3493 = vpop.f32.mrf.mxu0
      %v3494 = vadd.f32 0.0, %v3493
      %v3495 = vpop.f32.mrf.mxu0
      %3496 = vdwg.mxu0
      %v3497 = vsel %vm1886, %v3371, 0.0
      %v3498 = vsel %vm1887, %v3374, 0.0
      %v3499 = vsel %vm1888, %v3379, 0.0
      %v3500 = vsel %vm1889, %v3382, 0.0
      %v3501 = vsel %vm1890, %v3387, 0.0
      %v3502 = vsel %vm1891, %v3390, 0.0
      %v3503 = vsel %vm1892, %v3395, 0.0
      %v3504 = vsel %vm1893, %v3398, 0.0
      %v3505 = vsel %vm1894, %v3403, 0.0
      %v3506 = vsel %vm1895, %v3406, 0.0
      %v3507 = vsel %vm1896, %v3411, 0.0
      %v3508 = vsel %vm1897, %v3414, 0.0
      %v3509 = vsel %vm1898, %v3419, 0.0
      %v3510 = vsel %vm1899, %v3422, 0.0
      %v3511 = vsel %vm1900, %v3427, 0.0
      %v3512 = vsel %vm1901, %v3430, 0.0
      %v3513 = vsel %vm1902, %v3435, 0.0
      %v3514 = vsel %vm1903, %v3438, 0.0
      %v3515 = vsel %vm1904, %v3443, 0.0
      %v3516 = vsel %vm1905, %v3446, 0.0
      %v3517 = vsel %vm1906, %v3451, 0.0
      %v3518 = vsel %vm1907, %v3454, 0.0
      %v3519 = vsel %vm1908, %v3459, 0.0
      %v3520 = vsel %vm1909, %v3462, 0.0
      %v3521 = vsel %vm1910, %v3467, 0.0
      %v3522 = vsel %vm1911, %v3470, 0.0
      %v3523 = vsel %vm1912, %v3475, 0.0
      %v3524 = vsel %vm1913, %v3478, 0.0
      %v3525 = vsel %vm1914, %v3483, 0.0
      %v3526 = vsel %vm1915, %v3486, 0.0
      %v3527 = vsel %vm1916, %v3491, 0.0
      %v3528 = vsel %vm1917, %v3494, 0.0
      %v3529 = vadd.f32 %v2955, %v3497
      %v3530 = vadd.f32 %v2956, %v3498
      %v3531 = vadd.f32 %v2957, %v3499
      %v3532 = vadd.f32 %v2958, %v3500
      %v3533 = vadd.f32 %v2959, %v3501
      %v3534 = vadd.f32 %v2960, %v3502
      %v3535 = vadd.f32 %v2961, %v3503
      %v3536 = vadd.f32 %v2962, %v3504
      %v3537 = vadd.f32 %v2963, %v3505
      %v3538 = vadd.f32 %v2964, %v3506
      %v3539 = vadd.f32 %v2965, %v3507
      %v3540 = vadd.f32 %v2966, %v3508
      %v3541 = vadd.f32 %v2967, %v3509
      %v3542 = vadd.f32 %v2968, %v3510
      %v3543 = vadd.f32 %v2969, %v3511
      %v3544 = vadd.f32 %v2970, %v3512
      %v3545 = vadd.f32 %v2971, %v3513
      %v3546 = vadd.f32 %v2972, %v3514
      %v3547 = vadd.f32 %v2973, %v3515
      %v3548 = vadd.f32 %v2974, %v3516
      %v3549 = vadd.f32 %v2975, %v3517
      %v3550 = vadd.f32 %v2976, %v3518
      %v3551 = vadd.f32 %v2977, %v3519
      %v3552 = vadd.f32 %v2978, %v3520
      %v3553 = vadd.f32 %v2979, %v3521
      %v3554 = vadd.f32 %v2980, %v3522
      %v3555 = vadd.f32 %v2981, %v3523
      %v3556 = vadd.f32 %v2982, %v3524
      %v3557 = vadd.f32 %v2983, %v3525
      %v3558 = vadd.f32 %v2984, %v3526
      %v3559 = vadd.f32 %v2985, %v3527
      %v3560 = vadd.f32 %v2986, %v3528
      %s3561 = scalar_lea.vmem %s5, 256
      %v3562 = vld [vmem:[%s3561] sm:$0xf]
      %v3563 = vld [vmem:[%s3561 + $0x4] sm:$0xf]
      %v3564 = vld [vmem:[%s3561 + $0x8] sm:$0xf]
      %v3565 = vld [vmem:[%s3561 + $0xc] sm:$0xf]
      %v3566 = vld [vmem:[%s3561 + $0x10] sm:$0xf]
      %v3567 = vld [vmem:[%s3561 + $0x14] sm:$0xf]
      %v3568 = vld [vmem:[%s3561 + $0x18] sm:$0xf]
      %v3569 = vld [vmem:[%s3561 + $0x1c] sm:$0xf]
      %v3570 = vld [vmem:[%s3561 + $0x20] sm:$0xf]
      %v3571 = vld [vmem:[%s3561 + $0x24] sm:$0xf]
      %v3572 = vld [vmem:[%s3561 + $0x28] sm:$0xf]
      %v3573 = vld [vmem:[%s3561 + $0x2c] sm:$0xf]
      %v3574 = vld [vmem:[%s3561 + $0x30] sm:$0xf]
      %v3575 = vld [vmem:[%s3561 + $0x34] sm:$0xf]
      %v3576 = vld [vmem:[%s3561 + $0x38] sm:$0xf]
      %v3577 = vld [vmem:[%s3561 + $0x3c] sm:$0xf]
      %v3578 = vpack.c.b16 %v3072, %v3071
      %v3579 = vpack.c.b16 %v3074, %v3073
      %v3580 = vpack.c.b16 %v3076, %v3075
      %v3581 = vpack.c.b16 %v3078, %v3077
      %v3582 = vpack.c.b16 %v3080, %v3079
      %v3583 = vpack.c.b16 %v3082, %v3081
      %v3584 = vpack.c.b16 %v3084, %v3083
      %v3585 = vpack.c.b16 %v3086, %v3085
      %v3586 = vpack.c.b16 %v3088, %v3087
      %v3587 = vpack.c.b16 %v3090, %v3089
      %v3588 = vpack.c.b16 %v3092, %v3091
      %v3589 = vpack.c.b16 %v3094, %v3093
      %v3590 = vpack.c.b16 %v3096, %v3095
      %v3591 = vpack.c.b16 %v3098, %v3097
      %v3592 = vpack.c.b16 %v3100, %v3099
      %v3593 = vpack.c.b16 %v3102, %v3101
      %v3626 = vunpack.c.l.b16 %v3562
      %v3627 = vunpack.c.l.b16 %v3563
      %v3628 = vunpack.c.l.b16 %v3564
      %v3629 = vunpack.c.l.b16 %v3565
      %v3630 = vunpack.c.l.b16 %v3566
      %v3631 = vunpack.c.l.b16 %v3567
      %v3632 = vunpack.c.l.b16 %v3568
      %v3633 = vunpack.c.l.b16 %v3569
      %v3634 = vunpack.c.l.b16 %v3570
      %v3635 = vunpack.c.l.b16 %v3571
      %v3636 = vunpack.c.l.b16 %v3572
      %v3637 = vunpack.c.l.b16 %v3573
      %v3638 = vunpack.c.l.b16 %v3574
      %v3639 = vunpack.c.l.b16 %v3575
      %v3640 = vunpack.c.l.b16 %v3576
      %v3641 = vunpack.c.l.b16 %v3577
      %v3642 = vpack.c.b16 %v3627, %v3626
      %v3643 = vpack.c.b16 %v3629, %v3628
      %v3644 = vpack.c.b16 %v3631, %v3630
      %v3645 = vpack.c.b16 %v3633, %v3632
      %v3646 = vpack.c.b16 %v3635, %v3634
      %v3647 = vpack.c.b16 %v3637, %v3636
      %v3648 = vpack.c.b16 %v3639, %v3638
      %v3649 = vpack.c.b16 %v3641, %v3640
      %3658 = vmatprep.subr.bf16.mxu0 0
      %3659 = vmatpush1.bf16.msra.mxu0 %v3649
      %3660 = vmatprep.subr.bf16.mxu0 0
      %3661 = vmatpush1.bf16.msra.mxu0 %v3648
      %3662 = vmatprep.subr.bf16.mxu0 0
      %3663 = vmatpush1.bf16.msra.mxu0 %v3647
      %3664 = vmatprep.subr.bf16.mxu0 0
      %3665 = vmatpush1.bf16.msra.mxu0 %v3646
      %3666 = vmatprep.subr.bf16.mxu0 0
      %3667 = vmatpush1.bf16.msra.mxu0 %v3645
      %3668 = vmatprep.subr.bf16.mxu0 0
      %3669 = vmatpush1.bf16.msra.mxu0 %v3644
      %3670 = vmatprep.subr.bf16.mxu0 0
      %3671 = vmatpush1.bf16.msra.mxu0 %v3643
      %3672 = vmatprep.subr.bf16.mxu0 0
      %3673 = vmatpush1.bf16.msra.mxu0 %v3642
      %3674 = vmatprep.subr.bf16.mxu0 0
      %3675 = vmatpush2.bf16.msra.mxu0 0
      %3676 = vmatprep.subr.bf16.mxu0 0
      %3677 = vmatpush2.bf16.msra.mxu0 0
      %3678 = vmatprep.subr.bf16.mxu0 0
      %3679 = vmatpush2.bf16.msra.mxu0 0
      %3680 = vmatprep.subr.bf16.mxu0 0
      %3681 = vmatpush2.bf16.msra.mxu0 0
      %3682 = vmatprep.subr.bf16.mxu0 0
      %3683 = vmatpush2.bf16.msra.mxu0 0
      %3684 = vmatprep.subr.bf16.mxu0 0
      %3685 = vmatpush2.bf16.msra.mxu0 0
      %3686 = vmatprep.subr.bf16.mxu0 0
      %3687 = vmatpush2.bf16.msra.mxu0 0
      %3688 = vmatprep.subr.bf16.mxu0 0
      %3689 = vmatpush2.bf16.msra.mxu0 0
      %3690 = vmatprep.mubr.bf16.mxu0 0
      %3691 = vmatmul.mubr.bf16.gmra.mxu0 %v3578
      %v3692 = vpop.f32.mrf.mxu0
      %v3693 = vadd.f32 0.0, %v3692
      %v3694 = vpop.f32.mrf.mxu0
      %v3695 = vpop.f32.mrf.mxu0
      %v3696 = vadd.f32 0.0, %v3695
      %v3697 = vpop.f32.mrf.mxu0
      %3698 = vmatprep.mubr.bf16.mxu0 0
      %3699 = vmatmul.mubr.bf16.gmra.mxu0 %v3579
      %v3700 = vpop.f32.mrf.mxu0
      %v3701 = vadd.f32 0.0, %v3700
      %v3702 = vpop.f32.mrf.mxu0
      %v3703 = vpop.f32.mrf.mxu0
      %v3704 = vadd.f32 0.0, %v3703
      %v3705 = vpop.f32.mrf.mxu0
      %3706 = vmatprep.mubr.bf16.mxu0 0
      %3707 = vmatmul.mubr.bf16.gmra.mxu0 %v3580
      %v3708 = vpop.f32.mrf.mxu0
      %v3709 = vadd.f32 0.0, %v3708
      %v3710 = vpop.f32.mrf.mxu0
      %v3711 = vpop.f32.mrf.mxu0
      %v3712 = vadd.f32 0.0, %v3711
      %v3713 = vpop.f32.mrf.mxu0
      %3714 = vmatprep.mubr.bf16.mxu0 0
      %3715 = vmatmul.mubr.bf16.gmra.mxu0 %v3581
      %v3716 = vpop.f32.mrf.mxu0
      %v3717 = vadd.f32 0.0, %v3716
      %v3718 = vpop.f32.mrf.mxu0
      %v3719 = vpop.f32.mrf.mxu0
      %v3720 = vadd.f32 0.0, %v3719
      %v3721 = vpop.f32.mrf.mxu0
      %3722 = vmatprep.mubr.bf16.mxu0 0
      %3723 = vmatmul.mubr.bf16.gmra.mxu0 %v3582
      %v3724 = vpop.f32.mrf.mxu0
      %v3725 = vadd.f32 0.0, %v3724
      %v3726 = vpop.f32.mrf.mxu0
      %v3727 = vpop.f32.mrf.mxu0
      %v3728 = vadd.f32 0.0, %v3727
      %v3729 = vpop.f32.mrf.mxu0
      %3730 = vmatprep.mubr.bf16.mxu0 0
      %3731 = vmatmul.mubr.bf16.gmra.mxu0 %v3583
      %v3732 = vpop.f32.mrf.mxu0
      %v3733 = vadd.f32 0.0, %v3732
      %v3734 = vpop.f32.mrf.mxu0
      %v3735 = vpop.f32.mrf.mxu0
      %v3736 = vadd.f32 0.0, %v3735
      %v3737 = vpop.f32.mrf.mxu0
      %3738 = vmatprep.mubr.bf16.mxu0 0
      %3739 = vmatmul.mubr.bf16.gmra.mxu0 %v3584
      %v3740 = vpop.f32.mrf.mxu0
      %v3741 = vadd.f32 0.0, %v3740
      %v3742 = vpop.f32.mrf.mxu0
      %v3743 = vpop.f32.mrf.mxu0
      %v3744 = vadd.f32 0.0, %v3743
      %v3745 = vpop.f32.mrf.mxu0
      %3746 = vmatprep.mubr.bf16.mxu0 0
      %3747 = vmatmul.mubr.bf16.gmra.mxu0 %v3585
      %v3748 = vpop.f32.mrf.mxu0
      %v3749 = vadd.f32 0.0, %v3748
      %v3750 = vpop.f32.mrf.mxu0
      %v3751 = vpop.f32.mrf.mxu0
      %v3752 = vadd.f32 0.0, %v3751
      %v3753 = vpop.f32.mrf.mxu0
      %3754 = vmatprep.mubr.bf16.mxu0 0
      %3755 = vmatmul.mubr.bf16.gmra.mxu0 %v3586
      %v3756 = vpop.f32.mrf.mxu0
      %v3757 = vadd.f32 0.0, %v3756
      %v3758 = vpop.f32.mrf.mxu0
      %v3759 = vpop.f32.mrf.mxu0
      %v3760 = vadd.f32 0.0, %v3759
      %v3761 = vpop.f32.mrf.mxu0
      %3762 = vmatprep.mubr.bf16.mxu0 0
      %3763 = vmatmul.mubr.bf16.gmra.mxu0 %v3587
      %v3764 = vpop.f32.mrf.mxu0
      %v3765 = vadd.f32 0.0, %v3764
      %v3766 = vpop.f32.mrf.mxu0
      %v3767 = vpop.f32.mrf.mxu0
      %v3768 = vadd.f32 0.0, %v3767
      %v3769 = vpop.f32.mrf.mxu0
      %3770 = vmatprep.mubr.bf16.mxu0 0
      %3771 = vmatmul.mubr.bf16.gmra.mxu0 %v3588
      %v3772 = vpop.f32.mrf.mxu0
      %v3773 = vadd.f32 0.0, %v3772
      %v3774 = vpop.f32.mrf.mxu0
      %v3775 = vpop.f32.mrf.mxu0
      %v3776 = vadd.f32 0.0, %v3775
      %v3777 = vpop.f32.mrf.mxu0
      %3778 = vmatprep.mubr.bf16.mxu0 0
      %3779 = vmatmul.mubr.bf16.gmra.mxu0 %v3589
      %v3780 = vpop.f32.mrf.mxu0
      %v3781 = vadd.f32 0.0, %v3780
      %v3782 = vpop.f32.mrf.mxu0
      %v3783 = vpop.f32.mrf.mxu0
      %v3784 = vadd.f32 0.0, %v3783
      %v3785 = vpop.f32.mrf.mxu0
      %3786 = vmatprep.mubr.bf16.mxu0 0
      %3787 = vmatmul.mubr.bf16.gmra.mxu0 %v3590
      %v3788 = vpop.f32.mrf.mxu0
      %v3789 = vadd.f32 0.0, %v3788
      %v3790 = vpop.f32.mrf.mxu0
      %v3791 = vpop.f32.mrf.mxu0
      %v3792 = vadd.f32 0.0, %v3791
      %v3793 = vpop.f32.mrf.mxu0
      %3794 = vmatprep.mubr.bf16.mxu0 0
      %3795 = vmatmul.mubr.bf16.gmra.mxu0 %v3591
      %v3796 = vpop.f32.mrf.mxu0
      %v3797 = vadd.f32 0.0, %v3796
      %v3798 = vpop.f32.mrf.mxu0
      %v3799 = vpop.f32.mrf.mxu0
      %v3800 = vadd.f32 0.0, %v3799
      %v3801 = vpop.f32.mrf.mxu0
      %3802 = vmatprep.mubr.bf16.mxu0 0
      %3803 = vmatmul.mubr.bf16.gmra.mxu0 %v3592
      %v3804 = vpop.f32.mrf.mxu0
      %v3805 = vadd.f32 0.0, %v3804
      %v3806 = vpop.f32.mrf.mxu0
      %v3807 = vpop.f32.mrf.mxu0
      %v3808 = vadd.f32 0.0, %v3807
      %v3809 = vpop.f32.mrf.mxu0
      %3810 = vmatprep.mubr.bf16.mxu0 0
      %3811 = vmatmul.mubr.bf16.gmra.mxu0 %v3593
      %v3812 = vpop.f32.mrf.mxu0
      %v3813 = vadd.f32 0.0, %v3812
      %v3814 = vpop.f32.mrf.mxu0
      %v3815 = vpop.f32.mrf.mxu0
      %v3816 = vadd.f32 0.0, %v3815
      %v3817 = vpop.f32.mrf.mxu0
      %3818 = vdwg.mxu0
      %v3819 = vadd.f32 %v3529, %v3693
      %v3820 = vadd.f32 %v3530, %v3696
      %v3821 = vadd.f32 %v3531, %v3701
      %v3822 = vadd.f32 %v3532, %v3704
      %v3823 = vadd.f32 %v3533, %v3709
      %v3824 = vadd.f32 %v3534, %v3712
      %v3825 = vadd.f32 %v3535, %v3717
      %v3826 = vadd.f32 %v3536, %v3720
      %v3827 = vadd.f32 %v3537, %v3725
      %v3828 = vadd.f32 %v3538, %v3728
      %v3829 = vadd.f32 %v3539, %v3733
      %v3830 = vadd.f32 %v3540, %v3736
      %v3831 = vadd.f32 %v3541, %v3741
      %v3832 = vadd.f32 %v3542, %v3744
      %v3833 = vadd.f32 %v3543, %v3749
      %v3834 = vadd.f32 %v3544, %v3752
      %v3835 = vadd.f32 %v3545, %v3757
      %v3836 = vadd.f32 %v3546, %v3760
      %v3837 = vadd.f32 %v3547, %v3765
      %v3838 = vadd.f32 %v3548, %v3768
      %v3839 = vadd.f32 %v3549, %v3773
      %v3840 = vadd.f32 %v3550, %v3776
      %v3841 = vadd.f32 %v3551, %v3781
      %v3842 = vadd.f32 %v3552, %v3784
      %v3843 = vadd.f32 %v3553, %v3789
      %v3844 = vadd.f32 %v3554, %v3792
      %v3845 = vadd.f32 %v3555, %v3797
      %v3846 = vadd.f32 %v3556, %v3800
      %v3847 = vadd.f32 %v3557, %v3805
      %v3848 = vadd.f32 %v3558, %v3808
      %v3849 = vadd.f32 %v3559, %v3813
      %v3850 = vadd.f32 %v3560, %v3816
      %v3851 = vld [vmem:[#allocation2 + $0x10] sm:$0xf]
      %v3852 = vld [vmem:[#allocation2 + $0x14] sm:$0xf]
      %v3853 = vld [vmem:[#allocation2 + $0x18] sm:$0xf]
      %v3854 = vld [vmem:[#allocation2 + $0x1c] sm:$0xf]
      %v3855 = vld [vmem:[#allocation2 + $0x20] sm:$0xf]
      %v3856 = vld [vmem:[#allocation2 + $0x24] sm:$0xf]
      %v3857 = vld [vmem:[#allocation2 + $0x28] sm:$0xf]
      %v3858 = vld [vmem:[#allocation2 + $0x2c] sm:$0xf]
      %v3859 = vld [vmem:[#allocation2 + $0x30] sm:$0xf]
      %v3860 = vld [vmem:[#allocation2 + $0x34] sm:$0xf]
      %v3861 = vld [vmem:[#allocation2 + $0x38] sm:$0xf]
      %v3862 = vld [vmem:[#allocation2 + $0x3c] sm:$0xf]
      %v3863 = vld [vmem:[#allocation2 + $0x40] sm:$0xf]
      %v3864 = vld [vmem:[#allocation2 + $0x44] sm:$0xf]
      %v3865 = vld [vmem:[#allocation2 + $0x48] sm:$0xf]
      %v3866 = vld [vmem:[#allocation2 + $0x4c] sm:$0xf]
      %v3867 = vld [vmem:[#allocation2 + $0x50] sm:$0xf]
      %v3868 = vld [vmem:[#allocation2 + $0x54] sm:$0xf]
      %v3869 = vld [vmem:[#allocation2 + $0x58] sm:$0xf]
      %v3870 = vld [vmem:[#allocation2 + $0x5c] sm:$0xf]
      %v3871 = vld [vmem:[#allocation2 + $0x60] sm:$0xf]
      %v3872 = vld [vmem:[#allocation2 + $0x64] sm:$0xf]
      %v3873 = vld [vmem:[#allocation2 + $0x68] sm:$0xf]
      %v3874 = vld [vmem:[#allocation2 + $0x6c] sm:$0xf]
      %v3875 = vld [vmem:[#allocation2 + $0x70] sm:$0xf]
      %v3876 = vld [vmem:[#allocation2 + $0x74] sm:$0xf]
      %v3877 = vld [vmem:[#allocation2 + $0x78] sm:$0xf]
      %v3878 = vld [vmem:[#allocation2 + $0x7c] sm:$0xf]
      %v3879 = vld [vmem:[#allocation2 + $0x80] sm:$0xf]
      %v3880 = vld [vmem:[#allocation2 + $0x84] sm:$0xf]
      %v3881 = vld [vmem:[#allocation2 + $0x88] sm:$0xf]
      %v3882 = vld [vmem:[#allocation2 + $0x8c] sm:$0xf]
      %v3883 = vld [vmem:[#allocation2 + $0x90] sm:$0x1]
      %s3884 = scalar_lea.vmem %s5, 320
      %v3885 = vld [vmem:[%s3884] sm:$0xf]
      %v3886 = vld [vmem:[%s3884 + $0x4] sm:$0xf]
      %v3887 = vld [vmem:[%s3884 + $0x8] sm:$0xf]
      %v3888 = vld [vmem:[%s3884 + $0xc] sm:$0xf]
      %v3889 = vld [vmem:[%s3884 + $0x10] sm:$0xf]
      %v3890 = vld [vmem:[%s3884 + $0x14] sm:$0xf]
      %v3891 = vld [vmem:[%s3884 + $0x18] sm:$0xf]
      %v3892 = vld [vmem:[%s3884 + $0x1c] sm:$0xf]
      %v3893 = vld [vmem:[%s3884 + $0x20] sm:$0xf]
      %v3894 = vld [vmem:[%s3884 + $0x24] sm:$0xf]
      %v3895 = vld [vmem:[%s3884 + $0x28] sm:$0xf]
      %v3896 = vld [vmem:[%s3884 + $0x2c] sm:$0xf]
      %v3897 = vld [vmem:[%s3884 + $0x30] sm:$0xf]
      %v3898 = vld [vmem:[%s3884 + $0x34] sm:$0xf]
      %v3899 = vld [vmem:[%s3884 + $0x38] sm:$0xf]
      %v3900 = vld [vmem:[%s3884 + $0x3c] sm:$0xf]
      %v3934 = vunpack.c.l.b16 %v3851
      %v3935 = vunpack.c.l.b16 %v3852
      %v3936 = vunpack.c.l.b16 %v3853
      %v3937 = vunpack.c.l.b16 %v3854
      %v3938 = vunpack.c.l.b16 %v3855
      %v3939 = vunpack.c.l.b16 %v3856
      %v3940 = vunpack.c.l.b16 %v3857
      %v3941 = vunpack.c.l.b16 %v3858
      %v3942 = vunpack.c.l.b16 %v3859
      %v3943 = vunpack.c.l.b16 %v3860
      %v3944 = vunpack.c.l.b16 %v3861
      %v3945 = vunpack.c.l.b16 %v3862
      %v3946 = vunpack.c.l.b16 %v3863
      %v3947 = vunpack.c.l.b16 %v3864
      %v3948 = vunpack.c.l.b16 %v3865
      %v3949 = vunpack.c.l.b16 %v3866
      %v3950 = vunpack.c.l.b16 %v3867
      %v3951 = vunpack.c.l.b16 %v3868
      %v3952 = vunpack.c.l.b16 %v3869
      %v3953 = vunpack.c.l.b16 %v3870
      %v3954 = vunpack.c.l.b16 %v3871
      %v3955 = vunpack.c.l.b16 %v3872
      %v3956 = vunpack.c.l.b16 %v3873
      %v3957 = vunpack.c.l.b16 %v3874
      %v3958 = vunpack.c.l.b16 %v3875
      %v3959 = vunpack.c.l.b16 %v3876
      %v3960 = vunpack.c.l.b16 %v3877
      %v3961 = vunpack.c.l.b16 %v3878
      %v3962 = vunpack.c.l.b16 %v3879
      %v3963 = vunpack.c.l.b16 %v3880
      %v3964 = vunpack.c.l.b16 %v3881
      %v3965 = vunpack.c.l.b16 %v3882
      %v3966 = vunpack.c.l.b16 %v3883
      %v3967 = vpack.c.b16 %v3935, %v3934
      %v3968 = vpack.c.b16 %v3937, %v3936
      %v3969 = vpack.c.b16 %v3939, %v3938
      %v3970 = vpack.c.b16 %v3941, %v3940
      %v3971 = vpack.c.b16 %v3943, %v3942
      %v3972 = vpack.c.b16 %v3945, %v3944
      %v3973 = vpack.c.b16 %v3947, %v3946
      %v3974 = vpack.c.b16 %v3949, %v3948
      %v3975 = vpack.c.b16 %v3951, %v3950
      %v3976 = vpack.c.b16 %v3953, %v3952
      %v3977 = vpack.c.b16 %v3955, %v3954
      %v3978 = vpack.c.b16 %v3957, %v3956
      %v3979 = vpack.c.b16 %v3959, %v3958
      %v3980 = vpack.c.b16 %v3961, %v3960
      %v3981 = vpack.c.b16 %v3963, %v3962
      %v3982 = vpack.c.b16 %v3965, %v3964
      %v3983 = vpack.c.b16 %v3966, %v3966
      %v3985 = vshrl.u32 %v3967, 16
      %v3987 = vshll.u32 %v3967, 16
      %v3989 = vrot.slane %v3987, 1
      %v3990 = vor.u32 %v3985, %v3989
      %v3992 = vshll.u32 %v3968, 16
      %v3994 = vrot.slane %v3992, 1
      %v3995 = vsel %vm2405, %v3990, %v3994
      %v3996 = vshrl.u32 %v3968, 16
      %v3998 = vor.u32 %v3996, %v3994
      %v4000 = vshll.u32 %v3969, 16
      %v4002 = vrot.slane %v4000, 1
      %v4003 = vsel %vm2405, %v3998, %v4002
      %v4004 = vshrl.u32 %v3969, 16
      %v4006 = vor.u32 %v4004, %v4002
      %v4008 = vshll.u32 %v3970, 16
      %v4010 = vrot.slane %v4008, 1
      %v4011 = vsel %vm2405, %v4006, %v4010
      %v4012 = vshrl.u32 %v3970, 16
      %v4014 = vor.u32 %v4012, %v4010
      %v4016 = vshll.u32 %v3971, 16
      %v4018 = vrot.slane %v4016, 1
      %v4019 = vsel %vm2405, %v4014, %v4018
      %v4020 = vshrl.u32 %v3971, 16
      %v4022 = vor.u32 %v4020, %v4018
      %v4024 = vshll.u32 %v3972, 16
      %v4026 = vrot.slane %v4024, 1
      %v4027 = vsel %vm2405, %v4022, %v4026
      %v4028 = vshrl.u32 %v3972, 16
      %v4030 = vor.u32 %v4028, %v4026
      %v4032 = vshll.u32 %v3973, 16
      %v4034 = vrot.slane %v4032, 1
      %v4035 = vsel %vm2405, %v4030, %v4034
      %v4036 = vshrl.u32 %v3973, 16
      %v4038 = vor.u32 %v4036, %v4034
      %v4040 = vshll.u32 %v3974, 16
      %v4042 = vrot.slane %v4040, 1
      %v4043 = vsel %vm2405, %v4038, %v4042
      %v4044 = vshrl.u32 %v3974, 16
      %v4046 = vor.u32 %v4044, %v4042
      %v4048 = vshll.u32 %v3975, 16
      %v4050 = vrot.slane %v4048, 1
      %v4051 = vsel %vm2405, %v4046, %v4050
      %v4052 = vshrl.u32 %v3975, 16
      %v4054 = vor.u32 %v4052, %v4050
      %v4056 = vshll.u32 %v3976, 16
      %v4058 = vrot.slane %v4056, 1
      %v4059 = vsel %vm2405, %v4054, %v4058
      %v4060 = vshrl.u32 %v3976, 16
      %v4062 = vor.u32 %v4060, %v4058
      %v4064 = vshll.u32 %v3977, 16
      %v4066 = vrot.slane %v4064, 1
      %v4067 = vsel %vm2405, %v4062, %v4066
      %v4068 = vshrl.u32 %v3977, 16
      %v4070 = vor.u32 %v4068, %v4066
      %v4072 = vshll.u32 %v3978, 16
      %v4074 = vrot.slane %v4072, 1
      %v4075 = vsel %vm2405, %v4070, %v4074
      %v4076 = vshrl.u32 %v3978, 16
      %v4078 = vor.u32 %v4076, %v4074
      %v4080 = vshll.u32 %v3979, 16
      %v4082 = vrot.slane %v4080, 1
      %v4083 = vsel %vm2405, %v4078, %v4082
      %v4084 = vshrl.u32 %v3979, 16
      %v4086 = vor.u32 %v4084, %v4082
      %v4088 = vshll.u32 %v3980, 16
      %v4090 = vrot.slane %v4088, 1
      %v4091 = vsel %vm2405, %v4086, %v4090
      %v4092 = vshrl.u32 %v3980, 16
      %v4094 = vor.u32 %v4092, %v4090
      %v4096 = vshll.u32 %v3981, 16
      %v4098 = vrot.slane %v4096, 1
      %v4099 = vsel %vm2405, %v4094, %v4098
      %v4100 = vshrl.u32 %v3981, 16
      %v4102 = vor.u32 %v4100, %v4098
      %v4104 = vshll.u32 %v3982, 16
      %v4106 = vrot.slane %v4104, 1
      %v4107 = vsel %vm2405, %v4102, %v4106
      %v4108 = vshrl.u32 %v3982, 16
      %v4110 = vor.u32 %v4108, %v4106
      %v4112 = vshll.u32 %v3983, 16
      %v4114 = vrot.slane %v4112, 1
      %v4115 = vsel %vm2405, %v4110, %v4114
      %v4148 = vunpack.c.l.b16 %v3885
      %v4149 = vunpack.c.l.b16 %v3886
      %v4150 = vunpack.c.l.b16 %v3887
      %v4151 = vunpack.c.l.b16 %v3888
      %v4152 = vunpack.c.l.b16 %v3889
      %v4153 = vunpack.c.l.b16 %v3890
      %v4154 = vunpack.c.l.b16 %v3891
      %v4155 = vunpack.c.l.b16 %v3892
      %v4156 = vunpack.c.l.b16 %v3893
      %v4157 = vunpack.c.l.b16 %v3894
      %v4158 = vunpack.c.l.b16 %v3895
      %v4159 = vunpack.c.l.b16 %v3896
      %v4160 = vunpack.c.l.b16 %v3897
      %v4161 = vunpack.c.l.b16 %v3898
      %v4162 = vunpack.c.l.b16 %v3899
      %v4163 = vunpack.c.l.b16 %v3900
      %v4164 = vpack.c.b16 %v4149, %v4148
      %v4165 = vpack.c.b16 %v4151, %v4150
      %v4166 = vpack.c.b16 %v4153, %v4152
      %v4167 = vpack.c.b16 %v4155, %v4154
      %v4168 = vpack.c.b16 %v4157, %v4156
      %v4169 = vpack.c.b16 %v4159, %v4158
      %v4170 = vpack.c.b16 %v4161, %v4160
      %v4171 = vpack.c.b16 %v4163, %v4162
      %4180 = vmatprep.subr.bf16.mxu0 0
      %4181 = vmatpush1.bf16.msra.mxu0 %v4171
      %4182 = vmatprep.subr.bf16.mxu0 0
      %4183 = vmatpush1.bf16.msra.mxu0 %v4170
      %4184 = vmatprep.subr.bf16.mxu0 0
      %4185 = vmatpush1.bf16.msra.mxu0 %v4169
      %4186 = vmatprep.subr.bf16.mxu0 0
      %4187 = vmatpush1.bf16.msra.mxu0 %v4168
      %4188 = vmatprep.subr.bf16.mxu0 0
      %4189 = vmatpush1.bf16.msra.mxu0 %v4167
      %4190 = vmatprep.subr.bf16.mxu0 0
      %4191 = vmatpush1.bf16.msra.mxu0 %v4166
      %4192 = vmatprep.subr.bf16.mxu0 0
      %4193 = vmatpush1.bf16.msra.mxu0 %v4165
      %4194 = vmatprep.subr.bf16.mxu0 0
      %4195 = vmatpush1.bf16.msra.mxu0 %v4164
      %4196 = vmatprep.subr.bf16.mxu0 0
      %4197 = vmatpush2.bf16.msra.mxu0 0
      %4198 = vmatprep.subr.bf16.mxu0 0
      %4199 = vmatpush2.bf16.msra.mxu0 0
      %4200 = vmatprep.subr.bf16.mxu0 0
      %4201 = vmatpush2.bf16.msra.mxu0 0
      %4202 = vmatprep.subr.bf16.mxu0 0
      %4203 = vmatpush2.bf16.msra.mxu0 0
      %4204 = vmatprep.subr.bf16.mxu0 0
      %4205 = vmatpush2.bf16.msra.mxu0 0
      %4206 = vmatprep.subr.bf16.mxu0 0
      %4207 = vmatpush2.bf16.msra.mxu0 0
      %4208 = vmatprep.subr.bf16.mxu0 0
      %4209 = vmatpush2.bf16.msra.mxu0 0
      %4210 = vmatprep.subr.bf16.mxu0 0
      %4211 = vmatpush2.bf16.msra.mxu0 0
      %4212 = vmatprep.mubr.bf16.mxu0 0
      %4213 = vmatmul.mubr.bf16.gmra.mxu0 %v3995
      %v4214 = vpop.f32.mrf.mxu0
      %v4215 = vadd.f32 0.0, %v4214
      %v4216 = vpop.f32.mrf.mxu0
      %v4217 = vpop.f32.mrf.mxu0
      %v4218 = vadd.f32 0.0, %v4217
      %v4219 = vpop.f32.mrf.mxu0
      %4220 = vmatprep.mubr.bf16.mxu0 0
      %4221 = vmatmul.mubr.bf16.gmra.mxu0 %v4003
      %v4222 = vpop.f32.mrf.mxu0
      %v4223 = vadd.f32 0.0, %v4222
      %v4224 = vpop.f32.mrf.mxu0
      %v4225 = vpop.f32.mrf.mxu0
      %v4226 = vadd.f32 0.0, %v4225
      %v4227 = vpop.f32.mrf.mxu0
      %4228 = vmatprep.mubr.bf16.mxu0 0
      %4229 = vmatmul.mubr.bf16.gmra.mxu0 %v4011
      %v4230 = vpop.f32.mrf.mxu0
      %v4231 = vadd.f32 0.0, %v4230
      %v4232 = vpop.f32.mrf.mxu0
      %v4233 = vpop.f32.mrf.mxu0
      %v4234 = vadd.f32 0.0, %v4233
      %v4235 = vpop.f32.mrf.mxu0
      %4236 = vmatprep.mubr.bf16.mxu0 0
      %4237 = vmatmul.mubr.bf16.gmra.mxu0 %v4019
      %v4238 = vpop.f32.mrf.mxu0
      %v4239 = vadd.f32 0.0, %v4238
      %v4240 = vpop.f32.mrf.mxu0
      %v4241 = vpop.f32.mrf.mxu0
      %v4242 = vadd.f32 0.0, %v4241
      %v4243 = vpop.f32.mrf.mxu0
      %4244 = vmatprep.mubr.bf16.mxu0 0
      %4245 = vmatmul.mubr.bf16.gmra.mxu0 %v4027
      %v4246 = vpop.f32.mrf.mxu0
      %v4247 = vadd.f32 0.0, %v4246
      %v4248 = vpop.f32.mrf.mxu0
      %v4249 = vpop.f32.mrf.mxu0
      %v4250 = vadd.f32 0.0, %v4249
      %v4251 = vpop.f32.mrf.mxu0
      %4252 = vmatprep.mubr.bf16.mxu0 0
      %4253 = vmatmul.mubr.bf16.gmra.mxu0 %v4035
      %v4254 = vpop.f32.mrf.mxu0
      %v4255 = vadd.f32 0.0, %v4254
      %v4256 = vpop.f32.mrf.mxu0
      %v4257 = vpop.f32.mrf.mxu0
      %v4258 = vadd.f32 0.0, %v4257
      %v4259 = vpop.f32.mrf.mxu0
      %4260 = vmatprep.mubr.bf16.mxu0 0
      %4261 = vmatmul.mubr.bf16.gmra.mxu0 %v4043
      %v4262 = vpop.f32.mrf.mxu0
      %v4263 = vadd.f32 0.0, %v4262
      %v4264 = vpop.f32.mrf.mxu0
      %v4265 = vpop.f32.mrf.mxu0
      %v4266 = vadd.f32 0.0, %v4265
      %v4267 = vpop.f32.mrf.mxu0
      %4268 = vmatprep.mubr.bf16.mxu0 0
      %4269 = vmatmul.mubr.bf16.gmra.mxu0 %v4051
      %v4270 = vpop.f32.mrf.mxu0
      %v4271 = vadd.f32 0.0, %v4270
      %v4272 = vpop.f32.mrf.mxu0
      %v4273 = vpop.f32.mrf.mxu0
      %v4274 = vadd.f32 0.0, %v4273
      %v4275 = vpop.f32.mrf.mxu0
      %4276 = vmatprep.mubr.bf16.mxu0 0
      %4277 = vmatmul.mubr.bf16.gmra.mxu0 %v4059
      %v4278 = vpop.f32.mrf.mxu0
      %v4279 = vadd.f32 0.0, %v4278
      %v4280 = vpop.f32.mrf.mxu0
      %v4281 = vpop.f32.mrf.mxu0
      %v4282 = vadd.f32 0.0, %v4281
      %v4283 = vpop.f32.mrf.mxu0
      %4284 = vmatprep.mubr.bf16.mxu0 0
      %4285 = vmatmul.mubr.bf16.gmra.mxu0 %v4067
      %v4286 = vpop.f32.mrf.mxu0
      %v4287 = vadd.f32 0.0, %v4286
      %v4288 = vpop.f32.mrf.mxu0
      %v4289 = vpop.f32.mrf.mxu0
      %v4290 = vadd.f32 0.0, %v4289
      %v4291 = vpop.f32.mrf.mxu0
      %4292 = vmatprep.mubr.bf16.mxu0 0
      %4293 = vmatmul.mubr.bf16.gmra.mxu0 %v4075
      %v4294 = vpop.f32.mrf.mxu0
      %v4295 = vadd.f32 0.0, %v4294
      %v4296 = vpop.f32.mrf.mxu0
      %v4297 = vpop.f32.mrf.mxu0
      %v4298 = vadd.f32 0.0, %v4297
      %v4299 = vpop.f32.mrf.mxu0
      %4300 = vmatprep.mubr.bf16.mxu0 0
      %4301 = vmatmul.mubr.bf16.gmra.mxu0 %v4083
      %v4302 = vpop.f32.mrf.mxu0
      %v4303 = vadd.f32 0.0, %v4302
      %v4304 = vpop.f32.mrf.mxu0
      %v4305 = vpop.f32.mrf.mxu0
      %v4306 = vadd.f32 0.0, %v4305
      %v4307 = vpop.f32.mrf.mxu0
      %4308 = vmatprep.mubr.bf16.mxu0 0
      %4309 = vmatmul.mubr.bf16.gmra.mxu0 %v4091
      %v4310 = vpop.f32.mrf.mxu0
      %v4311 = vadd.f32 0.0, %v4310
      %v4312 = vpop.f32.mrf.mxu0
      %v4313 = vpop.f32.mrf.mxu0
      %v4314 = vadd.f32 0.0, %v4313
      %v4315 = vpop.f32.mrf.mxu0
      %4316 = vmatprep.mubr.bf16.mxu0 0
      %4317 = vmatmul.mubr.bf16.gmra.mxu0 %v4099
      %v4318 = vpop.f32.mrf.mxu0
      %v4319 = vadd.f32 0.0, %v4318
      %v4320 = vpop.f32.mrf.mxu0
      %v4321 = vpop.f32.mrf.mxu0
      %v4322 = vadd.f32 0.0, %v4321
      %v4323 = vpop.f32.mrf.mxu0
      %4324 = vmatprep.mubr.bf16.mxu0 0
      %4325 = vmatmul.mubr.bf16.gmra.mxu0 %v4107
      %v4326 = vpop.f32.mrf.mxu0
      %v4327 = vadd.f32 0.0, %v4326
      %v4328 = vpop.f32.mrf.mxu0
      %v4329 = vpop.f32.mrf.mxu0
      %v4330 = vadd.f32 0.0, %v4329
      %v4331 = vpop.f32.mrf.mxu0
      %4332 = vmatprep.mubr.bf16.mxu0 0
      %4333 = vmatmul.mubr.bf16.gmra.mxu0 %v4115
      %v4334 = vpop.f32.mrf.mxu0
      %v4335 = vadd.f32 0.0, %v4334
      %v4336 = vpop.f32.mrf.mxu0
      %v4337 = vpop.f32.mrf.mxu0
      %v4338 = vadd.f32 0.0, %v4337
      %v4339 = vpop.f32.mrf.mxu0
      %4340 = vdwg.mxu0
      %v4341 = vsel %vm2891, %v4215, 0.0
      %v4342 = vsel %vm2892, %v4218, 0.0
      %v4343 = vsel %vm2893, %v4223, 0.0
      %v4344 = vsel %vm2894, %v4226, 0.0
      %v4345 = vsel %vm2895, %v4231, 0.0
      %v4346 = vsel %vm2896, %v4234, 0.0
      %v4347 = vsel %vm2897, %v4239, 0.0
      %v4348 = vsel %vm2898, %v4242, 0.0
      %v4349 = vsel %vm2899, %v4247, 0.0
      %v4350 = vsel %vm2900, %v4250, 0.0
      %v4351 = vsel %vm2901, %v4255, 0.0
      %v4352 = vsel %vm2902, %v4258, 0.0
      %v4353 = vsel %vm2903, %v4263, 0.0
      %v4354 = vsel %vm2904, %v4266, 0.0
      %v4355 = vsel %vm2905, %v4271, 0.0
      %v4356 = vsel %vm2906, %v4274, 0.0
      %v4357 = vsel %vm2907, %v4279, 0.0
      %v4358 = vsel %vm2908, %v4282, 0.0
      %v4359 = vsel %vm2909, %v4287, 0.0
      %v4360 = vsel %vm2910, %v4290, 0.0
      %v4361 = vsel %vm2911, %v4295, 0.0
      %v4362 = vsel %vm2912, %v4298, 0.0
      %v4363 = vsel %vm2913, %v4303, 0.0
      %v4364 = vsel %vm2914, %v4306, 0.0
      %v4365 = vsel %vm2915, %v4311, 0.0
      %v4366 = vsel %vm2916, %v4314, 0.0
      %v4367 = vsel %vm2917, %v4319, 0.0
      %v4368 = vsel %vm2918, %v4322, 0.0
      %v4369 = vsel %vm2919, %v4327, 0.0
      %v4370 = vsel %vm2920, %v4330, 0.0
      %v4371 = vsel %vm2921, %v4335, 0.0
      %v4372 = vsel %vm2922, %v4338, 0.0
      %v4373 = vadd.f32 %v3819, %v4341
      %v4374 = vadd.f32 %v3820, %v4342
      %v4375 = vadd.f32 %v3821, %v4343
      %v4376 = vadd.f32 %v3822, %v4344
      %v4377 = vadd.f32 %v3823, %v4345
      %v4378 = vadd.f32 %v3824, %v4346
      %v4379 = vadd.f32 %v3825, %v4347
      %v4380 = vadd.f32 %v3826, %v4348
      %v4381 = vadd.f32 %v3827, %v4349
      %v4382 = vadd.f32 %v3828, %v4350
      %v4383 = vadd.f32 %v3829, %v4351
      %v4384 = vadd.f32 %v3830, %v4352
      %v4385 = vadd.f32 %v3831, %v4353
      %v4386 = vadd.f32 %v3832, %v4354
      %v4387 = vadd.f32 %v3833, %v4355
      %v4388 = vadd.f32 %v3834, %v4356
      %v4389 = vadd.f32 %v3835, %v4357
      %v4390 = vadd.f32 %v3836, %v4358
      %v4391 = vadd.f32 %v3837, %v4359
      %v4392 = vadd.f32 %v3838, %v4360
      %v4393 = vadd.f32 %v3839, %v4361
      %v4394 = vadd.f32 %v3840, %v4362
      %v4395 = vadd.f32 %v3841, %v4363
      %v4396 = vadd.f32 %v3842, %v4364
      %v4397 = vadd.f32 %v3843, %v4365
      %v4398 = vadd.f32 %v3844, %v4366
      %v4399 = vadd.f32 %v3845, %v4367
      %v4400 = vadd.f32 %v3846, %v4368
      %v4401 = vadd.f32 %v3847, %v4369
      %v4402 = vadd.f32 %v3848, %v4370
      %v4403 = vadd.f32 %v3849, %v4371
      %v4404 = vadd.f32 %v3850, %v4372
      %v4405 = vld [vmem:[#allocation2 + $0x14] sm:$0x8]
      %v4406 = vld [vmem:[#allocation2 + $0x18] sm:$0xf]
      %v4407 = vld [vmem:[#allocation2 + $0x1c] sm:$0xf]
      %v4408 = vld [vmem:[#allocation2 + $0x20] sm:$0xf]
      %v4409 = vld [vmem:[#allocation2 + $0x24] sm:$0xf]
      %v4410 = vld [vmem:[#allocation2 + $0x28] sm:$0xf]
      %v4411 = vld [vmem:[#allocation2 + $0x2c] sm:$0xf]
      %v4412 = vld [vmem:[#allocation2 + $0x30] sm:$0xf]
      %v4413 = vld [vmem:[#allocation2 + $0x34] sm:$0xf]
      %v4414 = vld [vmem:[#allocation2 + $0x38] sm:$0xf]
      %v4415 = vld [vmem:[#allocation2 + $0x3c] sm:$0xf]
      %v4416 = vld [vmem:[#allocation2 + $0x40] sm:$0xf]
      %v4417 = vld [vmem:[#allocation2 + $0x44] sm:$0xf]
      %v4418 = vld [vmem:[#allocation2 + $0x48] sm:$0xf]
      %v4419 = vld [vmem:[#allocation2 + $0x4c] sm:$0xf]
      %v4420 = vld [vmem:[#allocation2 + $0x50] sm:$0xf]
      %v4421 = vld [vmem:[#allocation2 + $0x54] sm:$0xf]
      %v4422 = vld [vmem:[#allocation2 + $0x58] sm:$0xf]
      %v4423 = vld [vmem:[#allocation2 + $0x5c] sm:$0xf]
      %v4424 = vld [vmem:[#allocation2 + $0x60] sm:$0xf]
      %v4425 = vld [vmem:[#allocation2 + $0x64] sm:$0xf]
      %v4426 = vld [vmem:[#allocation2 + $0x68] sm:$0xf]
      %v4427 = vld [vmem:[#allocation2 + $0x6c] sm:$0xf]
      %v4428 = vld [vmem:[#allocation2 + $0x70] sm:$0xf]
      %v4429 = vld [vmem:[#allocation2 + $0x74] sm:$0xf]
      %v4430 = vld [vmem:[#allocation2 + $0x78] sm:$0xf]
      %v4431 = vld [vmem:[#allocation2 + $0x7c] sm:$0xf]
      %v4432 = vld [vmem:[#allocation2 + $0x80] sm:$0xf]
      %v4433 = vld [vmem:[#allocation2 + $0x84] sm:$0xf]
      %v4434 = vld [vmem:[#allocation2 + $0x88] sm:$0xf]
      %v4435 = vld [vmem:[#allocation2 + $0x8c] sm:$0xf]
      %v4436 = vld [vmem:[#allocation2 + $0x90] sm:$0xf]
      %v4437 = vld [vmem:[#allocation2 + $0x94] sm:$0xf]
      %s4438 = scalar_lea.vmem %s5, 384
      %v4439 = vld [vmem:[%s4438] sm:$0xf]
      %v4440 = vld [vmem:[%s4438 + $0x4] sm:$0xf]
      %v4441 = vld [vmem:[%s4438 + $0x8] sm:$0xf]
      %v4442 = vld [vmem:[%s4438 + $0xc] sm:$0xf]
      %v4443 = vld [vmem:[%s4438 + $0x10] sm:$0xf]
      %v4444 = vld [vmem:[%s4438 + $0x14] sm:$0xf]
      %v4445 = vld [vmem:[%s4438 + $0x18] sm:$0xf]
      %v4446 = vld [vmem:[%s4438 + $0x1c] sm:$0xf]
      %v4447 = vld [vmem:[%s4438 + $0x20] sm:$0xf]
      %v4448 = vld [vmem:[%s4438 + $0x24] sm:$0xf]
      %v4449 = vld [vmem:[%s4438 + $0x28] sm:$0xf]
      %v4450 = vld [vmem:[%s4438 + $0x2c] sm:$0xf]
      %v4451 = vld [vmem:[%s4438 + $0x30] sm:$0xf]
      %v4452 = vld [vmem:[%s4438 + $0x34] sm:$0xf]
      %v4453 = vld [vmem:[%s4438 + $0x38] sm:$0xf]
      %v4454 = vld [vmem:[%s4438 + $0x3c] sm:$0xf]
      %v4488 = vunpack.c.l.b16 %v4405
      %v4489 = vunpack.c.l.b16 %v4406
      %v4490 = vunpack.c.l.b16 %v4407
      %v4491 = vunpack.c.l.b16 %v4408
      %v4492 = vunpack.c.l.b16 %v4409
      %v4493 = vunpack.c.l.b16 %v4410
      %v4494 = vunpack.c.l.b16 %v4411
      %v4495 = vunpack.c.l.b16 %v4412
      %v4496 = vunpack.c.l.b16 %v4413
      %v4497 = vunpack.c.l.b16 %v4414
      %v4498 = vunpack.c.l.b16 %v4415
      %v4499 = vunpack.c.l.b16 %v4416
      %v4500 = vunpack.c.l.b16 %v4417
      %v4501 = vunpack.c.l.b16 %v4418
      %v4502 = vunpack.c.l.b16 %v4419
      %v4503 = vunpack.c.l.b16 %v4420
      %v4504 = vunpack.c.l.b16 %v4421
      %v4505 = vunpack.c.l.b16 %v4422
      %v4506 = vunpack.c.l.b16 %v4423
      %v4507 = vunpack.c.l.b16 %v4424
      %v4508 = vunpack.c.l.b16 %v4425
      %v4509 = vunpack.c.l.b16 %v4426
      %v4510 = vunpack.c.l.b16 %v4427
      %v4511 = vunpack.c.l.b16 %v4428
      %v4512 = vunpack.c.l.b16 %v4429
      %v4513 = vunpack.c.l.b16 %v4430
      %v4514 = vunpack.c.l.b16 %v4431
      %v4515 = vunpack.c.l.b16 %v4432
      %v4516 = vunpack.c.l.b16 %v4433
      %v4517 = vunpack.c.l.b16 %v4434
      %v4518 = vunpack.c.l.b16 %v4435
      %v4519 = vunpack.c.l.b16 %v4436
      %v4520 = vunpack.c.l.b16 %v4437
      %v4521 = vpack.c.b16 %v4489, %v4488
      %v4522 = vpack.c.b16 %v4491, %v4490
      %v4523 = vpack.c.b16 %v4493, %v4492
      %v4524 = vpack.c.b16 %v4495, %v4494
      %v4525 = vpack.c.b16 %v4497, %v4496
      %v4526 = vpack.c.b16 %v4499, %v4498
      %v4527 = vpack.c.b16 %v4501, %v4500
      %v4528 = vpack.c.b16 %v4503, %v4502
      %v4529 = vpack.c.b16 %v4505, %v4504
      %v4530 = vpack.c.b16 %v4507, %v4506
      %v4531 = vpack.c.b16 %v4509, %v4508
      %v4532 = vpack.c.b16 %v4511, %v4510
      %v4533 = vpack.c.b16 %v4513, %v4512
      %v4534 = vpack.c.b16 %v4515, %v4514
      %v4535 = vpack.c.b16 %v4517, %v4516
      %v4536 = vpack.c.b16 %v4519, %v4518
      %v4537 = vpack.c.b16 %v4520, %v4520
      %v4539 = vshrl.u32 %v4521, 16
      %v4541 = vrot.slane %v4539, 3
      %v4542 = vshll.u32 %v4521, 16
      %v4544 = vrot.slane %v4542, 4
      %v4545 = vor.u32 %v4541, %v4544
      %v4547 = vshrl.u32 %v4522, 16
      %v4549 = vrot.slane %v4547, 3
      %v4550 = vshll.u32 %v4522, 16
      %v4552 = vrot.slane %v4550, 4
      %v4553 = vor.u32 %v4549, %v4552
      %v4554 = vsel %vm1380, %v4545, %v4553
      %v4556 = vshrl.u32 %v4523, 16
      %v4558 = vrot.slane %v4556, 3
      %v4559 = vshll.u32 %v4523, 16
      %v4561 = vrot.slane %v4559, 4
      %v4562 = vor.u32 %v4558, %v4561
      %v4563 = vsel %vm1380, %v4553, %v4562
      %v4565 = vshrl.u32 %v4524, 16
      %v4567 = vrot.slane %v4565, 3
      %v4568 = vshll.u32 %v4524, 16
      %v4570 = vrot.slane %v4568, 4
      %v4571 = vor.u32 %v4567, %v4570
      %v4572 = vsel %vm1380, %v4562, %v4571
      %v4574 = vshrl.u32 %v4525, 16
      %v4576 = vrot.slane %v4574, 3
      %v4577 = vshll.u32 %v4525, 16
      %v4579 = vrot.slane %v4577, 4
      %v4580 = vor.u32 %v4576, %v4579
      %v4581 = vsel %vm1380, %v4571, %v4580
      %v4583 = vshrl.u32 %v4526, 16
      %v4585 = vrot.slane %v4583, 3
      %v4586 = vshll.u32 %v4526, 16
      %v4588 = vrot.slane %v4586, 4
      %v4589 = vor.u32 %v4585, %v4588
      %v4590 = vsel %vm1380, %v4580, %v4589
      %v4592 = vshrl.u32 %v4527, 16
      %v4594 = vrot.slane %v4592, 3
      %v4595 = vshll.u32 %v4527, 16
      %v4597 = vrot.slane %v4595, 4
      %v4598 = vor.u32 %v4594, %v4597
      %v4599 = vsel %vm1380, %v4589, %v4598
      %v4601 = vshrl.u32 %v4528, 16
      %v4603 = vrot.slane %v4601, 3
      %v4604 = vshll.u32 %v4528, 16
      %v4606 = vrot.slane %v4604, 4
      %v4607 = vor.u32 %v4603, %v4606
      %v4608 = vsel %vm1380, %v4598, %v4607
      %v4610 = vshrl.u32 %v4529, 16
      %v4612 = vrot.slane %v4610, 3
      %v4613 = vshll.u32 %v4529, 16
      %v4615 = vrot.slane %v4613, 4
      %v4616 = vor.u32 %v4612, %v4615
      %v4617 = vsel %vm1380, %v4607, %v4616
      %v4619 = vshrl.u32 %v4530, 16
      %v4621 = vrot.slane %v4619, 3
      %v4622 = vshll.u32 %v4530, 16
      %v4624 = vrot.slane %v4622, 4
      %v4625 = vor.u32 %v4621, %v4624
      %v4626 = vsel %vm1380, %v4616, %v4625
      %v4628 = vshrl.u32 %v4531, 16
      %v4630 = vrot.slane %v4628, 3
      %v4631 = vshll.u32 %v4531, 16
      %v4633 = vrot.slane %v4631, 4
      %v4634 = vor.u32 %v4630, %v4633
      %v4635 = vsel %vm1380, %v4625, %v4634
      %v4637 = vshrl.u32 %v4532, 16
      %v4639 = vrot.slane %v4637, 3
      %v4640 = vshll.u32 %v4532, 16
      %v4642 = vrot.slane %v4640, 4
      %v4643 = vor.u32 %v4639, %v4642
      %v4644 = vsel %vm1380, %v4634, %v4643
      %v4646 = vshrl.u32 %v4533, 16
      %v4648 = vrot.slane %v4646, 3
      %v4649 = vshll.u32 %v4533, 16
      %v4651 = vrot.slane %v4649, 4
      %v4652 = vor.u32 %v4648, %v4651
      %v4653 = vsel %vm1380, %v4643, %v4652
      %v4655 = vshrl.u32 %v4534, 16
      %v4657 = vrot.slane %v4655, 3
      %v4658 = vshll.u32 %v4534, 16
      %v4660 = vrot.slane %v4658, 4
      %v4661 = vor.u32 %v4657, %v4660
      %v4662 = vsel %vm1380, %v4652, %v4661
      %v4664 = vshrl.u32 %v4535, 16
      %v4666 = vrot.slane %v4664, 3
      %v4667 = vshll.u32 %v4535, 16
      %v4669 = vrot.slane %v4667, 4
      %v4670 = vor.u32 %v4666, %v4669
      %v4671 = vsel %vm1380, %v4661, %v4670
      %v4673 = vshrl.u32 %v4536, 16
      %v4675 = vrot.slane %v4673, 3
      %v4676 = vshll.u32 %v4536, 16
      %v4678 = vrot.slane %v4676, 4
      %v4679 = vor.u32 %v4675, %v4678
      %v4680 = vsel %vm1380, %v4670, %v4679
      %v4682 = vshrl.u32 %v4537, 16
      %v4684 = vrot.slane %v4682, 3
      %v4685 = vshll.u32 %v4537, 16
      %v4687 = vrot.slane %v4685, 4
      %v4688 = vor.u32 %v4684, %v4687
      %v4689 = vsel %vm1380, %v4679, %v4688
      %v4722 = vunpack.c.l.b16 %v4439
      %v4723 = vunpack.c.l.b16 %v4440
      %v4724 = vunpack.c.l.b16 %v4441
      %v4725 = vunpack.c.l.b16 %v4442
      %v4726 = vunpack.c.l.b16 %v4443
      %v4727 = vunpack.c.l.b16 %v4444
      %v4728 = vunpack.c.l.b16 %v4445
      %v4729 = vunpack.c.l.b16 %v4446
      %v4730 = vunpack.c.l.b16 %v4447
      %v4731 = vunpack.c.l.b16 %v4448
      %v4732 = vunpack.c.l.b16 %v4449
      %v4733 = vunpack.c.l.b16 %v4450
      %v4734 = vunpack.c.l.b16 %v4451
      %v4735 = vunpack.c.l.b16 %v4452
      %v4736 = vunpack.c.l.b16 %v4453
      %v4737 = vunpack.c.l.b16 %v4454
      %v4738 = vpack.c.b16 %v4723, %v4722
      %v4739 = vpack.c.b16 %v4725, %v4724
      %v4740 = vpack.c.b16 %v4727, %v4726
      %v4741 = vpack.c.b16 %v4729, %v4728
      %v4742 = vpack.c.b16 %v4731, %v4730
      %v4743 = vpack.c.b16 %v4733, %v4732
      %v4744 = vpack.c.b16 %v4735, %v4734
      %v4745 = vpack.c.b16 %v4737, %v4736
      %4754 = vmatprep.subr.bf16.mxu0 0
      %4755 = vmatpush1.bf16.msra.mxu0 %v4745
      %4756 = vmatprep.subr.bf16.mxu0 0
      %4757 = vmatpush1.bf16.msra.mxu0 %v4744
      %4758 = vmatprep.subr.bf16.mxu0 0
      %4759 = vmatpush1.bf16.msra.mxu0 %v4743
      %4760 = vmatprep.subr.bf16.mxu0 0
      %4761 = vmatpush1.bf16.msra.mxu0 %v4742
      %4762 = vmatprep.subr.bf16.mxu0 0
      %4763 = vmatpush1.bf16.msra.mxu0 %v4741
      %4764 = vmatprep.subr.bf16.mxu0 0
      %4765 = vmatpush1.bf16.msra.mxu0 %v4740
      %4766 = vmatprep.subr.bf16.mxu0 0
      %4767 = vmatpush1.bf16.msra.mxu0 %v4739
      %4768 = vmatprep.subr.bf16.mxu0 0
      %4769 = vmatpush1.bf16.msra.mxu0 %v4738
      %4770 = vmatprep.subr.bf16.mxu0 0
      %4771 = vmatpush2.bf16.msra.mxu0 0
      %4772 = vmatprep.subr.bf16.mxu0 0
      %4773 = vmatpush2.bf16.msra.mxu0 0
      %4774 = vmatprep.subr.bf16.mxu0 0
      %4775 = vmatpush2.bf16.msra.mxu0 0
      %4776 = vmatprep.subr.bf16.mxu0 0
      %4777 = vmatpush2.bf16.msra.mxu0 0
      %4778 = vmatprep.subr.bf16.mxu0 0
      %4779 = vmatpush2.bf16.msra.mxu0 0
      %4780 = vmatprep.subr.bf16.mxu0 0
      %4781 = vmatpush2.bf16.msra.mxu0 0
      %4782 = vmatprep.subr.bf16.mxu0 0
      %4783 = vmatpush2.bf16.msra.mxu0 0
      %4784 = vmatprep.subr.bf16.mxu0 0
      %4785 = vmatpush2.bf16.msra.mxu0 0
      %4786 = vmatprep.mubr.bf16.mxu0 0
      %4787 = vmatmul.mubr.bf16.gmra.mxu0 %v4554
      %v4788 = vpop.f32.mrf.mxu0
      %v4789 = vadd.f32 0.0, %v4788
      %v4790 = vpop.f32.mrf.mxu0
      %v4791 = vpop.f32.mrf.mxu0
      %v4792 = vadd.f32 0.0, %v4791
      %v4793 = vpop.f32.mrf.mxu0
      %4794 = vmatprep.mubr.bf16.mxu0 0
      %4795 = vmatmul.mubr.bf16.gmra.mxu0 %v4563
      %v4796 = vpop.f32.mrf.mxu0
      %v4797 = vadd.f32 0.0, %v4796
      %v4798 = vpop.f32.mrf.mxu0
      %v4799 = vpop.f32.mrf.mxu0
      %v4800 = vadd.f32 0.0, %v4799
      %v4801 = vpop.f32.mrf.mxu0
      %4802 = vmatprep.mubr.bf16.mxu0 0
      %4803 = vmatmul.mubr.bf16.gmra.mxu0 %v4572
      %v4804 = vpop.f32.mrf.mxu0
      %v4805 = vadd.f32 0.0, %v4804
      %v4806 = vpop.f32.mrf.mxu0
      %v4807 = vpop.f32.mrf.mxu0
      %v4808 = vadd.f32 0.0, %v4807
      %v4809 = vpop.f32.mrf.mxu0
      %4810 = vmatprep.mubr.bf16.mxu0 0
      %4811 = vmatmul.mubr.bf16.gmra.mxu0 %v4581
      %v4812 = vpop.f32.mrf.mxu0
      %v4813 = vadd.f32 0.0, %v4812
      %v4814 = vpop.f32.mrf.mxu0
      %v4815 = vpop.f32.mrf.mxu0
      %v4816 = vadd.f32 0.0, %v4815
      %v4817 = vpop.f32.mrf.mxu0
      %4818 = vmatprep.mubr.bf16.mxu0 0
      %4819 = vmatmul.mubr.bf16.gmra.mxu0 %v4590
      %v4820 = vpop.f32.mrf.mxu0
      %v4821 = vadd.f32 0.0, %v4820
      %v4822 = vpop.f32.mrf.mxu0
      %v4823 = vpop.f32.mrf.mxu0
      %v4824 = vadd.f32 0.0, %v4823
      %v4825 = vpop.f32.mrf.mxu0
      %4826 = vmatprep.mubr.bf16.mxu0 0
      %4827 = vmatmul.mubr.bf16.gmra.mxu0 %v4599
      %v4828 = vpop.f32.mrf.mxu0
      %v4829 = vadd.f32 0.0, %v4828
      %v4830 = vpop.f32.mrf.mxu0
      %v4831 = vpop.f32.mrf.mxu0
      %v4832 = vadd.f32 0.0, %v4831
      %v4833 = vpop.f32.mrf.mxu0
      %4834 = vmatprep.mubr.bf16.mxu0 0
      %4835 = vmatmul.mubr.bf16.gmra.mxu0 %v4608
      %v4836 = vpop.f32.mrf.mxu0
      %v4837 = vadd.f32 0.0, %v4836
      %v4838 = vpop.f32.mrf.mxu0
      %v4839 = vpop.f32.mrf.mxu0
      %v4840 = vadd.f32 0.0, %v4839
      %v4841 = vpop.f32.mrf.mxu0
      %4842 = vmatprep.mubr.bf16.mxu0 0
      %4843 = vmatmul.mubr.bf16.gmra.mxu0 %v4617
      %v4844 = vpop.f32.mrf.mxu0
      %v4845 = vadd.f32 0.0, %v4844
      %v4846 = vpop.f32.mrf.mxu0
      %v4847 = vpop.f32.mrf.mxu0
      %v4848 = vadd.f32 0.0, %v4847
      %v4849 = vpop.f32.mrf.mxu0
      %4850 = vmatprep.mubr.bf16.mxu0 0
      %4851 = vmatmul.mubr.bf16.gmra.mxu0 %v4626
      %v4852 = vpop.f32.mrf.mxu0
      %v4853 = vadd.f32 0.0, %v4852
      %v4854 = vpop.f32.mrf.mxu0
      %v4855 = vpop.f32.mrf.mxu0
      %v4856 = vadd.f32 0.0, %v4855
      %v4857 = vpop.f32.mrf.mxu0
      %4858 = vmatprep.mubr.bf16.mxu0 0
      %4859 = vmatmul.mubr.bf16.gmra.mxu0 %v4635
      %v4860 = vpop.f32.mrf.mxu0
      %v4861 = vadd.f32 0.0, %v4860
      %v4862 = vpop.f32.mrf.mxu0
      %v4863 = vpop.f32.mrf.mxu0
      %v4864 = vadd.f32 0.0, %v4863
      %v4865 = vpop.f32.mrf.mxu0
      %4866 = vmatprep.mubr.bf16.mxu0 0
      %4867 = vmatmul.mubr.bf16.gmra.mxu0 %v4644
      %v4868 = vpop.f32.mrf.mxu0
      %v4869 = vadd.f32 0.0, %v4868
      %v4870 = vpop.f32.mrf.mxu0
      %v4871 = vpop.f32.mrf.mxu0
      %v4872 = vadd.f32 0.0, %v4871
      %v4873 = vpop.f32.mrf.mxu0
      %4874 = vmatprep.mubr.bf16.mxu0 0
      %4875 = vmatmul.mubr.bf16.gmra.mxu0 %v4653
      %v4876 = vpop.f32.mrf.mxu0
      %v4877 = vadd.f32 0.0, %v4876
      %v4878 = vpop.f32.mrf.mxu0
      %v4879 = vpop.f32.mrf.mxu0
      %v4880 = vadd.f32 0.0, %v4879
      %v4881 = vpop.f32.mrf.mxu0
      %4882 = vmatprep.mubr.bf16.mxu0 0
      %4883 = vmatmul.mubr.bf16.gmra.mxu0 %v4662
      %v4884 = vpop.f32.mrf.mxu0
      %v4885 = vadd.f32 0.0, %v4884
      %v4886 = vpop.f32.mrf.mxu0
      %v4887 = vpop.f32.mrf.mxu0
      %v4888 = vadd.f32 0.0, %v4887
      %v4889 = vpop.f32.mrf.mxu0
      %4890 = vmatprep.mubr.bf16.mxu0 0
      %4891 = vmatmul.mubr.bf16.gmra.mxu0 %v4671
      %v4892 = vpop.f32.mrf.mxu0
      %v4893 = vadd.f32 0.0, %v4892
      %v4894 = vpop.f32.mrf.mxu0
      %v4895 = vpop.f32.mrf.mxu0
      %v4896 = vadd.f32 0.0, %v4895
      %v4897 = vpop.f32.mrf.mxu0
      %4898 = vmatprep.mubr.bf16.mxu0 0
      %4899 = vmatmul.mubr.bf16.gmra.mxu0 %v4680
      %v4900 = vpop.f32.mrf.mxu0
      %v4901 = vadd.f32 0.0, %v4900
      %v4902 = vpop.f32.mrf.mxu0
      %v4903 = vpop.f32.mrf.mxu0
      %v4904 = vadd.f32 0.0, %v4903
      %v4905 = vpop.f32.mrf.mxu0
      %4906 = vmatprep.mubr.bf16.mxu0 0
      %4907 = vmatmul.mubr.bf16.gmra.mxu0 %v4689
      %v4908 = vpop.f32.mrf.mxu0
      %v4909 = vadd.f32 0.0, %v4908
      %v4910 = vpop.f32.mrf.mxu0
      %v4911 = vpop.f32.mrf.mxu0
      %v4912 = vadd.f32 0.0, %v4911
      %v4913 = vpop.f32.mrf.mxu0
      %4914 = vdwg.mxu0
      %v4915 = vsel %vm1886, %v4789, 0.0
      %v4916 = vsel %vm1887, %v4792, 0.0
      %v4917 = vsel %vm1888, %v4797, 0.0
      %v4918 = vsel %vm1889, %v4800, 0.0
      %v4919 = vsel %vm1890, %v4805, 0.0
      %v4920 = vsel %vm1891, %v4808, 0.0
      %v4921 = vsel %vm1892, %v4813, 0.0
      %v4922 = vsel %vm1893, %v4816, 0.0
      %v4923 = vsel %vm1894, %v4821, 0.0
      %v4924 = vsel %vm1895, %v4824, 0.0
      %v4925 = vsel %vm1896, %v4829, 0.0
      %v4926 = vsel %vm1897, %v4832, 0.0
      %v4927 = vsel %vm1898, %v4837, 0.0
      %v4928 = vsel %vm1899, %v4840, 0.0
      %v4929 = vsel %vm1900, %v4845, 0.0
      %v4930 = vsel %vm1901, %v4848, 0.0
      %v4931 = vsel %vm1902, %v4853, 0.0
      %v4932 = vsel %vm1903, %v4856, 0.0
      %v4933 = vsel %vm1904, %v4861, 0.0
      %v4934 = vsel %vm1905, %v4864, 0.0
      %v4935 = vsel %vm1906, %v4869, 0.0
      %v4936 = vsel %vm1907, %v4872, 0.0
      %v4937 = vsel %vm1908, %v4877, 0.0
      %v4938 = vsel %vm1909, %v4880, 0.0
      %v4939 = vsel %vm1910, %v4885, 0.0
      %v4940 = vsel %vm1911, %v4888, 0.0
      %v4941 = vsel %vm1912, %v4893, 0.0
      %v4942 = vsel %vm1913, %v4896, 0.0
      %v4943 = vsel %vm1914, %v4901, 0.0
      %v4944 = vsel %vm1915, %v4904, 0.0
      %v4945 = vsel %vm1916, %v4909, 0.0
      %v4946 = vsel %vm1917, %v4912, 0.0
      %v4947 = vadd.f32 %v4373, %v4915
      %v4948 = vadd.f32 %v4374, %v4916
      %v4949 = vadd.f32 %v4375, %v4917
      %v4950 = vadd.f32 %v4376, %v4918
      %v4951 = vadd.f32 %v4377, %v4919
      %v4952 = vadd.f32 %v4378, %v4920
      %v4953 = vadd.f32 %v4379, %v4921
      %v4954 = vadd.f32 %v4380, %v4922
      %v4955 = vadd.f32 %v4381, %v4923
      %v4956 = vadd.f32 %v4382, %v4924
      %v4957 = vadd.f32 %v4383, %v4925
      %v4958 = vadd.f32 %v4384, %v4926
      %v4959 = vadd.f32 %v4385, %v4927
      %v4960 = vadd.f32 %v4386, %v4928
      %v4961 = vadd.f32 %v4387, %v4929
      %v4962 = vadd.f32 %v4388, %v4930
      %v4963 = vadd.f32 %v4389, %v4931
      %v4964 = vadd.f32 %v4390, %v4932
      %v4965 = vadd.f32 %v4391, %v4933
      %v4966 = vadd.f32 %v4392, %v4934
      %v4967 = vadd.f32 %v4393, %v4935
      %v4968 = vadd.f32 %v4394, %v4936
      %v4969 = vadd.f32 %v4395, %v4937
      %v4970 = vadd.f32 %v4396, %v4938
      %v4971 = vadd.f32 %v4397, %v4939
      %v4972 = vadd.f32 %v4398, %v4940
      %v4973 = vadd.f32 %v4399, %v4941
      %v4974 = vadd.f32 %v4400, %v4942
      %v4975 = vadd.f32 %v4401, %v4943
      %v4976 = vadd.f32 %v4402, %v4944
      %v4977 = vadd.f32 %v4403, %v4945
      %v4978 = vadd.f32 %v4404, %v4946
      %s4979 = scalar_lea.vmem %s5, 448
      %v4980 = vld [vmem:[%s4979] sm:$0xf]
      %v4981 = vld [vmem:[%s4979 + $0x4] sm:$0xf]
      %v4982 = vld [vmem:[%s4979 + $0x8] sm:$0xf]
      %v4983 = vld [vmem:[%s4979 + $0xc] sm:$0xf]
      %v4984 = vld [vmem:[%s4979 + $0x10] sm:$0xf]
      %v4985 = vld [vmem:[%s4979 + $0x14] sm:$0xf]
      %v4986 = vld [vmem:[%s4979 + $0x18] sm:$0xf]
      %v4987 = vld [vmem:[%s4979 + $0x1c] sm:$0xf]
      %v4988 = vld [vmem:[%s4979 + $0x20] sm:$0xf]
      %v4989 = vld [vmem:[%s4979 + $0x24] sm:$0xf]
      %v4990 = vld [vmem:[%s4979 + $0x28] sm:$0xf]
      %v4991 = vld [vmem:[%s4979 + $0x2c] sm:$0xf]
      %v4992 = vld [vmem:[%s4979 + $0x30] sm:$0xf]
      %v4993 = vld [vmem:[%s4979 + $0x34] sm:$0xf]
      %v4994 = vld [vmem:[%s4979 + $0x38] sm:$0xf]
      %v4995 = vld [vmem:[%s4979 + $0x3c] sm:$0xf]
      %v4996 = vpack.c.b16 %v4490, %v4489
      %v4997 = vpack.c.b16 %v4492, %v4491
      %v4998 = vpack.c.b16 %v4494, %v4493
      %v4999 = vpack.c.b16 %v4496, %v4495
      %v5000 = vpack.c.b16 %v4498, %v4497
      %v5001 = vpack.c.b16 %v4500, %v4499
      %v5002 = vpack.c.b16 %v4502, %v4501
      %v5003 = vpack.c.b16 %v4504, %v4503
      %v5004 = vpack.c.b16 %v4506, %v4505
      %v5005 = vpack.c.b16 %v4508, %v4507
      %v5006 = vpack.c.b16 %v4510, %v4509
      %v5007 = vpack.c.b16 %v4512, %v4511
      %v5008 = vpack.c.b16 %v4514, %v4513
      %v5009 = vpack.c.b16 %v4516, %v4515
      %v5010 = vpack.c.b16 %v4518, %v4517
      %v5011 = vpack.c.b16 %v4520, %v4519
      %v5044 = vunpack.c.l.b16 %v4980
      %v5045 = vunpack.c.l.b16 %v4981
      %v5046 = vunpack.c.l.b16 %v4982
      %v5047 = vunpack.c.l.b16 %v4983
      %v5048 = vunpack.c.l.b16 %v4984
      %v5049 = vunpack.c.l.b16 %v4985
      %v5050 = vunpack.c.l.b16 %v4986
      %v5051 = vunpack.c.l.b16 %v4987
      %v5052 = vunpack.c.l.b16 %v4988
      %v5053 = vunpack.c.l.b16 %v4989
      %v5054 = vunpack.c.l.b16 %v4990
      %v5055 = vunpack.c.l.b16 %v4991
      %v5056 = vunpack.c.l.b16 %v4992
      %v5057 = vunpack.c.l.b16 %v4993
      %v5058 = vunpack.c.l.b16 %v4994
      %v5059 = vunpack.c.l.b16 %v4995
      %v5060 = vpack.c.b16 %v5045, %v5044
      %v5061 = vpack.c.b16 %v5047, %v5046
      %v5062 = vpack.c.b16 %v5049, %v5048
      %v5063 = vpack.c.b16 %v5051, %v5050
      %v5064 = vpack.c.b16 %v5053, %v5052
      %v5065 = vpack.c.b16 %v5055, %v5054
      %v5066 = vpack.c.b16 %v5057, %v5056
      %v5067 = vpack.c.b16 %v5059, %v5058
      %5076 = vmatprep.subr.bf16.mxu0 0
      %5077 = vmatpush1.bf16.msra.mxu0 %v5067
      %5078 = vmatprep.subr.bf16.mxu0 0
      %5079 = vmatpush1.bf16.msra.mxu0 %v5066
      %5080 = vmatprep.subr.bf16.mxu0 0
      %5081 = vmatpush1.bf16.msra.mxu0 %v5065
      %5082 = vmatprep.subr.bf16.mxu0 0
      %5083 = vmatpush1.bf16.msra.mxu0 %v5064
      %5084 = vmatprep.subr.bf16.mxu0 0
      %5085 = vmatpush1.bf16.msra.mxu0 %v5063
      %5086 = vmatprep.subr.bf16.mxu0 0
      %5087 = vmatpush1.bf16.msra.mxu0 %v5062
      %5088 = vmatprep.subr.bf16.mxu0 0
      %5089 = vmatpush1.bf16.msra.mxu0 %v5061
      %5090 = vmatprep.subr.bf16.mxu0 0
      %5091 = vmatpush1.bf16.msra.mxu0 %v5060
      %5092 = vmatprep.subr.bf16.mxu0 0
      %5093 = vmatpush2.bf16.msra.mxu0 0
      %5094 = vmatprep.subr.bf16.mxu0 0
      %5095 = vmatpush2.bf16.msra.mxu0 0
      %5096 = vmatprep.subr.bf16.mxu0 0
      %5097 = vmatpush2.bf16.msra.mxu0 0
      %5098 = vmatprep.subr.bf16.mxu0 0
      %5099 = vmatpush2.bf16.msra.mxu0 0
      %5100 = vmatprep.subr.bf16.mxu0 0
      %5101 = vmatpush2.bf16.msra.mxu0 0
      %5102 = vmatprep.subr.bf16.mxu0 0
      %5103 = vmatpush2.bf16.msra.mxu0 0
      %5104 = vmatprep.subr.bf16.mxu0 0
      %5105 = vmatpush2.bf16.msra.mxu0 0
      %5106 = vmatprep.subr.bf16.mxu0 0
      %5107 = vmatpush2.bf16.msra.mxu0 0
      %5108 = vmatprep.mubr.bf16.mxu0 0
      %5109 = vmatmul.mubr.bf16.gmra.mxu0 %v4996
      %v5110 = vpop.f32.mrf.mxu0
      %v5111 = vadd.f32 0.0, %v5110
      %v5112 = vpop.f32.mrf.mxu0
      %v5113 = vpop.f32.mrf.mxu0
      %v5114 = vadd.f32 0.0, %v5113
      %v5115 = vpop.f32.mrf.mxu0
      %5116 = vmatprep.mubr.bf16.mxu0 0
      %5117 = vmatmul.mubr.bf16.gmra.mxu0 %v4997
      %v5118 = vpop.f32.mrf.mxu0
      %v5119 = vadd.f32 0.0, %v5118
      %v5120 = vpop.f32.mrf.mxu0
      %v5121 = vpop.f32.mrf.mxu0
      %v5122 = vadd.f32 0.0, %v5121
      %v5123 = vpop.f32.mrf.mxu0
      %5124 = vmatprep.mubr.bf16.mxu0 0
      %5125 = vmatmul.mubr.bf16.gmra.mxu0 %v4998
      %v5126 = vpop.f32.mrf.mxu0
      %v5127 = vadd.f32 0.0, %v5126
      %v5128 = vpop.f32.mrf.mxu0
      %v5129 = vpop.f32.mrf.mxu0
      %v5130 = vadd.f32 0.0, %v5129
      %v5131 = vpop.f32.mrf.mxu0
      %5132 = vmatprep.mubr.bf16.mxu0 0
      %5133 = vmatmul.mubr.bf16.gmra.mxu0 %v4999
      %v5134 = vpop.f32.mrf.mxu0
      %v5135 = vadd.f32 0.0, %v5134
      %v5136 = vpop.f32.mrf.mxu0
      %v5137 = vpop.f32.mrf.mxu0
      %v5138 = vadd.f32 0.0, %v5137
      %v5139 = vpop.f32.mrf.mxu0
      %5140 = vmatprep.mubr.bf16.mxu0 0
      %5141 = vmatmul.mubr.bf16.gmra.mxu0 %v5000
      %v5142 = vpop.f32.mrf.mxu0
      %v5143 = vadd.f32 0.0, %v5142
      %v5144 = vpop.f32.mrf.mxu0
      %v5145 = vpop.f32.mrf.mxu0
      %v5146 = vadd.f32 0.0, %v5145
      %v5147 = vpop.f32.mrf.mxu0
      %5148 = vmatprep.mubr.bf16.mxu0 0
      %5149 = vmatmul.mubr.bf16.gmra.mxu0 %v5001
      %v5150 = vpop.f32.mrf.mxu0
      %v5151 = vadd.f32 0.0, %v5150
      %v5152 = vpop.f32.mrf.mxu0
      %v5153 = vpop.f32.mrf.mxu0
      %v5154 = vadd.f32 0.0, %v5153
      %v5155 = vpop.f32.mrf.mxu0
      %5156 = vmatprep.mubr.bf16.mxu0 0
      %5157 = vmatmul.mubr.bf16.gmra.mxu0 %v5002
      %v5158 = vpop.f32.mrf.mxu0
      %v5159 = vadd.f32 0.0, %v5158
      %v5160 = vpop.f32.mrf.mxu0
      %v5161 = vpop.f32.mrf.mxu0
      %v5162 = vadd.f32 0.0, %v5161
      %v5163 = vpop.f32.mrf.mxu0
      %5164 = vmatprep.mubr.bf16.mxu0 0
      %5165 = vmatmul.mubr.bf16.gmra.mxu0 %v5003
      %v5166 = vpop.f32.mrf.mxu0
      %v5167 = vadd.f32 0.0, %v5166
      %v5168 = vpop.f32.mrf.mxu0
      %v5169 = vpop.f32.mrf.mxu0
      %v5170 = vadd.f32 0.0, %v5169
      %v5171 = vpop.f32.mrf.mxu0
      %5172 = vmatprep.mubr.bf16.mxu0 0
      %5173 = vmatmul.mubr.bf16.gmra.mxu0 %v5004
      %v5174 = vpop.f32.mrf.mxu0
      %v5175 = vadd.f32 0.0, %v5174
      %v5176 = vpop.f32.mrf.mxu0
      %v5177 = vpop.f32.mrf.mxu0
      %v5178 = vadd.f32 0.0, %v5177
      %v5179 = vpop.f32.mrf.mxu0
      %5180 = vmatprep.mubr.bf16.mxu0 0
      %5181 = vmatmul.mubr.bf16.gmra.mxu0 %v5005
      %v5182 = vpop.f32.mrf.mxu0
      %v5183 = vadd.f32 0.0, %v5182
      %v5184 = vpop.f32.mrf.mxu0
      %v5185 = vpop.f32.mrf.mxu0
      %v5186 = vadd.f32 0.0, %v5185
      %v5187 = vpop.f32.mrf.mxu0
      %5188 = vmatprep.mubr.bf16.mxu0 0
      %5189 = vmatmul.mubr.bf16.gmra.mxu0 %v5006
      %v5190 = vpop.f32.mrf.mxu0
      %v5191 = vadd.f32 0.0, %v5190
      %v5192 = vpop.f32.mrf.mxu0
      %v5193 = vpop.f32.mrf.mxu0
      %v5194 = vadd.f32 0.0, %v5193
      %v5195 = vpop.f32.mrf.mxu0
      %5196 = vmatprep.mubr.bf16.mxu0 0
      %5197 = vmatmul.mubr.bf16.gmra.mxu0 %v5007
      %v5198 = vpop.f32.mrf.mxu0
      %v5199 = vadd.f32 0.0, %v5198
      %v5200 = vpop.f32.mrf.mxu0
      %v5201 = vpop.f32.mrf.mxu0
      %v5202 = vadd.f32 0.0, %v5201
      %v5203 = vpop.f32.mrf.mxu0
      %5204 = vmatprep.mubr.bf16.mxu0 0
      %5205 = vmatmul.mubr.bf16.gmra.mxu0 %v5008
      %v5206 = vpop.f32.mrf.mxu0
      %v5207 = vadd.f32 0.0, %v5206
      %v5208 = vpop.f32.mrf.mxu0
      %v5209 = vpop.f32.mrf.mxu0
      %v5210 = vadd.f32 0.0, %v5209
      %v5211 = vpop.f32.mrf.mxu0
      %5212 = vmatprep.mubr.bf16.mxu0 0
      %5213 = vmatmul.mubr.bf16.gmra.mxu0 %v5009
      %v5214 = vpop.f32.mrf.mxu0
      %v5215 = vadd.f32 0.0, %v5214
      %v5216 = vpop.f32.mrf.mxu0
      %v5217 = vpop.f32.mrf.mxu0
      %v5218 = vadd.f32 0.0, %v5217
      %v5219 = vpop.f32.mrf.mxu0
      %5220 = vmatprep.mubr.bf16.mxu0 0
      %5221 = vmatmul.mubr.bf16.gmra.mxu0 %v5010
      %v5222 = vpop.f32.mrf.mxu0
      %v5223 = vadd.f32 0.0, %v5222
      %v5224 = vpop.f32.mrf.mxu0
      %v5225 = vpop.f32.mrf.mxu0
      %v5226 = vadd.f32 0.0, %v5225
      %v5227 = vpop.f32.mrf.mxu0
      %5228 = vmatprep.mubr.bf16.mxu0 0
      %5229 = vmatmul.mubr.bf16.gmra.mxu0 %v5011
      %v5230 = vpop.f32.mrf.mxu0
      %v5231 = vadd.f32 0.0, %v5230
      %v5232 = vpop.f32.mrf.mxu0
      %v5233 = vpop.f32.mrf.mxu0
      %v5234 = vadd.f32 0.0, %v5233
      %v5235 = vpop.f32.mrf.mxu0
      %5236 = vdwg.mxu0
      %v5237 = vadd.f32 %v4947, %v5111
      %v5238 = vadd.f32 %v4948, %v5114
      %v5239 = vadd.f32 %v4949, %v5119
      %v5240 = vadd.f32 %v4950, %v5122
      %v5241 = vadd.f32 %v4951, %v5127
      %v5242 = vadd.f32 %v4952, %v5130
      %v5243 = vadd.f32 %v4953, %v5135
      %v5244 = vadd.f32 %v4954, %v5138
      %v5245 = vadd.f32 %v4955, %v5143
      %v5246 = vadd.f32 %v4956, %v5146
      %v5247 = vadd.f32 %v4957, %v5151
      %v5248 = vadd.f32 %v4958, %v5154
      %v5249 = vadd.f32 %v4959, %v5159
      %v5250 = vadd.f32 %v4960, %v5162
      %v5251 = vadd.f32 %v4961, %v5167
      %v5252 = vadd.f32 %v4962, %v5170
      %v5253 = vadd.f32 %v4963, %v5175
      %v5254 = vadd.f32 %v4964, %v5178
      %v5255 = vadd.f32 %v4965, %v5183
      %v5256 = vadd.f32 %v4966, %v5186
      %v5257 = vadd.f32 %v4967, %v5191
      %v5258 = vadd.f32 %v4968, %v5194
      %v5259 = vadd.f32 %v4969, %v5199
      %v5260 = vadd.f32 %v4970, %v5202
      %v5261 = vadd.f32 %v4971, %v5207
      %v5262 = vadd.f32 %v4972, %v5210
      %v5263 = vadd.f32 %v4973, %v5215
      %v5264 = vadd.f32 %v4974, %v5218
      %v5265 = vadd.f32 %v4975, %v5223
      %v5266 = vadd.f32 %v4976, %v5226
      %v5267 = vadd.f32 %v4977, %v5231
      %v5268 = vadd.f32 %v4978, %v5234
      %v5269 = vld [vmem:[#allocation2 + $0x18] sm:$0xf]
      %v5270 = vld [vmem:[#allocation2 + $0x1c] sm:$0xf]
      %v5271 = vld [vmem:[#allocation2 + $0x20] sm:$0xf]
      %v5272 = vld [vmem:[#allocation2 + $0x24] sm:$0xf]
      %v5273 = vld [vmem:[#allocation2 + $0x28] sm:$0xf]
      %v5274 = vld [vmem:[#allocation2 + $0x2c] sm:$0xf]
      %v5275 = vld [vmem:[#allocation2 + $0x30] sm:$0xf]
      %v5276 = vld [vmem:[#allocation2 + $0x34] sm:$0xf]
      %v5277 = vld [vmem:[#allocation2 + $0x38] sm:$0xf]
      %v5278 = vld [vmem:[#allocation2 + $0x3c] sm:$0xf]
      %v5279 = vld [vmem:[#allocation2 + $0x40] sm:$0xf]
      %v5280 = vld [vmem:[#allocation2 + $0x44] sm:$0xf]
      %v5281 = vld [vmem:[#allocation2 + $0x48] sm:$0xf]
      %v5282 = vld [vmem:[#allocation2 + $0x4c] sm:$0xf]
      %v5283 = vld [vmem:[#allocation2 + $0x50] sm:$0xf]
      %v5284 = vld [vmem:[#allocation2 + $0x54] sm:$0xf]
      %v5285 = vld [vmem:[#allocation2 + $0x58] sm:$0xf]
      %v5286 = vld [vmem:[#allocation2 + $0x5c] sm:$0xf]
      %v5287 = vld [vmem:[#allocation2 + $0x60] sm:$0xf]
      %v5288 = vld [vmem:[#allocation2 + $0x64] sm:$0xf]
      %v5289 = vld [vmem:[#allocation2 + $0x68] sm:$0xf]
      %v5290 = vld [vmem:[#allocation2 + $0x6c] sm:$0xf]
      %v5291 = vld [vmem:[#allocation2 + $0x70] sm:$0xf]
      %v5292 = vld [vmem:[#allocation2 + $0x74] sm:$0xf]
      %v5293 = vld [vmem:[#allocation2 + $0x78] sm:$0xf]
      %v5294 = vld [vmem:[#allocation2 + $0x7c] sm:$0xf]
      %v5295 = vld [vmem:[#allocation2 + $0x80] sm:$0xf]
      %v5296 = vld [vmem:[#allocation2 + $0x84] sm:$0xf]
      %v5297 = vld [vmem:[#allocation2 + $0x88] sm:$0xf]
      %v5298 = vld [vmem:[#allocation2 + $0x8c] sm:$0xf]
      %v5299 = vld [vmem:[#allocation2 + $0x90] sm:$0xf]
      %v5300 = vld [vmem:[#allocation2 + $0x94] sm:$0xf]
      %v5301 = vld [vmem:[#allocation2 + $0x98] sm:$0x1]
      %s5302 = scalar_lea.vmem %s5, 512
      %v5303 = vld [vmem:[%s5302] sm:$0xf]
      %v5304 = vld [vmem:[%s5302 + $0x4] sm:$0xf]
      %v5305 = vld [vmem:[%s5302 + $0x8] sm:$0xf]
      %v5306 = vld [vmem:[%s5302 + $0xc] sm:$0xf]
      %v5307 = vld [vmem:[%s5302 + $0x10] sm:$0xf]
      %v5308 = vld [vmem:[%s5302 + $0x14] sm:$0xf]
      %v5309 = vld [vmem:[%s5302 + $0x18] sm:$0xf]
      %v5310 = vld [vmem:[%s5302 + $0x1c] sm:$0xf]
      %v5311 = vld [vmem:[%s5302 + $0x20] sm:$0xf]
      %v5312 = vld [vmem:[%s5302 + $0x24] sm:$0xf]
      %v5313 = vld [vmem:[%s5302 + $0x28] sm:$0xf]
      %v5314 = vld [vmem:[%s5302 + $0x2c] sm:$0xf]
      %v5315 = vld [vmem:[%s5302 + $0x30] sm:$0xf]
      %v5316 = vld [vmem:[%s5302 + $0x34] sm:$0xf]
      %v5317 = vld [vmem:[%s5302 + $0x38] sm:$0xf]
      %v5318 = vld [vmem:[%s5302 + $0x3c] sm:$0xf]
      %v5352 = vunpack.c.l.b16 %v5269
      %v5353 = vunpack.c.l.b16 %v5270
      %v5354 = vunpack.c.l.b16 %v5271
      %v5355 = vunpack.c.l.b16 %v5272
      %v5356 = vunpack.c.l.b16 %v5273
      %v5357 = vunpack.c.l.b16 %v5274
      %v5358 = vunpack.c.l.b16 %v5275
      %v5359 = vunpack.c.l.b16 %v5276
      %v5360 = vunpack.c.l.b16 %v5277
      %v5361 = vunpack.c.l.b16 %v5278
      %v5362 = vunpack.c.l.b16 %v5279
      %v5363 = vunpack.c.l.b16 %v5280
      %v5364 = vunpack.c.l.b16 %v5281
      %v5365 = vunpack.c.l.b16 %v5282
      %v5366 = vunpack.c.l.b16 %v5283
      %v5367 = vunpack.c.l.b16 %v5284
      %v5368 = vunpack.c.l.b16 %v5285
      %v5369 = vunpack.c.l.b16 %v5286
      %v5370 = vunpack.c.l.b16 %v5287
      %v5371 = vunpack.c.l.b16 %v5288
      %v5372 = vunpack.c.l.b16 %v5289
      %v5373 = vunpack.c.l.b16 %v5290
      %v5374 = vunpack.c.l.b16 %v5291
      %v5375 = vunpack.c.l.b16 %v5292
      %v5376 = vunpack.c.l.b16 %v5293
      %v5377 = vunpack.c.l.b16 %v5294
      %v5378 = vunpack.c.l.b16 %v5295
      %v5379 = vunpack.c.l.b16 %v5296
      %v5380 = vunpack.c.l.b16 %v5297
      %v5381 = vunpack.c.l.b16 %v5298
      %v5382 = vunpack.c.l.b16 %v5299
      %v5383 = vunpack.c.l.b16 %v5300
      %v5384 = vunpack.c.l.b16 %v5301
      %v5385 = vpack.c.b16 %v5353, %v5352
      %v5386 = vpack.c.b16 %v5355, %v5354
      %v5387 = vpack.c.b16 %v5357, %v5356
      %v5388 = vpack.c.b16 %v5359, %v5358
      %v5389 = vpack.c.b16 %v5361, %v5360
      %v5390 = vpack.c.b16 %v5363, %v5362
      %v5391 = vpack.c.b16 %v5365, %v5364
      %v5392 = vpack.c.b16 %v5367, %v5366
      %v5393 = vpack.c.b16 %v5369, %v5368
      %v5394 = vpack.c.b16 %v5371, %v5370
      %v5395 = vpack.c.b16 %v5373, %v5372
      %v5396 = vpack.c.b16 %v5375, %v5374
      %v5397 = vpack.c.b16 %v5377, %v5376
      %v5398 = vpack.c.b16 %v5379, %v5378
      %v5399 = vpack.c.b16 %v5381, %v5380
      %v5400 = vpack.c.b16 %v5383, %v5382
      %v5401 = vpack.c.b16 %v5384, %v5384
      %v5403 = vshrl.u32 %v5385, 16
      %v5405 = vshll.u32 %v5385, 16
      %v5407 = vrot.slane %v5405, 1
      %v5408 = vor.u32 %v5403, %v5407
      %v5410 = vshll.u32 %v5386, 16
      %v5412 = vrot.slane %v5410, 1
      %v5413 = vsel %vm2405, %v5408, %v5412
      %v5414 = vshrl.u32 %v5386, 16
      %v5416 = vor.u32 %v5414, %v5412
      %v5418 = vshll.u32 %v5387, 16
      %v5420 = vrot.slane %v5418, 1
      %v5421 = vsel %vm2405, %v5416, %v5420
      %v5422 = vshrl.u32 %v5387, 16
      %v5424 = vor.u32 %v5422, %v5420
      %v5426 = vshll.u32 %v5388, 16
      %v5428 = vrot.slane %v5426, 1
      %v5429 = vsel %vm2405, %v5424, %v5428
      %v5430 = vshrl.u32 %v5388, 16
      %v5432 = vor.u32 %v5430, %v5428
      %v5434 = vshll.u32 %v5389, 16
      %v5436 = vrot.slane %v5434, 1
      %v5437 = vsel %vm2405, %v5432, %v5436
      %v5438 = vshrl.u32 %v5389, 16
      %v5440 = vor.u32 %v5438, %v5436
      %v5442 = vshll.u32 %v5390, 16
      %v5444 = vrot.slane %v5442, 1
      %v5445 = vsel %vm2405, %v5440, %v5444
      %v5446 = vshrl.u32 %v5390, 16
      %v5448 = vor.u32 %v5446, %v5444
      %v5450 = vshll.u32 %v5391, 16
      %v5452 = vrot.slane %v5450, 1
      %v5453 = vsel %vm2405, %v5448, %v5452
      %v5454 = vshrl.u32 %v5391, 16
      %v5456 = vor.u32 %v5454, %v5452
      %v5458 = vshll.u32 %v5392, 16
      %v5460 = vrot.slane %v5458, 1
      %v5461 = vsel %vm2405, %v5456, %v5460
      %v5462 = vshrl.u32 %v5392, 16
      %v5464 = vor.u32 %v5462, %v5460
      %v5466 = vshll.u32 %v5393, 16
      %v5468 = vrot.slane %v5466, 1
      %v5469 = vsel %vm2405, %v5464, %v5468
      %v5470 = vshrl.u32 %v5393, 16
      %v5472 = vor.u32 %v5470, %v5468
      %v5474 = vshll.u32 %v5394, 16
      %v5476 = vrot.slane %v5474, 1
      %v5477 = vsel %vm2405, %v5472, %v5476
      %v5478 = vshrl.u32 %v5394, 16
      %v5480 = vor.u32 %v5478, %v5476
      %v5482 = vshll.u32 %v5395, 16
      %v5484 = vrot.slane %v5482, 1
      %v5485 = vsel %vm2405, %v5480, %v5484
      %v5486 = vshrl.u32 %v5395, 16
      %v5488 = vor.u32 %v5486, %v5484
      %v5490 = vshll.u32 %v5396, 16
      %v5492 = vrot.slane %v5490, 1
      %v5493 = vsel %vm2405, %v5488, %v5492
      %v5494 = vshrl.u32 %v5396, 16
      %v5496 = vor.u32 %v5494, %v5492
      %v5498 = vshll.u32 %v5397, 16
      %v5500 = vrot.slane %v5498, 1
      %v5501 = vsel %vm2405, %v5496, %v5500
      %v5502 = vshrl.u32 %v5397, 16
      %v5504 = vor.u32 %v5502, %v5500
      %v5506 = vshll.u32 %v5398, 16
      %v5508 = vrot.slane %v5506, 1
      %v5509 = vsel %vm2405, %v5504, %v5508
      %v5510 = vshrl.u32 %v5398, 16
      %v5512 = vor.u32 %v5510, %v5508
      %v5514 = vshll.u32 %v5399, 16
      %v5516 = vrot.slane %v5514, 1
      %v5517 = vsel %vm2405, %v5512, %v5516
      %v5518 = vshrl.u32 %v5399, 16
      %v5520 = vor.u32 %v5518, %v5516
      %v5522 = vshll.u32 %v5400, 16
      %v5524 = vrot.slane %v5522, 1
      %v5525 = vsel %vm2405, %v5520, %v5524
      %v5526 = vshrl.u32 %v5400, 16
      %v5528 = vor.u32 %v5526, %v5524
      %v5530 = vshll.u32 %v5401, 16
      %v5532 = vrot.slane %v5530, 1
      %v5533 = vsel %vm2405, %v5528, %v5532
      %v5566 = vunpack.c.l.b16 %v5303
      %v5567 = vunpack.c.l.b16 %v5304
      %v5568 = vunpack.c.l.b16 %v5305
      %v5569 = vunpack.c.l.b16 %v5306
      %v5570 = vunpack.c.l.b16 %v5307
      %v5571 = vunpack.c.l.b16 %v5308
      %v5572 = vunpack.c.l.b16 %v5309
      %v5573 = vunpack.c.l.b16 %v5310
      %v5574 = vunpack.c.l.b16 %v5311
      %v5575 = vunpack.c.l.b16 %v5312
      %v5576 = vunpack.c.l.b16 %v5313
      %v5577 = vunpack.c.l.b16 %v5314
      %v5578 = vunpack.c.l.b16 %v5315
      %v5579 = vunpack.c.l.b16 %v5316
      %v5580 = vunpack.c.l.b16 %v5317
      %v5581 = vunpack.c.l.b16 %v5318
      %v5582 = vpack.c.b16 %v5567, %v5566
      %v5583 = vpack.c.b16 %v5569, %v5568
      %v5584 = vpack.c.b16 %v5571, %v5570
      %v5585 = vpack.c.b16 %v5573, %v5572
      %v5586 = vpack.c.b16 %v5575, %v5574
      %v5587 = vpack.c.b16 %v5577, %v5576
      %v5588 = vpack.c.b16 %v5579, %v5578
      %v5589 = vpack.c.b16 %v5581, %v5580
      %5598 = vmatprep.subr.bf16.mxu0 0
      %5599 = vmatpush1.bf16.msra.mxu0 %v5589
      %5600 = vmatprep.subr.bf16.mxu0 0
      %5601 = vmatpush1.bf16.msra.mxu0 %v5588
      %5602 = vmatprep.subr.bf16.mxu0 0
      %5603 = vmatpush1.bf16.msra.mxu0 %v5587
      %5604 = vmatprep.subr.bf16.mxu0 0
      %5605 = vmatpush1.bf16.msra.mxu0 %v5586
      %5606 = vmatprep.subr.bf16.mxu0 0
      %5607 = vmatpush1.bf16.msra.mxu0 %v5585
      %5608 = vmatprep.subr.bf16.mxu0 0
      %5609 = vmatpush1.bf16.msra.mxu0 %v5584
      %5610 = vmatprep.subr.bf16.mxu0 0
      %5611 = vmatpush1.bf16.msra.mxu0 %v5583
      %5612 = vmatprep.subr.bf16.mxu0 0
      %5613 = vmatpush1.bf16.msra.mxu0 %v5582
      %5614 = vmatprep.subr.bf16.mxu0 0
      %5615 = vmatpush2.bf16.msra.mxu0 0
      %5616 = vmatprep.subr.bf16.mxu0 0
      %5617 = vmatpush2.bf16.msra.mxu0 0
      %5618 = vmatprep.subr.bf16.mxu0 0
      %5619 = vmatpush2.bf16.msra.mxu0 0
      %5620 = vmatprep.subr.bf16.mxu0 0
      %5621 = vmatpush2.bf16.msra.mxu0 0
      %5622 = vmatprep.subr.bf16.mxu0 0
      %5623 = vmatpush2.bf16.msra.mxu0 0
      %5624 = vmatprep.subr.bf16.mxu0 0
      %5625 = vmatpush2.bf16.msra.mxu0 0
      %5626 = vmatprep.subr.bf16.mxu0 0
      %5627 = vmatpush2.bf16.msra.mxu0 0
      %5628 = vmatprep.subr.bf16.mxu0 0
      %5629 = vmatpush2.bf16.msra.mxu0 0
      %5630 = vmatprep.mubr.bf16.mxu0 0
      %5631 = vmatmul.mubr.bf16.gmra.mxu0 %v5413
      %v5632 = vpop.f32.mrf.mxu0
      %v5633 = vadd.f32 0.0, %v5632
      %v5634 = vpop.f32.mrf.mxu0
      %v5635 = vpop.f32.mrf.mxu0
      %v5636 = vadd.f32 0.0, %v5635
      %v5637 = vpop.f32.mrf.mxu0
      %5638 = vmatprep.mubr.bf16.mxu0 0
      %5639 = vmatmul.mubr.bf16.gmra.mxu0 %v5421
      %v5640 = vpop.f32.mrf.mxu0
      %v5641 = vadd.f32 0.0, %v5640
      %v5642 = vpop.f32.mrf.mxu0
      %v5643 = vpop.f32.mrf.mxu0
      %v5644 = vadd.f32 0.0, %v5643
      %v5645 = vpop.f32.mrf.mxu0
      %5646 = vmatprep.mubr.bf16.mxu0 0
      %5647 = vmatmul.mubr.bf16.gmra.mxu0 %v5429
      %v5648 = vpop.f32.mrf.mxu0
      %v5649 = vadd.f32 0.0, %v5648
      %v5650 = vpop.f32.mrf.mxu0
      %v5651 = vpop.f32.mrf.mxu0
      %v5652 = vadd.f32 0.0, %v5651
      %v5653 = vpop.f32.mrf.mxu0
      %5654 = vmatprep.mubr.bf16.mxu0 0
      %5655 = vmatmul.mubr.bf16.gmra.mxu0 %v5437
      %v5656 = vpop.f32.mrf.mxu0
      %v5657 = vadd.f32 0.0, %v5656
      %v5658 = vpop.f32.mrf.mxu0
      %v5659 = vpop.f32.mrf.mxu0
      %v5660 = vadd.f32 0.0, %v5659
      %v5661 = vpop.f32.mrf.mxu0
      %5662 = vmatprep.mubr.bf16.mxu0 0
      %5663 = vmatmul.mubr.bf16.gmra.mxu0 %v5445
      %v5664 = vpop.f32.mrf.mxu0
      %v5665 = vadd.f32 0.0, %v5664
      %v5666 = vpop.f32.mrf.mxu0
      %v5667 = vpop.f32.mrf.mxu0
      %v5668 = vadd.f32 0.0, %v5667
      %v5669 = vpop.f32.mrf.mxu0
      %5670 = vmatprep.mubr.bf16.mxu0 0
      %5671 = vmatmul.mubr.bf16.gmra.mxu0 %v5453
      %v5672 = vpop.f32.mrf.mxu0
      %v5673 = vadd.f32 0.0, %v5672
      %v5674 = vpop.f32.mrf.mxu0
      %v5675 = vpop.f32.mrf.mxu0
      %v5676 = vadd.f32 0.0, %v5675
      %v5677 = vpop.f32.mrf.mxu0
      %5678 = vmatprep.mubr.bf16.mxu0 0
      %5679 = vmatmul.mubr.bf16.gmra.mxu0 %v5461
      %v5680 = vpop.f32.mrf.mxu0
      %v5681 = vadd.f32 0.0, %v5680
      %v5682 = vpop.f32.mrf.mxu0
      %v5683 = vpop.f32.mrf.mxu0
      %v5684 = vadd.f32 0.0, %v5683
      %v5685 = vpop.f32.mrf.mxu0
      %5686 = vmatprep.mubr.bf16.mxu0 0
      %5687 = vmatmul.mubr.bf16.gmra.mxu0 %v5469
      %v5688 = vpop.f32.mrf.mxu0
      %v5689 = vadd.f32 0.0, %v5688
      %v5690 = vpop.f32.mrf.mxu0
      %v5691 = vpop.f32.mrf.mxu0
      %v5692 = vadd.f32 0.0, %v5691
      %v5693 = vpop.f32.mrf.mxu0
      %5694 = vmatprep.mubr.bf16.mxu0 0
      %5695 = vmatmul.mubr.bf16.gmra.mxu0 %v5477
      %v5696 = vpop.f32.mrf.mxu0
      %v5697 = vadd.f32 0.0, %v5696
      %v5698 = vpop.f32.mrf.mxu0
      %v5699 = vpop.f32.mrf.mxu0
      %v5700 = vadd.f32 0.0, %v5699
      %v5701 = vpop.f32.mrf.mxu0
      %5702 = vmatprep.mubr.bf16.mxu0 0
      %5703 = vmatmul.mubr.bf16.gmra.mxu0 %v5485
      %v5704 = vpop.f32.mrf.mxu0
      %v5705 = vadd.f32 0.0, %v5704
      %v5706 = vpop.f32.mrf.mxu0
      %v5707 = vpop.f32.mrf.mxu0
      %v5708 = vadd.f32 0.0, %v5707
      %v5709 = vpop.f32.mrf.mxu0
      %5710 = vmatprep.mubr.bf16.mxu0 0
      %5711 = vmatmul.mubr.bf16.gmra.mxu0 %v5493
      %v5712 = vpop.f32.mrf.mxu0
      %v5713 = vadd.f32 0.0, %v5712
      %v5714 = vpop.f32.mrf.mxu0
      %v5715 = vpop.f32.mrf.mxu0
      %v5716 = vadd.f32 0.0, %v5715
      %v5717 = vpop.f32.mrf.mxu0
      %5718 = vmatprep.mubr.bf16.mxu0 0
      %5719 = vmatmul.mubr.bf16.gmra.mxu0 %v5501
      %v5720 = vpop.f32.mrf.mxu0
      %v5721 = vadd.f32 0.0, %v5720
      %v5722 = vpop.f32.mrf.mxu0
      %v5723 = vpop.f32.mrf.mxu0
      %v5724 = vadd.f32 0.0, %v5723
      %v5725 = vpop.f32.mrf.mxu0
      %5726 = vmatprep.mubr.bf16.mxu0 0
      %5727 = vmatmul.mubr.bf16.gmra.mxu0 %v5509
      %v5728 = vpop.f32.mrf.mxu0
      %v5729 = vadd.f32 0.0, %v5728
      %v5730 = vpop.f32.mrf.mxu0
      %v5731 = vpop.f32.mrf.mxu0
      %v5732 = vadd.f32 0.0, %v5731
      %v5733 = vpop.f32.mrf.mxu0
      %5734 = vmatprep.mubr.bf16.mxu0 0
      %5735 = vmatmul.mubr.bf16.gmra.mxu0 %v5517
      %v5736 = vpop.f32.mrf.mxu0
      %v5737 = vadd.f32 0.0, %v5736
      %v5738 = vpop.f32.mrf.mxu0
      %v5739 = vpop.f32.mrf.mxu0
      %v5740 = vadd.f32 0.0, %v5739
      %v5741 = vpop.f32.mrf.mxu0
      %5742 = vmatprep.mubr.bf16.mxu0 0
      %5743 = vmatmul.mubr.bf16.gmra.mxu0 %v5525
      %v5744 = vpop.f32.mrf.mxu0
      %v5745 = vadd.f32 0.0, %v5744
      %v5746 = vpop.f32.mrf.mxu0
      %v5747 = vpop.f32.mrf.mxu0
      %v5748 = vadd.f32 0.0, %v5747
      %v5749 = vpop.f32.mrf.mxu0
      %5750 = vmatprep.mubr.bf16.mxu0 0
      %5751 = vmatmul.mubr.bf16.gmra.mxu0 %v5533
      %v5752 = vpop.f32.mrf.mxu0
      %v5753 = vadd.f32 0.0, %v5752
      %v5754 = vpop.f32.mrf.mxu0
      %v5755 = vpop.f32.mrf.mxu0
      %v5756 = vadd.f32 0.0, %v5755
      %v5757 = vpop.f32.mrf.mxu0
      %5758 = vdwg.mxu0
      %v5759 = vsel %vm2891, %v5633, 0.0
      %v5760 = vsel %vm2892, %v5636, 0.0
      %v5761 = vsel %vm2893, %v5641, 0.0
      %v5762 = vsel %vm2894, %v5644, 0.0
      %v5763 = vsel %vm2895, %v5649, 0.0
      %v5764 = vsel %vm2896, %v5652, 0.0
      %v5765 = vsel %vm2897, %v5657, 0.0
      %v5766 = vsel %vm2898, %v5660, 0.0
      %v5767 = vsel %vm2899, %v5665, 0.0
      %v5768 = vsel %vm2900, %v5668, 0.0
      %v5769 = vsel %vm2901, %v5673, 0.0
      %v5770 = vsel %vm2902, %v5676, 0.0
      %v5771 = vsel %vm2903, %v5681, 0.0
      %v5772 = vsel %vm2904, %v5684, 0.0
      %v5773 = vsel %vm2905, %v5689, 0.0
      %v5774 = vsel %vm2906, %v5692, 0.0
      %v5775 = vsel %vm2907, %v5697, 0.0
      %v5776 = vsel %vm2908, %v5700, 0.0
      %v5777 = vsel %vm2909, %v5705, 0.0
      %v5778 = vsel %vm2910, %v5708, 0.0
      %v5779 = vsel %vm2911, %v5713, 0.0
      %v5780 = vsel %vm2912, %v5716, 0.0
      %v5781 = vsel %vm2913, %v5721, 0.0
      %v5782 = vsel %vm2914, %v5724, 0.0
      %v5783 = vsel %vm2915, %v5729, 0.0
      %v5784 = vsel %vm2916, %v5732, 0.0
      %v5785 = vsel %vm2917, %v5737, 0.0
      %v5786 = vsel %vm2918, %v5740, 0.0
      %v5787 = vsel %vm2919, %v5745, 0.0
      %v5788 = vsel %vm2920, %v5748, 0.0
      %v5789 = vsel %vm2921, %v5753, 0.0
      %v5790 = vsel %vm2922, %v5756, 0.0
      %v5791 = vadd.f32 %v5237, %v5759
      %v5792 = vadd.f32 %v5238, %v5760
      %v5793 = vadd.f32 %v5239, %v5761
      %v5794 = vadd.f32 %v5240, %v5762
      %v5795 = vadd.f32 %v5241, %v5763
      %v5796 = vadd.f32 %v5242, %v5764
      %v5797 = vadd.f32 %v5243, %v5765
      %v5798 = vadd.f32 %v5244, %v5766
      %v5799 = vadd.f32 %v5245, %v5767
      %v5800 = vadd.f32 %v5246, %v5768
      %v5801 = vadd.f32 %v5247, %v5769
      %v5802 = vadd.f32 %v5248, %v5770
      %v5803 = vadd.f32 %v5249, %v5771
      %v5804 = vadd.f32 %v5250, %v5772
      %v5805 = vadd.f32 %v5251, %v5773
      %v5806 = vadd.f32 %v5252, %v5774
      %v5807 = vadd.f32 %v5253, %v5775
      %v5808 = vadd.f32 %v5254, %v5776
      %v5809 = vadd.f32 %v5255, %v5777
      %v5810 = vadd.f32 %v5256, %v5778
      %v5811 = vadd.f32 %v5257, %v5779
      %v5812 = vadd.f32 %v5258, %v5780
      %v5813 = vadd.f32 %v5259, %v5781
      %v5814 = vadd.f32 %v5260, %v5782
      %v5815 = vadd.f32 %v5261, %v5783
      %v5816 = vadd.f32 %v5262, %v5784
      %v5817 = vadd.f32 %v5263, %v5785
      %v5818 = vadd.f32 %v5264, %v5786
      %v5819 = vadd.f32 %v5265, %v5787
      %v5820 = vadd.f32 %v5266, %v5788
      %v5821 = vadd.f32 %v5267, %v5789
      %v5822 = vadd.f32 %v5268, %v5790
      %v5823 = vmax.f32 %v5791, 0.0
      %v5824 = vmax.f32 %v5792, 0.0
      %v5825 = vmax.f32 %v5793, 0.0
      %v5826 = vmax.f32 %v5794, 0.0
      %v5827 = vmax.f32 %v5795, 0.0
      %v5828 = vmax.f32 %v5796, 0.0
      %v5829 = vmax.f32 %v5797, 0.0
      %v5830 = vmax.f32 %v5798, 0.0
      %v5831 = vmax.f32 %v5799, 0.0
      %v5832 = vmax.f32 %v5800, 0.0
      %v5833 = vmax.f32 %v5801, 0.0
      %v5834 = vmax.f32 %v5802, 0.0
      %v5835 = vmax.f32 %v5803, 0.0
      %v5836 = vmax.f32 %v5804, 0.0
      %v5837 = vmax.f32 %v5805, 0.0
      %v5838 = vmax.f32 %v5806, 0.0
      %v5839 = vmax.f32 %v5807, 0.0
      %v5840 = vmax.f32 %v5808, 0.0
      %v5841 = vmax.f32 %v5809, 0.0
      %v5842 = vmax.f32 %v5810, 0.0
      %v5843 = vmax.f32 %v5811, 0.0
      %v5844 = vmax.f32 %v5812, 0.0
      %v5845 = vmax.f32 %v5813, 0.0
      %v5846 = vmax.f32 %v5814, 0.0
      %v5847 = vmax.f32 %v5815, 0.0
      %v5848 = vmax.f32 %v5816, 0.0
      %v5849 = vmax.f32 %v5817, 0.0
      %v5850 = vmax.f32 %v5818, 0.0
      %v5851 = vmax.f32 %v5819, 0.0
      %v5852 = vmax.f32 %v5820, 0.0
      %v5853 = vmax.f32 %v5821, 0.0
      %v5854 = vmax.f32 %v5822, 0.0
      %5855 = vxpose.xlu0.b32.start [1/16] %v5823, 128
      %5856 = vxpose.xlu0.b32.cont [2/16] %v5824, 128
      %5857 = vxpose.xlu0.b32.cont [3/16] %v5825, 128
      %5858 = vxpose.xlu0.b32.cont [4/16] %v5826, 128
      %5859 = vxpose.xlu0.b32.cont [5/16] %v5827, 128
      %5860 = vxpose.xlu0.b32.cont [6/16] %v5828, 128
      %5861 = vxpose.xlu0.b32.cont [7/16] %v5829, 128
      %5862 = vxpose.xlu0.b32.cont [8/16] %v5830, 128
      %5863 = vxpose.xlu0.b32.cont [9/16] %v5831, 128
      %5864 = vxpose.xlu0.b32.cont [10/16] %v5832, 128
      %5865 = vxpose.xlu0.b32.cont [11/16] %v5833, 128
      %5866 = vxpose.xlu0.b32.cont [12/16] %v5834, 128
      %5867 = vxpose.xlu0.b32.cont [13/16] %v5835, 128
      %5868 = vxpose.xlu0.b32.cont [14/16] %v5836, 128
      %5869 = vxpose.xlu0.b32.cont [15/16] %v5837, 128
      %5870 = vxpose.xlu0.b32.end [16/16] %v5838, 128
      %v5871 = vpop.trf.xlu0
      %v5872 = vpop.trf.xlu0
      %v5873 = vpop.trf.xlu0
      %v5874 = vpop.trf.xlu0
      %v5875 = vpop.trf.xlu0
      %v5876 = vpop.trf.xlu0
      %v5877 = vpop.trf.xlu0
      %v5878 = vpop.trf.xlu0
      %v5879 = vpop.trf.xlu0
      %v5880 = vpop.trf.xlu0
      %v5881 = vpop.trf.xlu0
      %v5882 = vpop.trf.xlu0
      %v5883 = vpop.trf.xlu0
      %v5884 = vpop.trf.xlu0
      %v5885 = vpop.trf.xlu0
      %v5886 = vpop.trf.xlu0
      %5887 = vxpose.xlu0.b32.start [1/16] %v5839, 128
      %5888 = vxpose.xlu0.b32.cont [2/16] %v5840, 128
      %5889 = vxpose.xlu0.b32.cont [3/16] %v5841, 128
      %5890 = vxpose.xlu0.b32.cont [4/16] %v5842, 128
      %5891 = vxpose.xlu0.b32.cont [5/16] %v5843, 128
      %5892 = vxpose.xlu0.b32.cont [6/16] %v5844, 128
      %5893 = vxpose.xlu0.b32.cont [7/16] %v5845, 128
      %5894 = vxpose.xlu0.b32.cont [8/16] %v5846, 128
      %5895 = vxpose.xlu0.b32.cont [9/16] %v5847, 128
      %5896 = vxpose.xlu0.b32.cont [10/16] %v5848, 128
      %5897 = vxpose.xlu0.b32.cont [11/16] %v5849, 128
      %5898 = vxpose.xlu0.b32.cont [12/16] %v5850, 128
      %5899 = vxpose.xlu0.b32.cont [13/16] %v5851, 128
      %5900 = vxpose.xlu0.b32.cont [14/16] %v5852, 128
      %5901 = vxpose.xlu0.b32.cont [15/16] %v5853, 128
      %5902 = vxpose.xlu0.b32.end [16/16] %v5854, 128
      %v5903 = vpop.trf.xlu0
      %v5904 = vpop.trf.xlu0
      %v5905 = vpop.trf.xlu0
      %v5906 = vpop.trf.xlu0
      %v5907 = vpop.trf.xlu0
      %v5908 = vpop.trf.xlu0
      %v5909 = vpop.trf.xlu0
      %v5910 = vpop.trf.xlu0
      %v5911 = vpop.trf.xlu0
      %v5912 = vpop.trf.xlu0
      %v5913 = vpop.trf.xlu0
      %v5914 = vpop.trf.xlu0
      %v5915 = vpop.trf.xlu0
      %v5916 = vpop.trf.xlu0
      %v5917 = vpop.trf.xlu0
      %v5918 = vpop.trf.xlu0
      %5919 = vst [vmem:[%s305] sm:$0xff] %v5871
      %5920 = vst [vmem:[%s305 + $0x8] sm:$0xff] %v5903
      %p5921 = scmp.lt.s32.totalorder %s19, 1
      %s5922 = scalar_select %p5921, %s19, 1
      %s5923 = smul.addr %s5922, 2
      %s5924 = smul.addr %s5923, 8
      %s5925 = scalar_lea.vmem %s8, %s5924
      // Predicated region
      $region53: #{basic_block_learn_forward.1} parent=51 // pred_check
        %p5926 = pneg %p210
      $region54: #{basic_block_learn_forward.1} parent=51 // pred_check_branch
        %5928 = sbr.rel (%p5926) target = $region56
      $region55: #{basic_block_learn_forward.1} parent=51 // pred_region
        _
      $region56: #{basic_block_learn_forward.1} parent=51 // pred_fallthru
        _
    $region52: #{basic_block_learn_forward.1} parent=5 // pred_fallthru
      _
    %p5929 = scmp.le.s32.totalorder 2, %s14
    // Predicated region
    $region57: #{basic_block_learn_forward.1} parent=5 // pred_check
      %p5930 = pneg %p5929
    $region58: #{basic_block_learn_forward.1} parent=5 // pred_check_branch
      %5932 = sbr.rel (%p5930) target = $region60
    $region59: #{basic_block_learn_forward.1} parent=5 // pred_region
      %s5933 = ssub.s32 %s14, 2
      // Predicated region
      $region61: #{basic_block_learn_forward.1} parent=59 // pred_check
        %p5934 = pneg %p216
      $region62: #{basic_block_learn_forward.1} parent=59 // pred_check_branch
        %5936 = sbr.rel (%p5934) target = $region64
      $region63: #{basic_block_learn_forward.1} parent=59 // pred_region
        %p5937 = scmp.lt.s32.totalorder %s20, 1
        %s5938 = scalar_select %p5937, %s20, 1
        %s5939 = smul.addr %s5938, 2
        %s5940 = smul.addr %s5939, 8
        %s5941 = scalar_lea.vmem %s8, %s5940
      $region64: #{basic_block_learn_forward.1} parent=59 // pred_fallthru
        _
    $region60: #{basic_block_learn_forward.1} parent=5 // pred_fallthru
      _
  $region6: #{basic_block_learn_forward.1} parent=0 // loop_footer
    %s18 = sadd.s32 1, %s14
  $region7: #{basic_block_learn_forward.1} parent=0 // loop_footer_branch
    %13 = sbr.rel target = $region3
  $region8: #{basic_block_learn_forward.1} parent=0 // loop_exit
    _

</llo_original>
